<compile_context>
chip_gen: v6e
topology: v6e:2x2x1
jax: 0.10.0
libtpu: 0.0.40
codegen_flags: <defaults>
</compile_context>

<pallas_src>
import functools

import jax
import jax.numpy as jnp
from jax.experimental import pallas as pl
from jax.experimental.pallas import tpu as pltpu

_SQRT_2_OVER_PI = 0.7978845608028654


def _gelu_tanh(x):
    # TODO(synk): PyTorch F.gelu default is the exact erf form; the tanh
    # approximation (max abs deviation ~3e-4) is used since erf has no
    # guaranteed Mosaic lowering. The JAX reference below uses the same form.
    return 0.5 * x * (1.0 + jnp.tanh(_SQRT_2_OVER_PI * (x + 0.044715 * x * x * x)))


def attn_rnn_kernel(x_ref, h0_ref, wqg_ref, bqg_ref, msel_ref, mbc_ref,
                    wo_ref, bo_ref, wga_ref, gamma_ref, beta_ref,
                    out_ref, h_ref):
    """One (batch_block, time_chunk) tile of the recurrence.

    x_ref:   (Tc, Bb, H)  current time chunk (time-major)
    h0_ref:  (Bb, H)      initial hidden state for this batch block
    out_ref: (Tc, Bb, H)  per-step hidden states for this chunk
    h_ref:   (Bb, H) f32  VMEM scratch carrying h across time chunks
    """
    tc = x_ref.shape[0]
    bb, H = h_ref.shape
    wdt = wqg_ref.dtype                       # MXU input dtype (bf16 or f32)
    approx_recip = wdt != jnp.float32

    c = pl.program_id(1)                      # time-chunk index (innermost)

    @pl.when(c == 0)
    def _():
        h_ref[...] = h0_ref[...].astype(jnp.float32)

    # Weights stay VMEM-resident across the whole grid (constant index maps).
    wqg = wqg_ref[...]
    bqg = bqg_ref[...]
    msel = msel_ref[...]
    mbc = mbc_ref[...]
    wo = wo_ref[...]
    bo = bo_ref[...]
    wga = wga_ref[...]
    gamma = gamma_ref[...]
    beta = beta_ref[...]

    def step(i, h):
        x = x_ref[i].astype(jnp.float32)                        # (Bb, H)

        # proj_layer == nn.Identity (input_size == hidden_size here).
        # TODO(synk): proj_layer Linear for input_size != hidden_size not implemented.
        x_proj = x

        # Fused [query | gate_h] matmul: h @ [wq^T/sqrt(hd) | wg_h^T], N = 2H.
        qg = jnp.dot(h.astype(wdt), wqg,
                     preferred_element_type=jnp.float32) + bqg   # (Bb, 2H)
        q = qg[:, :H]          # scaled query (bq and 1/sqrt(head_dim) folded in)
        gate_h = qg[:, H:]     # h-half of the update gate (bg folded in)

        # Context stack [h, x, h+x, h*x] along the sublane axis -> (4*Bb, H).
        c_all = jnp.concatenate([h, x_proj, h + x_proj, h * x_proj], axis=0)
        q_all = jnp.concatenate([q, q, q, q], axis=0)

        # One fused per-head score matmul over all 4 contexts: (4Bb,H)@(H,128).
        s_all = jnp.dot((q_all * c_all).astype(wdt), msel,
                        preferred_element_type=jnp.float32)      # (4Bb, NHP)
        s0 = s_all[0 * bb:1 * bb]
        s1 = s_all[1 * bb:2 * bb]
        s2 = s_all[2 * bb:3 * bb]
        s3 = s_all[3 * bb:4 * bb]
        m = jnp.maximum(jnp.maximum(s0, s1), jnp.maximum(s2, s3))
        e_all = jnp.exp(s_all - jnp.concatenate([m, m, m, m], axis=0))
        den = (e_all[0 * bb:1 * bb] + e_all[1 * bb:2 * bb]
               + e_all[2 * bb:3 * bb] + e_all[3 * bb:4 * bb])
        if approx_recip:
            inv_den = pl.reciprocal(den, approx=True)            # EUP slot
        else:
            inv_den = 1.0 / den                                  # exact (f32 check path)
        p_all = e_all * jnp.concatenate([inv_den] * 4, axis=0)

        # One fused broadcast matmul: per-head weights -> full width (4Bb, H).
        bc_all = jnp.dot(p_all.astype(wdt), mbc,
                         preferred_element_type=jnp.float32)
        w_all = bc_all * c_all
        attn_pre = (w_all[0 * bb:1 * bb] + w_all[1 * bb:2 * bb]
                    + w_all[2 * bb:3 * bb] + w_all[3 * bb:4 * bb])

        attn_out = jnp.dot(attn_pre.astype(wdt), wo,
                           preferred_element_type=jnp.float32) + bo
        attn_out = _gelu_tanh(attn_out)

        # Update gate without the lane-axis concat:
        # z = sigmoid(h @ wg_h^T + attn @ wg_a^T + bg)
        gate_a = jnp.dot(attn_out.astype(wdt), wga,
                         preferred_element_type=jnp.float32)
        z = jax.nn.sigmoid(gate_h + gate_a)

        # h_candidate = LayerNorm(attn_out + h_prev)
        v = attn_out + h
        mean = jnp.mean(v, axis=-1, keepdims=True)
        var = jnp.mean((v - mean) * (v - mean), axis=-1, keepdims=True)
        h_cand = (v - mean) * jax.lax.rsqrt(var + 1e-5) * gamma + beta

        h_new = z * h_cand + (1.0 - z) * h
        out_ref[i] = h_new.astype(out_ref.dtype)                 # per-step output
        return h_new

    h_last = jax.lax.fori_loop(0, tc, step, h_ref[...], unroll=tc <= 8)
    h_ref[...] = h_last                                          # carry to next chunk


def _largest_divisor(n, cap):
    for d in range(min(n, cap), 0, -1):
        if n % d == 0:
            return d
    return 1


def attn_rnn_forward(x, h0, params, *, num_heads=4, time_chunk=None,
                     batch_block=None, mxu_dtype=jnp.bfloat16):
    """x: (B, T, H) batch-first, h0: (B, H). Returns (output (B,T,H), h_final)."""
    B, T, H = x.shape
    assert H % num_heads == 0
    head_dim = H // num_heads
    scale = 1.0 / (head_dim ** 0.5)

    if time_chunk is None:
        time_chunk = _largest_divisor(T, 16)   # amortize per-grid-step overhead
    assert T % time_chunk == 0
    if batch_block is None:
        batch_block = B if B <= 32 else _largest_divisor(B, 32)
    assert B % batch_block == 0

    # ---- one-time parameter plumbing (hoisted out of the per-step path) ----
    # Query half: 1/sqrt(head_dim) and bq folded in.  Gate-h half: bg folded in.
    wq_t = params["wq"].T * scale                                   # (H, H)
    wgh_t = params["wg"][:, :H].T                                   # (H, H)
    wga_t = params["wg"][:, H:].T                                   # (H, H)
    w_qg = jnp.concatenate([wq_t, wgh_t], axis=1).astype(mxu_dtype)  # (H, 2H)
    b_qg = jnp.concatenate([params["bq"] * scale, params["bg"]]
                           ).reshape(1, 2 * H).astype(jnp.float32)
    wo_t = params["wo"].T.astype(mxu_dtype)                         # (H, H)
    wga_t = wga_t.astype(mxu_dtype)
    bo = params["bo"].reshape(1, H).astype(jnp.float32)
    gamma = params["gamma"].reshape(1, H).astype(jnp.float32)
    beta = params["beta"].reshape(1, H).astype(jnp.float32)

    # Head-selector matrices (head axis lane-padded to 128). Padded columns /
    # rows are zero, so the uniform softmax over padded heads contributes
    # nothing -- keep this invariant if H / num_heads change. 0/1 exact in bf16.
    nhp = 128
    head_of = jnp.arange(H) // head_dim
    msel = (head_of[:, None] == jnp.arange(nhp)[None, :]).astype(mxu_dtype)  # (H,nhp)
    mbc = msel.T                                                             # (nhp,H)

    # TODO(synk): accept/emit time-major (T,B,H) at the interface to avoid these
    # two extra HBM passes at production sizes.
    x_seq = jnp.transpose(x, (1, 0, 2))                             # (T, B, H)

    nb = B // batch_block
    nt = T // time_chunk
    wmap = lambda b, c: (0, 0)

    out_seq = pl.pallas_call(
        attn_rnn_kernel,
        out_shape=jax.ShapeDtypeStruct((T, B, H), x.dtype),
        grid=(nb, nt),
        in_specs=[
            pl.BlockSpec((time_chunk, batch_block, H), lambda b, c: (c, b, 0)),  # x chunk
            pl.BlockSpec((batch_block, H), lambda b, c: (b, 0)),                 # h0
            pl.BlockSpec((H, 2 * H), wmap),      # [wq^T*s | wg_h^T]   (VMEM resident)
            pl.BlockSpec((1, 2 * H), wmap),      # [bq*s | bg]
            pl.BlockSpec((H, nhp), wmap),        # head selector
            pl.BlockSpec((nhp, H), wmap),        # head broadcast
            pl.BlockSpec((H, H), wmap),          # wo^T
            pl.BlockSpec((1, H), wmap),          # bo
            pl.BlockSpec((H, H), wmap),          # wg_a^T
            pl.BlockSpec((1, H), wmap),          # ln gamma
            pl.BlockSpec((1, H), wmap),          # ln beta
        ],
        out_specs=pl.BlockSpec((time_chunk, batch_block, H),
                               lambda b, c: (c, b, 0)),
        scratch_shapes=[pltpu.VMEM((batch_block, H), jnp.float32)],  # recurrent h carry
        compiler_params=pltpu.CompilerParams(
            # batch blocks are independent (dual-TC on v7x); time is recurrent.
            dimension_semantics=("parallel", "arbitrary")),
    )(x_seq, h0, w_qg, b_qg, msel, mbc, wo_t, bo, wga_t, gamma, beta)

    output = jnp.transpose(out_seq, (1, 0, 2))                      # (B, T, H)
    return output, output[:, -1, :]


def reference_attn_rnn(x, h0, params, *, num_heads=4):
    """Pure-JAX mirror of the PyTorch AttnRNN forward (same gelu approx)."""
    B, T, H = x.shape
    hd = H // num_heads
    P = jax.lax.Precision.HIGHEST

    def attention(query, context):
        q = jnp.einsum("bld,ed->ble", query, params["wq"], precision=P) + params["bq"]
        k = context
        v = context

        def split(t):
            return t.reshape(B, -1, num_heads, hd).transpose(0, 2, 1, 3)

        qh, kh, vh = split(q), split(k), split(v)
        scores = jnp.einsum("bhqd,bhkd->bhqk", qh, kh, precision=P) / (hd ** 0.5)
        w = jax.nn.softmax(scores, axis=-1)
        o = jnp.einsum("bhqk,bhkd->bhqd", w, vh, precision=P)
        o = o.transpose(0, 2, 1, 3).reshape(B, -1, H)
        return jnp.einsum("bld,ed->ble", o, params["wo"], precision=P) + params["bo"]

    def cell(h, xt):
        x_proj = xt                                         # Identity (I == H)
        h_exp = h[:, None, :]
        x_exp = x_proj[:, None, :]
        context = jnp.concatenate(
            [h_exp, x_exp, h_exp + x_exp, h_exp * x_exp], axis=1)
        a = attention(h_exp, context)[:, 0, :]
        a = _gelu_tanh(a)
        gate_in = jnp.concatenate([h, a], axis=-1)
        z = jax.nn.sigmoid(
            jnp.einsum("bk,hk->bh", gate_in, params["wg"], precision=P) + params["bg"])
        v = a + h
        mean = v.mean(-1, keepdims=True)
        var = ((v - mean) ** 2).mean(-1, keepdims=True)
        h_cand = (v - mean) / jnp.sqrt(var + 1e-5) * params["gamma"] + params["beta"]
        return z * h_cand + (1.0 - z) * h

    hs = []
    h = h0
    for t in range(T):
        h = cell(h, x[:, t, :])
        hs.append(h)
    return jnp.stack(hs, axis=1), h


if __name__ == "__main__":
    B, T, H, NUM_HEADS = 16, 8, 128, 4     # small shapes (module defaults: 64/100/128/4)
    INIT_VALUE = 0.001

    key = jax.random.PRNGKey(0)
    kx, kq, kbq, ko, kbo, kg, kbg = jax.random.split(key, 7)

    x = jax.random.normal(kx, (B, T, H), dtype=jnp.float32)
    h0 = jnp.full((B, H), INIT_VALUE, dtype=jnp.float32)   # AttnRNN default init

    s = 1.0 / (H ** 0.5)
    params = dict(
        wq=jax.random.uniform(kq, (H, H), jnp.float32, -s, s),
        bq=jax.random.uniform(kbq, (H,), jnp.float32, -s, s),
        wo=jax.random.uniform(ko, (H, H), jnp.float32, -s, s),
        bo=jax.random.uniform(kbo, (H,), jnp.float32, -s, s),
        wg=jax.random.uniform(kg, (H, 2 * H), jnp.float32, -s, s),
        bg=jax.random.uniform(kbg, (H,), jnp.float32, -s, s),
        gamma=jnp.ones((H,), jnp.float32),
        beta=jnp.zeros((H,), jnp.float32),
    )

    ref_out, ref_h = reference_attn_rnn(x, h0, params, num_heads=NUM_HEADS)

    # f32-MXU variant: tight numerical check of the fused kernel structure
    # (2 batch blocks x 2 time chunks exercises the carried recurrence).
    out32, h32 = attn_rnn_forward(x, h0, params, num_heads=NUM_HEADS,
                                  time_chunk=4, batch_block=8,
                                  mxu_dtype=jnp.float32)
    out32 = jax.block_until_ready(out32)
    assert out32.shape == (B, T, H) and h32.shape == (B, H)
    assert jnp.allclose(out32, ref_out, atol=1e-3, rtol=1e-3), \
        float(jnp.max(jnp.abs(out32 - ref_out)))
    assert jnp.allclose(h32, ref_h, atol=1e-3, rtol=1e-3)

    # bf16-MXU variant (default / performance path): looser tolerance since
    # bf16 input rounding compounds through the T-step recurrence.
    out_bf, h_bf = attn_rnn_forward(x, h0, params, num_heads=NUM_HEADS,
                                    time_chunk=4, batch_block=8)
    out_bf = jax.block_until_ready(out_bf)
    h_bf = jax.block_until_ready(h_bf)
    assert out_bf.shape == (B, T, H) and h_bf.shape == (B, H)
    assert jnp.allclose(out_bf, ref_out, atol=7.5e-2, rtol=7.5e-2), \
        float(jnp.max(jnp.abs(out_bf - ref_out)))
    assert jnp.allclose(h_bf, ref_h, atol=7.5e-2, rtol=7.5e-2)

    print("KERNEL_OK")
</pallas_src>

<mosaic_0001>
module attributes {stable_mosaic.version = 11 : i64} {
  func.func @attn_rnn_kernel(%arg0: i32, %arg1: i32, %arg2: memref<4x8x128xf32, #tpu.memory_space<vmem>>, %arg3: memref<8x128xf32, #tpu.memory_space<vmem>>, %arg4: memref<128x256xf32, #tpu.memory_space<vmem>>, %arg5: memref<1x256xf32, #tpu.memory_space<vmem>>, %arg6: memref<128x128xf32, #tpu.memory_space<vmem>>, %arg7: memref<128x128xf32, #tpu.memory_space<vmem>>, %arg8: memref<128x128xf32, #tpu.memory_space<vmem>>, %arg9: memref<1x128xf32, #tpu.memory_space<vmem>>, %arg10: memref<128x128xf32, #tpu.memory_space<vmem>>, %arg11: memref<1x128xf32, #tpu.memory_space<vmem>>, %arg12: memref<1x128xf32, #tpu.memory_space<vmem>>, %arg13: memref<4x8x128xf32, #tpu.memory_space<vmem>>, %arg14: memref<8x128xf32, #tpu.memory_space<vmem>>) attributes {dimension_semantics = [#tpu.dimension_semantics<parallel>, #tpu.dimension_semantics<arbitrary>], iteration_bounds = array<i64: 2, 2>, scalar_prefetch = 0 : i64, scratch_operands = 1 : i64, tpu.core_type = #tpu.core_type<tc>, window_params = [{transform_indices = @transform_0, window_bounds = array<i64: 4, 8, 128>}, {transform_indices = @transform_1, window_bounds = array<i64: 8, 128>}, {pipeline_mode = #tpu.pipeline_mode<synchronous>, transform_indices = @transform_2, window_bounds = array<i64: 128, 256>}, {pipeline_mode = #tpu.pipeline_mode<synchronous>, transform_indices = @transform_3, window_bounds = array<i64: 1, 256>}, {pipeline_mode = #tpu.pipeline_mode<synchronous>, transform_indices = @transform_4, window_bounds = array<i64: 128, 128>}, {pipeline_mode = #tpu.pipeline_mode<synchronous>, transform_indices = @transform_5, window_bounds = array<i64: 128, 128>}, {pipeline_mode = #tpu.pipeline_mode<synchronous>, transform_indices = @transform_6, window_bounds = array<i64: 128, 128>}, {pipeline_mode = #tpu.pipeline_mode<synchronous>, transform_indices = @transform_7, window_bounds = array<i64: 1, 128>}, {pipeline_mode = #tpu.pipeline_mode<synchronous>, transform_indices = @transform_8, window_bounds = array<i64: 128, 128>}, {pipeline_mode = #tpu.pipeline_mode<synchronous>, transform_indices = @transform_9, window_bounds = array<i64: 1, 128>}, {pipeline_mode = #tpu.pipeline_mode<synchronous>, transform_indices = @transform_10, window_bounds = array<i64: 1, 128>}, {transform_indices = @transform_11, window_bounds = array<i64: 4, 8, 128>}]} {
    %c0_i32 = arith.constant 0 : i32
    %0 = arith.cmpi eq, %arg1, %c0_i32 : i32
    %1 = arith.extui %0 : i1 to i32
    %c0_i32_0 = arith.constant 0 : i32
    %2 = arith.cmpi ne, %1, %c0_i32_0 : i32
    scf.if %2 {
      %c0_106 = arith.constant 0 : index
      %c0_107 = arith.constant 0 : index
      %418 = vector.load %arg3[%c0_106, %c0_107] : memref<8x128xf32, #tpu.memory_space<vmem>>, vector<8x128xf32>
      %c0_108 = arith.constant 0 : index
      %c0_109 = arith.constant 0 : index
      %419 = vector.load %arg14[%c0_108, %c0_109] : memref<8x128xf32, #tpu.memory_space<vmem>>, vector<8x128xf32>
      tpu.vector_store %arg14[%c0_108, %c0_109], %418 {strides = array<i32>} : memref<8x128xf32, #tpu.memory_space<vmem>>, vector<8x128xf32>,
    } else {
    }
    %c0 = arith.constant 0 : index
    %c0_1 = arith.constant 0 : index
    %3 = vector.load %arg4[%c0, %c0_1] : memref<128x256xf32, #tpu.memory_space<vmem>>, vector<128x256xf32>
    %c0_2 = arith.constant 0 : index
    %c0_3 = arith.constant 0 : index
    %4 = vector.load %arg5[%c0_2, %c0_3] : memref<1x256xf32, #tpu.memory_space<vmem>>, vector<1x256xf32>
    %c0_4 = arith.constant 0 : index
    %c0_5 = arith.constant 0 : index
    %5 = vector.load %arg6[%c0_4, %c0_5] : memref<128x128xf32, #tpu.memory_space<vmem>>, vector<128x128xf32>
    %c0_6 = arith.constant 0 : index
    %c0_7 = arith.constant 0 : index
    %6 = vector.load %arg7[%c0_6, %c0_7] : memref<128x128xf32, #tpu.memory_space<vmem>>, vector<128x128xf32>
    %c0_8 = arith.constant 0 : index
    %c0_9 = arith.constant 0 : index
    %7 = vector.load %arg8[%c0_8, %c0_9] : memref<128x128xf32, #tpu.memory_space<vmem>>, vector<128x128xf32>
    %c0_10 = arith.constant 0 : index
    %c0_11 = arith.constant 0 : index
    %8 = vector.load %arg9[%c0_10, %c0_11] : memref<1x128xf32, #tpu.memory_space<vmem>>, vector<1x128xf32>
    %c0_12 = arith.constant 0 : index
    %c0_13 = arith.constant 0 : index
    %9 = vector.load %arg10[%c0_12, %c0_13] : memref<128x128xf32, #tpu.memory_space<vmem>>, vector<128x128xf32>
    %c0_14 = arith.constant 0 : index
    %c0_15 = arith.constant 0 : index
    %10 = vector.load %arg11[%c0_14, %c0_15] : memref<1x128xf32, #tpu.memory_space<vmem>>, vector<1x128xf32>
    %c0_16 = arith.constant 0 : index
    %c0_17 = arith.constant 0 : index
    %11 = vector.load %arg12[%c0_16, %c0_17] : memref<1x128xf32, #tpu.memory_space<vmem>>, vector<1x128xf32>
    %c0_18 = arith.constant 0 : index
    %c0_19 = arith.constant 0 : index
    %12 = vector.load %arg14[%c0_18, %c0_19] : memref<8x128xf32, #tpu.memory_space<vmem>>, vector<8x128xf32>
    %c0_i32_20 = arith.constant 0 : i32
    %13 = arith.index_cast %c0_i32_20 : i32 to index
    %c0_21 = arith.constant 0 : index
    %c0_22 = arith.constant 0 : index
    %14 = vector.load %arg2[%13, %c0_21, %c0_22] : memref<4x8x128xf32, #tpu.memory_space<vmem>>, vector<1x8x128xf32>
    %15 = vector.shape_cast %14 : vector<1x8x128xf32> to vector<8x128xf32>
    %cst = arith.constant dense<0.000000e+00> : vector<8x256xf32>
    %16 = tpu.matmul %12, %3, %cst {dimension_numbers = #tpu.dot_dimension_numbers<[1], [0], [0], [1], [0, 0, 1, 1], [], []>} : vector<8x128xf32>, vector<128x256xf32>, vector<8x256xf32> -> vector<8x256xf32>
    %17 = vector.broadcast %4 : vector<1x256xf32> to vector<8x256xf32>
    %18 = arith.addf %16, %17 : vector<8x256xf32>
    %19 = vector.extract_strided_slice %18 {offsets = [0, 0], sizes = [8, 128], strides = [1, 1]} : vector<8x256xf32> to vector<8x128xf32>
    %20 = vector.extract_strided_slice %18 {offsets = [0, 128], sizes = [8, 128], strides = [1, 1]} : vector<8x256xf32> to vector<8x128xf32>
    %21 = arith.addf %12, %15 : vector<8x128xf32>
    %22 = arith.mulf %12, %15 : vector<8x128xf32>
    %23 = tpu.concatenate %12, %15, %21, %22 in 0 : vector<8x128xf32>, vector<8x128xf32>, vector<8x128xf32>, vector<8x128xf32> -> vector<32x128xf32>
    %24 = tpu.concatenate %19, %19, %19, %19 in 0 : vector<8x128xf32>, vector<8x128xf32>, vector<8x128xf32>, vector<8x128xf32> -> vector<32x128xf32>
    %25 = arith.mulf %24, %23 : vector<32x128xf32>
    %cst_23 = arith.constant dense<0.000000e+00> : vector<32x128xf32>
    %26 = tpu.matmul %25, %5, %cst_23 {dimension_numbers = #tpu.dot_dimension_numbers<[1], [0], [0], [1], [0, 0, 1, 1], [], []>} : vector<32x128xf32>, vector<128x128xf32>, vector<32x128xf32> -> vector<32x128xf32>
    %27 = vector.extract_strided_slice %26 {offsets = [0, 0], sizes = [8, 128], strides = [1, 1]} : vector<32x128xf32> to vector<8x128xf32>
    %28 = vector.extract_strided_slice %26 {offsets = [8, 0], sizes = [8, 128], strides = [1, 1]} : vector<32x128xf32> to vector<8x128xf32>
    %29 = vector.extract_strided_slice %26 {offsets = [16, 0], sizes = [8, 128], strides = [1, 1]} : vector<32x128xf32> to vector<8x128xf32>
    %30 = vector.extract_strided_slice %26 {offsets = [24, 0], sizes = [8, 128], strides = [1, 1]} : vector<32x128xf32> to vector<8x128xf32>
    %31 = arith.maximumf %27, %28 : vector<8x128xf32>
    %32 = arith.maximumf %29, %30 : vector<8x128xf32>
    %33 = arith.maximumf %31, %32 : vector<8x128xf32>
    %34 = tpu.concatenate %33, %33, %33, %33 in 0 : vector<8x128xf32>, vector<8x128xf32>, vector<8x128xf32>, vector<8x128xf32> -> vector<32x128xf32>
    %35 = arith.subf %26, %34 : vector<32x128xf32>
    %36 = math.exp %35 : vector<32x128xf32>
    %37 = vector.extract_strided_slice %36 {offsets = [0, 0], sizes = [8, 128], strides = [1, 1]} : vector<32x128xf32> to vector<8x128xf32>
    %38 = vector.extract_strided_slice %36 {offsets = [8, 0], sizes = [8, 128], strides = [1, 1]} : vector<32x128xf32> to vector<8x128xf32>
    %39 = arith.addf %37, %38 : vector<8x128xf32>
    %40 = vector.extract_strided_slice %36 {offsets = [16, 0], sizes = [8, 128], strides = [1, 1]} : vector<32x128xf32> to vector<8x128xf32>
    %41 = arith.addf %39, %40 : vector<8x128xf32>
    %42 = vector.extract_strided_slice %36 {offsets = [24, 0], sizes = [8, 128], strides = [1, 1]} : vector<32x128xf32> to vector<8x128xf32>
    %43 = arith.addf %41, %42 : vector<8x128xf32>
    %cst_24 = arith.constant 1.000000e+00 : f32
    %44 = vector.broadcast %cst_24 : f32 to vector<8x128xf32>
    %45 = arith.divf %44, %43 : vector<8x128xf32>
    %46 = tpu.concatenate %45, %45, %45, %45 in 0 : vector<8x128xf32>, vector<8x128xf32>, vector<8x128xf32>, vector<8x128xf32> -> vector<32x128xf32>
    %47 = arith.mulf %36, %46 : vector<32x128xf32>
    %cst_25 = arith.constant dense<0.000000e+00> : vector<32x128xf32>
    %48 = tpu.matmul %47, %6, %cst_25 {dimension_numbers = #tpu.dot_dimension_numbers<[1], [0], [0], [1], [0, 0, 1, 1], [], []>} : vector<32x128xf32>, vector<128x128xf32>, vector<32x128xf32> -> vector<32x128xf32>
    %49 = arith.mulf %48, %23 : vector<32x128xf32>
    %50 = vector.extract_strided_slice %49 {offsets = [0, 0], sizes = [8, 128], strides = [1, 1]} : vector<32x128xf32> to vector<8x128xf32>
    %51 = vector.extract_strided_slice %49 {offsets = [8, 0], sizes = [8, 128], strides = [1, 1]} : vector<32x128xf32> to vector<8x128xf32>
    %52 = arith.addf %50, %51 : vector<8x128xf32>
    %53 = vector.extract_strided_slice %49 {offsets = [16, 0], sizes = [8, 128], strides = [1, 1]} : vector<32x128xf32> to vector<8x128xf32>
    %54 = arith.addf %52, %53 : vector<8x128xf32>
    %55 = vector.extract_strided_slice %49 {offsets = [24, 0], sizes = [8, 128], strides = [1, 1]} : vector<32x128xf32> to vector<8x128xf32>
    %56 = arith.addf %54, %55 : vector<8x128xf32>
    %cst_26 = arith.constant dense<0.000000e+00> : vector<8x128xf32>
    %57 = tpu.matmul %56, %7, %cst_26 {dimension_numbers = #tpu.dot_dimension_numbers<[1], [0], [0], [1], [0, 0, 1, 1], [], []>} : vector<8x128xf32>, vector<128x128xf32>, vector<8x128xf32> -> vector<8x128xf32>
    %58 = vector.broadcast %8 : vector<1x128xf32> to vector<8x128xf32>
    %59 = arith.addf %57, %58 : vector<8x128xf32>
    %cst_27 = arith.constant 5.000000e-01 : f32
    %60 = vector.broadcast %cst_27 : f32 to vector<8x128xf32>
    %61 = arith.mulf %60, %59 : vector<8x128xf32>
    %cst_28 = arith.constant 4.471500e-02 : f32
    %62 = vector.broadcast %cst_28 : f32 to vector<8x128xf32>
    %63 = arith.mulf %62, %59 : vector<8x128xf32>
    %64 = arith.mulf %63, %59 : vector<8x128xf32>
    %65 = arith.mulf %64, %59 : vector<8x128xf32>
    %66 = arith.addf %59, %65 : vector<8x128xf32>
    %cst_29 = arith.constant 0.797884583 : f32
    %67 = vector.broadcast %cst_29 : f32 to vector<8x128xf32>
    %68 = arith.mulf %67, %66 : vector<8x128xf32>
    %69 = math.tanh %68 : vector<8x128xf32>
    %cst_30 = arith.constant 1.000000e+00 : f32
    %70 = vector.broadcast %cst_30 : f32 to vector<8x128xf32>
    %71 = arith.addf %70, %69 : vector<8x128xf32>
    %72 = arith.mulf %61, %71 : vector<8x128xf32>
    %cst_31 = arith.constant dense<0.000000e+00> : vector<8x128xf32>
    %73 = tpu.matmul %72, %9, %cst_31 {dimension_numbers = #tpu.dot_dimension_numbers<[1], [0], [0], [1], [0, 0, 1, 1], [], []>} : vector<8x128xf32>, vector<128x128xf32>, vector<8x128xf32> -> vector<8x128xf32>
    %74 = arith.addf %20, %73 : vector<8x128xf32>
    %75 = arith.negf %74 : vector<8x128xf32>
    %76 = math.exp %75 : vector<8x128xf32>
    %cst_32 = arith.constant 1.000000e+00 : f32
    %77 = vector.broadcast %cst_32 : f32 to vector<8x128xf32>
    %78 = arith.addf %77, %76 : vector<8x128xf32>
    %79 = arith.divf %77, %78 : vector<8x128xf32>
    %80 = arith.addf %72, %12 : vector<8x128xf32>
    %cst_33 = arith.constant dense<0.000000e+00> : vector<8xf32>
    %81 = vector.multi_reduction <add>, %80, %cst_33 [1] : vector<8x128xf32> to vector<8xf32>
    %82 = vector.shape_cast %81 : vector<8xf32> to vector<8x1xf32>
    %cst_34 = arith.constant 1.280000e+02 : f32
    %83 = vector.broadcast %cst_34 : f32 to vector<8x1xf32>
    %84 = arith.divf %82, %83 : vector<8x1xf32>
    %85 = vector.broadcast %84 : vector<8x1xf32> to vector<8x128xf32>
    %86 = arith.subf %80, %85 : vector<8x128xf32>
    %87 = vector.broadcast %84 : vector<8x1xf32> to vector<8x128xf32>
    %88 = arith.subf %80, %87 : vector<8x128xf32>
    %89 = arith.mulf %86, %88 : vector<8x128xf32>
    %cst_35 = arith.constant dense<0.000000e+00> : vector<8xf32>
    %90 = vector.multi_reduction <add>, %89, %cst_35 [1] : vector<8x128xf32> to vector<8xf32>
    %91 = vector.shape_cast %90 : vector<8xf32> to vector<8x1xf32>
    %cst_36 = arith.constant 1.280000e+02 : f32
    %92 = vector.broadcast %cst_36 : f32 to vector<8x1xf32>
    %93 = arith.divf %91, %92 : vector<8x1xf32>
    %94 = vector.broadcast %84 : vector<8x1xf32> to vector<8x128xf32>
    %95 = arith.subf %80, %94 : vector<8x128xf32>
    %cst_37 = arith.constant 9.99999974E-6 : f32
    %96 = vector.broadcast %cst_37 : f32 to vector<8x1xf32>
    %97 = arith.addf %93, %96 : vector<8x1xf32>
    %98 = math.rsqrt %97 : vector<8x1xf32>
    %99 = vector.broadcast %98 : vector<8x1xf32> to vector<8x128xf32>
    %100 = arith.mulf %95, %99 : vector<8x128xf32>
    %101 = vector.broadcast %10 : vector<1x128xf32> to vector<8x128xf32>
    %102 = arith.mulf %100, %101 : vector<8x128xf32>
    %103 = vector.broadcast %11 : vector<1x128xf32> to vector<8x128xf32>
    %104 = arith.addf %102, %103 : vector<8x128xf32>
    %105 = arith.mulf %79, %104 : vector<8x128xf32>
    %cst_38 = arith.constant 1.000000e+00 : f32
    %106 = vector.broadcast %cst_38 : f32 to vector<8x128xf32>
    %107 = arith.subf %106, %79 : vector<8x128xf32>
    %108 = arith.mulf %107, %12 : vector<8x128xf32>
    %109 = arith.addf %105, %108 : vector<8x128xf32>
    %110 = arith.index_cast %c0_i32_20 : i32 to index
    %c0_39 = arith.constant 0 : index
    %c0_40 = arith.constant 0 : index
    %111 = vector.load %arg13[%110, %c0_39, %c0_40] : memref<4x8x128xf32, #tpu.memory_space<vmem>>, vector<1x8x128xf32>
    %112 = vector.shape_cast %111 : vector<1x8x128xf32> to vector<8x128xf32>
    %113 = vector.shape_cast %109 : vector<8x128xf32> to vector<1x8x128xf32>
    tpu.vector_store %arg13[%110, %c0_39, %c0_40], %113 {strides = array<i32>} : memref<4x8x128xf32, #tpu.memory_space<vmem>>, vector<1x8x128xf32>,
    %c1_i32 = arith.constant 1 : i32
    %114 = arith.index_cast %c1_i32 : i32 to index
    %c0_41 = arith.constant 0 : index
    %c0_42 = arith.constant 0 : index
    %115 = vector.load %arg2[%114, %c0_41, %c0_42] : memref<4x8x128xf32, #tpu.memory_space<vmem>>, vector<1x8x128xf32>
    %116 = vector.shape_cast %115 : vector<1x8x128xf32> to vector<8x128xf32>
    %cst_43 = arith.constant dense<0.000000e+00> : vector<8x256xf32>
    %117 = tpu.matmul %109, %3, %cst_43 {dimension_numbers = #tpu.dot_dimension_numbers<[1], [0], [0], [1], [0, 0, 1, 1], [], []>} : vector<8x128xf32>, vector<128x256xf32>, vector<8x256xf32> -> vector<8x256xf32>
    %118 = vector.broadcast %4 : vector<1x256xf32> to vector<8x256xf32>
    %119 = arith.addf %117, %118 : vector<8x256xf32>
    %120 = vector.extract_strided_slice %119 {offsets = [0, 0], sizes = [8, 128], strides = [1, 1]} : vector<8x256xf32> to vector<8x128xf32>
    %121 = vector.extract_strided_slice %119 {offsets = [0, 128], sizes = [8, 128], strides = [1, 1]} : vector<8x256xf32> to vector<8x128xf32>
    %122 = arith.addf %109, %116 : vector<8x128xf32>
    %123 = arith.mulf %109, %116 : vector<8x128xf32>
    %124 = tpu.concatenate %109, %116, %122, %123 in 0 : vector<8x128xf32>, vector<8x128xf32>, vector<8x128xf32>, vector<8x128xf32> -> vector<32x128xf32>
    %125 = tpu.concatenate %120, %120, %120, %120 in 0 : vector<8x128xf32>, vector<8x128xf32>, vector<8x128xf32>, vector<8x128xf32> -> vector<32x128xf32>
    %126 = arith.mulf %125, %124 : vector<32x128xf32>
    %cst_44 = arith.constant dense<0.000000e+00> : vector<32x128xf32>
    %127 = tpu.matmul %126, %5, %cst_44 {dimension_numbers = #tpu.dot_dimension_numbers<[1], [0], [0], [1], [0, 0, 1, 1], [], []>} : vector<32x128xf32>, vector<128x128xf32>, vector<32x128xf32> -> vector<32x128xf32>
    %128 = vector.extract_strided_slice %127 {offsets = [0, 0], sizes = [8, 128], strides = [1, 1]} : vector<32x128xf32> to vector<8x128xf32>
    %129 = vector.extract_strided_slice %127 {offsets = [8, 0], sizes = [8, 128], strides = [1, 1]} : vector<32x128xf32> to vector<8x128xf32>
    %130 = vector.extract_strided_slice %127 {offsets = [16, 0], sizes = [8, 128], strides = [1, 1]} : vector<32x128xf32> to vector<8x128xf32>
    %131 = vector.extract_strided_slice %127 {offsets = [24, 0], sizes = [8, 128], strides = [1, 1]} : vector<32x128xf32> to vector<8x128xf32>
    %132 = arith.maximumf %128, %129 : vector<8x128xf32>
    %133 = arith.maximumf %130, %131 : vector<8x128xf32>
    %134 = arith.maximumf %132, %133 : vector<8x128xf32>
    %135 = tpu.concatenate %134, %134, %134, %134 in 0 : vector<8x128xf32>, vector<8x128xf32>, vector<8x128xf32>, vector<8x128xf32> -> vector<32x128xf32>
    %136 = arith.subf %127, %135 : vector<32x128xf32>
    %137 = math.exp %136 : vector<32x128xf32>
    %138 = vector.extract_strided_slice %137 {offsets = [0, 0], sizes = [8, 128], strides = [1, 1]} : vector<32x128xf32> to vector<8x128xf32>
    %139 = vector.extract_strided_slice %137 {offsets = [8, 0], sizes = [8, 128], strides = [1, 1]} : vector<32x128xf32> to vector<8x128xf32>
    %140 = arith.addf %138, %139 : vector<8x128xf32>
    %141 = vector.extract_strided_slice %137 {offsets = [16, 0], sizes = [8, 128], strides = [1, 1]} : vector<32x128xf32> to vector<8x128xf32>
    %142 = arith.addf %140, %141 : vector<8x128xf32>
    %143 = vector.extract_strided_slice %137 {offsets = [24, 0], sizes = [8, 128], strides = [1, 1]} : vector<32x128xf32> to vector<8x128xf32>
    %144 = arith.addf %142, %143 : vector<8x128xf32>
    %cst_45 = arith.constant 1.000000e+00 : f32
    %145 = vector.broadcast %cst_45 : f32 to vector<8x128xf32>
    %146 = arith.divf %145, %144 : vector<8x128xf32>
    %147 = tpu.concatenate %146, %146, %146, %146 in 0 : vector<8x128xf32>, vector<8x128xf32>, vector<8x128xf32>, vector<8x128xf32> -> vector<32x128xf32>
    %148 = arith.mulf %137, %147 : vector<32x128xf32>
    %cst_46 = arith.constant dense<0.000000e+00> : vector<32x128xf32>
    %149 = tpu.matmul %148, %6, %cst_46 {dimension_numbers = #tpu.dot_dimension_numbers<[1], [0], [0], [1], [0, 0, 1, 1], [], []>} : vector<32x128xf32>, vector<128x128xf32>, vector<32x128xf32> -> vector<32x128xf32>
    %150 = arith.mulf %149, %124 : vector<32x128xf32>
    %151 = vector.extract_strided_slice %150 {offsets = [0, 0], sizes = [8, 128], strides = [1, 1]} : vector<32x128xf32> to vector<8x128xf32>
    %152 = vector.extract_strided_slice %150 {offsets = [8, 0], sizes = [8, 128], strides = [1, 1]} : vector<32x128xf32> to vector<8x128xf32>
    %153 = arith.addf %151, %152 : vector<8x128xf32>
    %154 = vector.extract_strided_slice %150 {offsets = [16, 0], sizes = [8, 128], strides = [1, 1]} : vector<32x128xf32> to vector<8x128xf32>
    %155 = arith.addf %153, %154 : vector<8x128xf32>
    %156 = vector.extract_strided_slice %150 {offsets = [24, 0], sizes = [8, 128], strides = [1, 1]} : vector<32x128xf32> to vector<8x128xf32>
    %157 = arith.addf %155, %156 : vector<8x128xf32>
    %cst_47 = arith.constant dense<0.000000e+00> : vector<8x128xf32>
    %158 = tpu.matmul %157, %7, %cst_47 {dimension_numbers = #tpu.dot_dimension_numbers<[1], [0], [0], [1], [0, 0, 1, 1], [], []>} : vector<8x128xf32>, vector<128x128xf32>, vector<8x128xf32> -> vector<8x128xf32>
    %159 = vector.broadcast %8 : vector<1x128xf32> to vector<8x128xf32>
    %160 = arith.addf %158, %159 : vector<8x128xf32>
    %cst_48 = arith.constant 5.000000e-01 : f32
    %161 = vector.broadcast %cst_48 : f32 to vector<8x128xf32>
    %162 = arith.mulf %161, %160 : vector<8x128xf32>
    %cst_49 = arith.constant 4.471500e-02 : f32
    %163 = vector.broadcast %cst_49 : f32 to vector<8x128xf32>
    %164 = arith.mulf %163, %160 : vector<8x128xf32>
    %165 = arith.mulf %164, %160 : vector<8x128xf32>
    %166 = arith.mulf %165, %160 : vector<8x128xf32>
    %167 = arith.addf %160, %166 : vector<8x128xf32>
    %cst_50 = arith.constant 0.797884583 : f32
    %168 = vector.broadcast %cst_50 : f32 to vector<8x128xf32>
    %169 = arith.mulf %168, %167 : vector<8x128xf32>
    %170 = math.tanh %169 : vector<8x128xf32>
    %cst_51 = arith.constant 1.000000e+00 : f32
    %171 = vector.broadcast %cst_51 : f32 to vector<8x128xf32>
    %172 = arith.addf %171, %170 : vector<8x128xf32>
    %173 = arith.mulf %162, %172 : vector<8x128xf32>
    %cst_52 = arith.constant dense<0.000000e+00> : vector<8x128xf32>
    %174 = tpu.matmul %173, %9, %cst_52 {dimension_numbers = #tpu.dot_dimension_numbers<[1], [0], [0], [1], [0, 0, 1, 1], [], []>} : vector<8x128xf32>, vector<128x128xf32>, vector<8x128xf32> -> vector<8x128xf32>
    %175 = arith.addf %121, %174 : vector<8x128xf32>
    %176 = arith.negf %175 : vector<8x128xf32>
    %177 = math.exp %176 : vector<8x128xf32>
    %cst_53 = arith.constant 1.000000e+00 : f32
    %178 = vector.broadcast %cst_53 : f32 to vector<8x128xf32>
    %179 = arith.addf %178, %177 : vector<8x128xf32>
    %180 = arith.divf %178, %179 : vector<8x128xf32>
    %181 = arith.addf %173, %109 : vector<8x128xf32>
    %cst_54 = arith.constant dense<0.000000e+00> : vector<8xf32>
    %182 = vector.multi_reduction <add>, %181, %cst_54 [1] : vector<8x128xf32> to vector<8xf32>
    %183 = vector.shape_cast %182 : vector<8xf32> to vector<8x1xf32>
    %cst_55 = arith.constant 1.280000e+02 : f32
    %184 = vector.broadcast %cst_55 : f32 to vector<8x1xf32>
    %185 = arith.divf %183, %184 : vector<8x1xf32>
    %186 = vector.broadcast %185 : vector<8x1xf32> to vector<8x128xf32>
    %187 = arith.subf %181, %186 : vector<8x128xf32>
    %188 = vector.broadcast %185 : vector<8x1xf32> to vector<8x128xf32>
    %189 = arith.subf %181, %188 : vector<8x128xf32>
    %190 = arith.mulf %187, %189 : vector<8x128xf32>
    %cst_56 = arith.constant dense<0.000000e+00> : vector<8xf32>
    %191 = vector.multi_reduction <add>, %190, %cst_56 [1] : vector<8x128xf32> to vector<8xf32>
    %192 = vector.shape_cast %191 : vector<8xf32> to vector<8x1xf32>
    %cst_57 = arith.constant 1.280000e+02 : f32
    %193 = vector.broadcast %cst_57 : f32 to vector<8x1xf32>
    %194 = arith.divf %192, %193 : vector<8x1xf32>
    %195 = vector.broadcast %185 : vector<8x1xf32> to vector<8x128xf32>
    %196 = arith.subf %181, %195 : vector<8x128xf32>
    %cst_58 = arith.constant 9.99999974E-6 : f32
    %197 = vector.broadcast %cst_58 : f32 to vector<8x1xf32>
    %198 = arith.addf %194, %197 : vector<8x1xf32>
    %199 = math.rsqrt %198 : vector<8x1xf32>
    %200 = vector.broadcast %199 : vector<8x1xf32> to vector<8x128xf32>
    %201 = arith.mulf %196, %200 : vector<8x128xf32>
    %202 = vector.broadcast %10 : vector<1x128xf32> to vector<8x128xf32>
    %203 = arith.mulf %201, %202 : vector<8x128xf32>
    %204 = vector.broadcast %11 : vector<1x128xf32> to vector<8x128xf32>
    %205 = arith.addf %203, %204 : vector<8x128xf32>
    %206 = arith.mulf %180, %205 : vector<8x128xf32>
    %cst_59 = arith.constant 1.000000e+00 : f32
    %207 = vector.broadcast %cst_59 : f32 to vector<8x128xf32>
    %208 = arith.subf %207, %180 : vector<8x128xf32>
    %209 = arith.mulf %208, %109 : vector<8x128xf32>
    %210 = arith.addf %206, %209 : vector<8x128xf32>
    %211 = arith.index_cast %c1_i32 : i32 to index
    %c0_60 = arith.constant 0 : index
    %c0_61 = arith.constant 0 : index
    %212 = vector.load %arg13[%211, %c0_60, %c0_61] : memref<4x8x128xf32, #tpu.memory_space<vmem>>, vector<1x8x128xf32>
    %213 = vector.shape_cast %212 : vector<1x8x128xf32> to vector<8x128xf32>
    %214 = vector.shape_cast %210 : vector<8x128xf32> to vector<1x8x128xf32>
    tpu.vector_store %arg13[%211, %c0_60, %c0_61], %214 {strides = array<i32>} : memref<4x8x128xf32, #tpu.memory_space<vmem>>, vector<1x8x128xf32>,
    %c2_i32 = arith.constant 2 : i32
    %215 = arith.index_cast %c2_i32 : i32 to index
    %c0_62 = arith.constant 0 : index
    %c0_63 = arith.constant 0 : index
    %216 = vector.load %arg2[%215, %c0_62, %c0_63] : memref<4x8x128xf32, #tpu.memory_space<vmem>>, vector<1x8x128xf32>
    %217 = vector.shape_cast %216 : vector<1x8x128xf32> to vector<8x128xf32>
    %cst_64 = arith.constant dense<0.000000e+00> : vector<8x256xf32>
    %218 = tpu.matmul %210, %3, %cst_64 {dimension_numbers = #tpu.dot_dimension_numbers<[1], [0], [0], [1], [0, 0, 1, 1], [], []>} : vector<8x128xf32>, vector<128x256xf32>, vector<8x256xf32> -> vector<8x256xf32>
    %219 = vector.broadcast %4 : vector<1x256xf32> to vector<8x256xf32>
    %220 = arith.addf %218, %219 : vector<8x256xf32>
    %221 = vector.extract_strided_slice %220 {offsets = [0, 0], sizes = [8, 128], strides = [1, 1]} : vector<8x256xf32> to vector<8x128xf32>
    %222 = vector.extract_strided_slice %220 {offsets = [0, 128], sizes = [8, 128], strides = [1, 1]} : vector<8x256xf32> to vector<8x128xf32>
    %223 = arith.addf %210, %217 : vector<8x128xf32>
    %224 = arith.mulf %210, %217 : vector<8x128xf32>
    %225 = tpu.concatenate %210, %217, %223, %224 in 0 : vector<8x128xf32>, vector<8x128xf32>, vector<8x128xf32>, vector<8x128xf32> -> vector<32x128xf32>
    %226 = tpu.concatenate %221, %221, %221, %221 in 0 : vector<8x128xf32>, vector<8x128xf32>, vector<8x128xf32>, vector<8x128xf32> -> vector<32x128xf32>
    %227 = arith.mulf %226, %225 : vector<32x128xf32>
    %cst_65 = arith.constant dense<0.000000e+00> : vector<32x128xf32>
    %228 = tpu.matmul %227, %5, %cst_65 {dimension_numbers = #tpu.dot_dimension_numbers<[1], [0], [0], [1], [0, 0, 1, 1], [], []>} : vector<32x128xf32>, vector<128x128xf32>, vector<32x128xf32> -> vector<32x128xf32>
    %229 = vector.extract_strided_slice %228 {offsets = [0, 0], sizes = [8, 128], strides = [1, 1]} : vector<32x128xf32> to vector<8x128xf32>
    %230 = vector.extract_strided_slice %228 {offsets = [8, 0], sizes = [8, 128], strides = [1, 1]} : vector<32x128xf32> to vector<8x128xf32>
    %231 = vector.extract_strided_slice %228 {offsets = [16, 0], sizes = [8, 128], strides = [1, 1]} : vector<32x128xf32> to vector<8x128xf32>
    %232 = vector.extract_strided_slice %228 {offsets = [24, 0], sizes = [8, 128], strides = [1, 1]} : vector<32x128xf32> to vector<8x128xf32>
    %233 = arith.maximumf %229, %230 : vector<8x128xf32>
    %234 = arith.maximumf %231, %232 : vector<8x128xf32>
    %235 = arith.maximumf %233, %234 : vector<8x128xf32>
    %236 = tpu.concatenate %235, %235, %235, %235 in 0 : vector<8x128xf32>, vector<8x128xf32>, vector<8x128xf32>, vector<8x128xf32> -> vector<32x128xf32>
    %237 = arith.subf %228, %236 : vector<32x128xf32>
    %238 = math.exp %237 : vector<32x128xf32>
    %239 = vector.extract_strided_slice %238 {offsets = [0, 0], sizes = [8, 128], strides = [1, 1]} : vector<32x128xf32> to vector<8x128xf32>
    %240 = vector.extract_strided_slice %238 {offsets = [8, 0], sizes = [8, 128], strides = [1, 1]} : vector<32x128xf32> to vector<8x128xf32>
    %241 = arith.addf %239, %240 : vector<8x128xf32>
    %242 = vector.extract_strided_slice %238 {offsets = [16, 0], sizes = [8, 128], strides = [1, 1]} : vector<32x128xf32> to vector<8x128xf32>
    %243 = arith.addf %241, %242 : vector<8x128xf32>
    %244 = vector.extract_strided_slice %238 {offsets = [24, 0], sizes = [8, 128], strides = [1, 1]} : vector<32x128xf32> to vector<8x128xf32>
    %245 = arith.addf %243, %244 : vector<8x128xf32>
    %cst_66 = arith.constant 1.000000e+00 : f32
    %246 = vector.broadcast %cst_66 : f32 to vector<8x128xf32>
    %247 = arith.divf %246, %245 : vector<8x128xf32>
    %248 = tpu.concatenate %247, %247, %247, %247 in 0 : vector<8x128xf32>, vector<8x128xf32>, vector<8x128xf32>, vector<8x128xf32> -> vector<32x128xf32>
    %249 = arith.mulf %238, %248 : vector<32x128xf32>
    %cst_67 = arith.constant dense<0.000000e+00> : vector<32x128xf32>
    %250 = tpu.matmul %249, %6, %cst_67 {dimension_numbers = #tpu.dot_dimension_numbers<[1], [0], [0], [1], [0, 0, 1, 1], [], []>} : vector<32x128xf32>, vector<128x128xf32>, vector<32x128xf32> -> vector<32x128xf32>
    %251 = arith.mulf %250, %225 : vector<32x128xf32>
    %252 = vector.extract_strided_slice %251 {offsets = [0, 0], sizes = [8, 128], strides = [1, 1]} : vector<32x128xf32> to vector<8x128xf32>
    %253 = vector.extract_strided_slice %251 {offsets = [8, 0], sizes = [8, 128], strides = [1, 1]} : vector<32x128xf32> to vector<8x128xf32>
    %254 = arith.addf %252, %253 : vector<8x128xf32>
    %255 = vector.extract_strided_slice %251 {offsets = [16, 0], sizes = [8, 128], strides = [1, 1]} : vector<32x128xf32> to vector<8x128xf32>
    %256 = arith.addf %254, %255 : vector<8x128xf32>
    %257 = vector.extract_strided_slice %251 {offsets = [24, 0], sizes = [8, 128], strides = [1, 1]} : vector<32x128xf32> to vector<8x128xf32>
    %258 = arith.addf %256, %257 : vector<8x128xf32>
    %cst_68 = arith.constant dense<0.000000e+00> : vector<8x128xf32>
    %259 = tpu.matmul %258, %7, %cst_68 {dimension_numbers = #tpu.dot_dimension_numbers<[1], [0], [0], [1], [0, 0, 1, 1], [], []>} : vector<8x128xf32>, vector<128x128xf32>, vector<8x128xf32> -> vector<8x128xf32>
    %260 = vector.broadcast %8 : vector<1x128xf32> to vector<8x128xf32>
    %261 = arith.addf %259, %260 : vector<8x128xf32>
    %cst_69 = arith.constant 5.000000e-01 : f32
    %262 = vector.broadcast %cst_69 : f32 to vector<8x128xf32>
    %263 = arith.mulf %262, %261 : vector<8x128xf32>
    %cst_70 = arith.constant 4.471500e-02 : f32
    %264 = vector.broadcast %cst_70 : f32 to vector<8x128xf32>
    %265 = arith.mulf %264, %261 : vector<8x128xf32>
    %266 = arith.mulf %265, %261 : vector<8x128xf32>
    %267 = arith.mulf %266, %261 : vector<8x128xf32>
    %268 = arith.addf %261, %267 : vector<8x128xf32>
    %cst_71 = arith.constant 0.797884583 : f32
    %269 = vector.broadcast %cst_71 : f32 to vector<8x128xf32>
    %270 = arith.mulf %269, %268 : vector<8x128xf32>
    %271 = math.tanh %270 : vector<8x128xf32>
    %cst_72 = arith.constant 1.000000e+00 : f32
    %272 = vector.broadcast %cst_72 : f32 to vector<8x128xf32>
    %273 = arith.addf %272, %271 : vector<8x128xf32>
    %274 = arith.mulf %263, %273 : vector<8x128xf32>
    %cst_73 = arith.constant dense<0.000000e+00> : vector<8x128xf32>
    %275 = tpu.matmul %274, %9, %cst_73 {dimension_numbers = #tpu.dot_dimension_numbers<[1], [0], [0], [1], [0, 0, 1, 1], [], []>} : vector<8x128xf32>, vector<128x128xf32>, vector<8x128xf32> -> vector<8x128xf32>
    %276 = arith.addf %222, %275 : vector<8x128xf32>
    %277 = arith.negf %276 : vector<8x128xf32>
    %278 = math.exp %277 : vector<8x128xf32>
    %cst_74 = arith.constant 1.000000e+00 : f32
    %279 = vector.broadcast %cst_74 : f32 to vector<8x128xf32>
    %280 = arith.addf %279, %278 : vector<8x128xf32>
    %281 = arith.divf %279, %280 : vector<8x128xf32>
    %282 = arith.addf %274, %210 : vector<8x128xf32>
    %cst_75 = arith.constant dense<0.000000e+00> : vector<8xf32>
    %283 = vector.multi_reduction <add>, %282, %cst_75 [1] : vector<8x128xf32> to vector<8xf32>
    %284 = vector.shape_cast %283 : vector<8xf32> to vector<8x1xf32>
    %cst_76 = arith.constant 1.280000e+02 : f32
    %285 = vector.broadcast %cst_76 : f32 to vector<8x1xf32>
    %286 = arith.divf %284, %285 : vector<8x1xf32>
    %287 = vector.broadcast %286 : vector<8x1xf32> to vector<8x128xf32>
    %288 = arith.subf %282, %287 : vector<8x128xf32>
    %289 = vector.broadcast %286 : vector<8x1xf32> to vector<8x128xf32>
    %290 = arith.subf %282, %289 : vector<8x128xf32>
    %291 = arith.mulf %288, %290 : vector<8x128xf32>
    %cst_77 = arith.constant dense<0.000000e+00> : vector<8xf32>
    %292 = vector.multi_reduction <add>, %291, %cst_77 [1] : vector<8x128xf32> to vector<8xf32>
    %293 = vector.shape_cast %292 : vector<8xf32> to vector<8x1xf32>
    %cst_78 = arith.constant 1.280000e+02 : f32
    %294 = vector.broadcast %cst_78 : f32 to vector<8x1xf32>
    %295 = arith.divf %293, %294 : vector<8x1xf32>
    %296 = vector.broadcast %286 : vector<8x1xf32> to vector<8x128xf32>
    %297 = arith.subf %282, %296 : vector<8x128xf32>
    %cst_79 = arith.constant 9.99999974E-6 : f32
    %298 = vector.broadcast %cst_79 : f32 to vector<8x1xf32>
    %299 = arith.addf %295, %298 : vector<8x1xf32>
    %300 = math.rsqrt %299 : vector<8x1xf32>
    %301 = vector.broadcast %300 : vector<8x1xf32> to vector<8x128xf32>
    %302 = arith.mulf %297, %301 : vector<8x128xf32>
    %303 = vector.broadcast %10 : vector<1x128xf32> to vector<8x128xf32>
    %304 = arith.mulf %302, %303 : vector<8x128xf32>
    %305 = vector.broadcast %11 : vector<1x128xf32> to vector<8x128xf32>
    %306 = arith.addf %304, %305 : vector<8x128xf32>
    %307 = arith.mulf %281, %306 : vector<8x128xf32>
    %cst_80 = arith.constant 1.000000e+00 : f32
    %308 = vector.broadcast %cst_80 : f32 to vector<8x128xf32>
    %309 = arith.subf %308, %281 : vector<8x128xf32>
    %310 = arith.mulf %309, %210 : vector<8x128xf32>
    %311 = arith.addf %307, %310 : vector<8x128xf32>
    %312 = arith.index_cast %c2_i32 : i32 to index
    %c0_81 = arith.constant 0 : index
    %c0_82 = arith.constant 0 : index
    %313 = vector.load %arg13[%312, %c0_81, %c0_82] : memref<4x8x128xf32, #tpu.memory_space<vmem>>, vector<1x8x128xf32>
    %314 = vector.shape_cast %313 : vector<1x8x128xf32> to vector<8x128xf32>
    %315 = vector.shape_cast %311 : vector<8x128xf32> to vector<1x8x128xf32>
    tpu.vector_store %arg13[%312, %c0_81, %c0_82], %315 {strides = array<i32>} : memref<4x8x128xf32, #tpu.memory_space<vmem>>, vector<1x8x128xf32>,
    %c3_i32 = arith.constant 3 : i32
    %316 = arith.index_cast %c3_i32 : i32 to index
    %c0_83 = arith.constant 0 : index
    %c0_84 = arith.constant 0 : index
    %317 = vector.load %arg2[%316, %c0_83, %c0_84] : memref<4x8x128xf32, #tpu.memory_space<vmem>>, vector<1x8x128xf32>
    %318 = vector.shape_cast %317 : vector<1x8x128xf32> to vector<8x128xf32>
    %cst_85 = arith.constant dense<0.000000e+00> : vector<8x256xf32>
    %319 = tpu.matmul %311, %3, %cst_85 {dimension_numbers = #tpu.dot_dimension_numbers<[1], [0], [0], [1], [0, 0, 1, 1], [], []>} : vector<8x128xf32>, vector<128x256xf32>, vector<8x256xf32> -> vector<8x256xf32>
    %320 = vector.broadcast %4 : vector<1x256xf32> to vector<8x256xf32>
    %321 = arith.addf %319, %320 : vector<8x256xf32>
    %322 = vector.extract_strided_slice %321 {offsets = [0, 0], sizes = [8, 128], strides = [1, 1]} : vector<8x256xf32> to vector<8x128xf32>
    %323 = vector.extract_strided_slice %321 {offsets = [0, 128], sizes = [8, 128], strides = [1, 1]} : vector<8x256xf32> to vector<8x128xf32>
    %324 = arith.addf %311, %318 : vector<8x128xf32>
    %325 = arith.mulf %311, %318 : vector<8x128xf32>
    %326 = tpu.concatenate %311, %318, %324, %325 in 0 : vector<8x128xf32>, vector<8x128xf32>, vector<8x128xf32>, vector<8x128xf32> -> vector<32x128xf32>
    %327 = tpu.concatenate %322, %322, %322, %322 in 0 : vector<8x128xf32>, vector<8x128xf32>, vector<8x128xf32>, vector<8x128xf32> -> vector<32x128xf32>
    %328 = arith.mulf %327, %326 : vector<32x128xf32>
    %cst_86 = arith.constant dense<0.000000e+00> : vector<32x128xf32>
    %329 = tpu.matmul %328, %5, %cst_86 {dimension_numbers = #tpu.dot_dimension_numbers<[1], [0], [0], [1], [0, 0, 1, 1], [], []>} : vector<32x128xf32>, vector<128x128xf32>, vector<32x128xf32> -> vector<32x128xf32>
    %330 = vector.extract_strided_slice %329 {offsets = [0, 0], sizes = [8, 128], strides = [1, 1]} : vector<32x128xf32> to vector<8x128xf32>
    %331 = vector.extract_strided_slice %329 {offsets = [8, 0], sizes = [8, 128], strides = [1, 1]} : vector<32x128xf32> to vector<8x128xf32>
    %332 = vector.extract_strided_slice %329 {offsets = [16, 0], sizes = [8, 128], strides = [1, 1]} : vector<32x128xf32> to vector<8x128xf32>
    %333 = vector.extract_strided_slice %329 {offsets = [24, 0], sizes = [8, 128], strides = [1, 1]} : vector<32x128xf32> to vector<8x128xf32>
    %334 = arith.maximumf %330, %331 : vector<8x128xf32>
    %335 = arith.maximumf %332, %333 : vector<8x128xf32>
    %336 = arith.maximumf %334, %335 : vector<8x128xf32>
    %337 = tpu.concatenate %336, %336, %336, %336 in 0 : vector<8x128xf32>, vector<8x128xf32>, vector<8x128xf32>, vector<8x128xf32> -> vector<32x128xf32>
    %338 = arith.subf %329, %337 : vector<32x128xf32>
    %339 = math.exp %338 : vector<32x128xf32>
    %340 = vector.extract_strided_slice %339 {offsets = [0, 0], sizes = [8, 128], strides = [1, 1]} : vector<32x128xf32> to vector<8x128xf32>
    %341 = vector.extract_strided_slice %339 {offsets = [8, 0], sizes = [8, 128], strides = [1, 1]} : vector<32x128xf32> to vector<8x128xf32>
    %342 = arith.addf %340, %341 : vector<8x128xf32>
    %343 = vector.extract_strided_slice %339 {offsets = [16, 0], sizes = [8, 128], strides = [1, 1]} : vector<32x128xf32> to vector<8x128xf32>
    %344 = arith.addf %342, %343 : vector<8x128xf32>
    %345 = vector.extract_strided_slice %339 {offsets = [24, 0], sizes = [8, 128], strides = [1, 1]} : vector<32x128xf32> to vector<8x128xf32>
    %346 = arith.addf %344, %345 : vector<8x128xf32>
    %cst_87 = arith.constant 1.000000e+00 : f32
    %347 = vector.broadcast %cst_87 : f32 to vector<8x128xf32>
    %348 = arith.divf %347, %346 : vector<8x128xf32>
    %349 = tpu.concatenate %348, %348, %348, %348 in 0 : vector<8x128xf32>, vector<8x128xf32>, vector<8x128xf32>, vector<8x128xf32> -> vector<32x128xf32>
    %350 = arith.mulf %339, %349 : vector<32x128xf32>
    %cst_88 = arith.constant dense<0.000000e+00> : vector<32x128xf32>
    %351 = tpu.matmul %350, %6, %cst_88 {dimension_numbers = #tpu.dot_dimension_numbers<[1], [0], [0], [1], [0, 0, 1, 1], [], []>} : vector<32x128xf32>, vector<128x128xf32>, vector<32x128xf32> -> vector<32x128xf32>
    %352 = arith.mulf %351, %326 : vector<32x128xf32>
    %353 = vector.extract_strided_slice %352 {offsets = [0, 0], sizes = [8, 128], strides = [1, 1]} : vector<32x128xf32> to vector<8x128xf32>
    %354 = vector.extract_strided_slice %352 {offsets = [8, 0], sizes = [8, 128], strides = [1, 1]} : vector<32x128xf32> to vector<8x128xf32>
    %355 = arith.addf %353, %354 : vector<8x128xf32>
    %356 = vector.extract_strided_slice %352 {offsets = [16, 0], sizes = [8, 128], strides = [1, 1]} : vector<32x128xf32> to vector<8x128xf32>
    %357 = arith.addf %355, %356 : vector<8x128xf32>
    %358 = vector.extract_strided_slice %352 {offsets = [24, 0], sizes = [8, 128], strides = [1, 1]} : vector<32x128xf32> to vector<8x128xf32>
    %359 = arith.addf %357, %358 : vector<8x128xf32>
    %cst_89 = arith.constant dense<0.000000e+00> : vector<8x128xf32>
    %360 = tpu.matmul %359, %7, %cst_89 {dimension_numbers = #tpu.dot_dimension_numbers<[1], [0], [0], [1], [0, 0, 1, 1], [], []>} : vector<8x128xf32>, vector<128x128xf32>, vector<8x128xf32> -> vector<8x128xf32>
    %361 = vector.broadcast %8 : vector<1x128xf32> to vector<8x128xf32>
    %362 = arith.addf %360, %361 : vector<8x128xf32>
    %cst_90 = arith.constant 5.000000e-01 : f32
    %363 = vector.broadcast %cst_90 : f32 to vector<8x128xf32>
    %364 = arith.mulf %363, %362 : vector<8x128xf32>
    %cst_91 = arith.constant 4.471500e-02 : f32
    %365 = vector.broadcast %cst_91 : f32 to vector<8x128xf32>
    %366 = arith.mulf %365, %362 : vector<8x128xf32>
    %367 = arith.mulf %366, %362 : vector<8x128xf32>
    %368 = arith.mulf %367, %362 : vector<8x128xf32>
    %369 = arith.addf %362, %368 : vector<8x128xf32>
    %cst_92 = arith.constant 0.797884583 : f32
    %370 = vector.broadcast %cst_92 : f32 to vector<8x128xf32>
    %371 = arith.mulf %370, %369 : vector<8x128xf32>
    %372 = math.tanh %371 : vector<8x128xf32>
    %cst_93 = arith.constant 1.000000e+00 : f32
    %373 = vector.broadcast %cst_93 : f32 to vector<8x128xf32>
    %374 = arith.addf %373, %372 : vector<8x128xf32>
    %375 = arith.mulf %364, %374 : vector<8x128xf32>
    %cst_94 = arith.constant dense<0.000000e+00> : vector<8x128xf32>
    %376 = tpu.matmul %375, %9, %cst_94 {dimension_numbers = #tpu.dot_dimension_numbers<[1], [0], [0], [1], [0, 0, 1, 1], [], []>} : vector<8x128xf32>, vector<128x128xf32>, vector<8x128xf32> -> vector<8x128xf32>
    %377 = arith.addf %323, %376 : vector<8x128xf32>
    %378 = arith.negf %377 : vector<8x128xf32>
    %379 = math.exp %378 : vector<8x128xf32>
    %cst_95 = arith.constant 1.000000e+00 : f32
    %380 = vector.broadcast %cst_95 : f32 to vector<8x128xf32>
    %381 = arith.addf %380, %379 : vector<8x128xf32>
    %382 = arith.divf %380, %381 : vector<8x128xf32>
    %383 = arith.addf %375, %311 : vector<8x128xf32>
    %cst_96 = arith.constant dense<0.000000e+00> : vector<8xf32>
    %384 = vector.multi_reduction <add>, %383, %cst_96 [1] : vector<8x128xf32> to vector<8xf32>
    %385 = vector.shape_cast %384 : vector<8xf32> to vector<8x1xf32>
    %cst_97 = arith.constant 1.280000e+02 : f32
    %386 = vector.broadcast %cst_97 : f32 to vector<8x1xf32>
    %387 = arith.divf %385, %386 : vector<8x1xf32>
    %388 = vector.broadcast %387 : vector<8x1xf32> to vector<8x128xf32>
    %389 = arith.subf %383, %388 : vector<8x128xf32>
    %390 = vector.broadcast %387 : vector<8x1xf32> to vector<8x128xf32>
    %391 = arith.subf %383, %390 : vector<8x128xf32>
    %392 = arith.mulf %389, %391 : vector<8x128xf32>
    %cst_98 = arith.constant dense<0.000000e+00> : vector<8xf32>
    %393 = vector.multi_reduction <add>, %392, %cst_98 [1] : vector<8x128xf32> to vector<8xf32>
    %394 = vector.shape_cast %393 : vector<8xf32> to vector<8x1xf32>
    %cst_99 = arith.constant 1.280000e+02 : f32
    %395 = vector.broadcast %cst_99 : f32 to vector<8x1xf32>
    %396 = arith.divf %394, %395 : vector<8x1xf32>
    %397 = vector.broadcast %387 : vector<8x1xf32> to vector<8x128xf32>
    %398 = arith.subf %383, %397 : vector<8x128xf32>
    %cst_100 = arith.constant 9.99999974E-6 : f32
    %399 = vector.broadcast %cst_100 : f32 to vector<8x1xf32>
    %400 = arith.addf %396, %399 : vector<8x1xf32>
    %401 = math.rsqrt %400 : vector<8x1xf32>
    %402 = vector.broadcast %401 : vector<8x1xf32> to vector<8x128xf32>
    %403 = arith.mulf %398, %402 : vector<8x128xf32>
    %404 = vector.broadcast %10 : vector<1x128xf32> to vector<8x128xf32>
    %405 = arith.mulf %403, %404 : vector<8x128xf32>
    %406 = vector.broadcast %11 : vector<1x128xf32> to vector<8x128xf32>
    %407 = arith.addf %405, %406 : vector<8x128xf32>
    %408 = arith.mulf %382, %407 : vector<8x128xf32>
    %cst_101 = arith.constant 1.000000e+00 : f32
    %409 = vector.broadcast %cst_101 : f32 to vector<8x128xf32>
    %410 = arith.subf %409, %382 : vector<8x128xf32>
    %411 = arith.mulf %410, %311 : vector<8x128xf32>
    %412 = arith.addf %408, %411 : vector<8x128xf32>
    %413 = arith.index_cast %c3_i32 : i32 to index
    %c0_102 = arith.constant 0 : index
    %c0_103 = arith.constant 0 : index
    %414 = vector.load %arg13[%413, %c0_102, %c0_103] : memref<4x8x128xf32, #tpu.memory_space<vmem>>, vector<1x8x128xf32>
    %415 = vector.shape_cast %414 : vector<1x8x128xf32> to vector<8x128xf32>
    %416 = vector.shape_cast %412 : vector<8x128xf32> to vector<1x8x128xf32>
    tpu.vector_store %arg13[%413, %c0_102, %c0_103], %416 {strides = array<i32>} : memref<4x8x128xf32, #tpu.memory_space<vmem>>, vector<1x8x128xf32>,
    %c4_i32 = arith.constant 4 : i32
    %c0_104 = arith.constant 0 : index
    %c0_105 = arith.constant 0 : index
    %417 = vector.load %arg14[%c0_104, %c0_105] : memref<8x128xf32, #tpu.memory_space<vmem>>, vector<8x128xf32>
    tpu.vector_store %arg14[%c0_104, %c0_105], %412 {strides = array<i32>} : memref<8x128xf32, #tpu.memory_space<vmem>>, vector<8x128xf32>,
    return
  }
  func.func @transform_0(%arg0: i32, %arg1: i32) -> (i32, i32, i32) {
    %c0_i32 = arith.constant 0 : i32
    %c0_i32_0 = arith.constant 0 : i32
    return %arg1, %arg0, %c0_i32 : i32, i32, i32
  }
  func.func @transform_1(%arg0: i32, %arg1: i32) -> (i32, i32) {
    %c0_i32 = arith.constant 0 : i32
    %c0_i32_0 = arith.constant 0 : i32
    return %arg0, %c0_i32 : i32, i32
  }
  func.func @transform_2(%arg0: i32, %arg1: i32) -> (i32, i32) {
    %c0_i32 = arith.constant 0 : i32
    %c0_i32_0 = arith.constant 0 : i32
    %c0_i32_1 = arith.constant 0 : i32
    return %c0_i32, %c0_i32_0 : i32, i32
  }
  func.func @transform_3(%arg0: i32, %arg1: i32) -> (i32, i32) {
    %c0_i32 = arith.constant 0 : i32
    %c0_i32_0 = arith.constant 0 : i32
    %c0_i32_1 = arith.constant 0 : i32
    return %c0_i32, %c0_i32_0 : i32, i32
  }
  func.func @transform_4(%arg0: i32, %arg1: i32) -> (i32, i32) {
    %c0_i32 = arith.constant 0 : i32
    %c0_i32_0 = arith.constant 0 : i32
    %c0_i32_1 = arith.constant 0 : i32
    return %c0_i32, %c0_i32_0 : i32, i32
  }
  func.func @transform_5(%arg0: i32, %arg1: i32) -> (i32, i32) {
    %c0_i32 = arith.constant 0 : i32
    %c0_i32_0 = arith.constant 0 : i32
    %c0_i32_1 = arith.constant 0 : i32
    return %c0_i32, %c0_i32_0 : i32, i32
  }
  func.func @transform_6(%arg0: i32, %arg1: i32) -> (i32, i32) {
    %c0_i32 = arith.constant 0 : i32
    %c0_i32_0 = arith.constant 0 : i32
    %c0_i32_1 = arith.constant 0 : i32
    return %c0_i32, %c0_i32_0 : i32, i32
  }
  func.func @transform_7(%arg0: i32, %arg1: i32) -> (i32, i32) {
    %c0_i32 = arith.constant 0 : i32
    %c0_i32_0 = arith.constant 0 : i32
    %c0_i32_1 = arith.constant 0 : i32
    return %c0_i32, %c0_i32_0 : i32, i32
  }
  func.func @transform_8(%arg0: i32, %arg1: i32) -> (i32, i32) {
    %c0_i32 = arith.constant 0 : i32
    %c0_i32_0 = arith.constant 0 : i32
    %c0_i32_1 = arith.constant 0 : i32
    return %c0_i32, %c0_i32_0 : i32, i32
  }
  func.func @transform_9(%arg0: i32, %arg1: i32) -> (i32, i32) {
    %c0_i32 = arith.constant 0 : i32
    %c0_i32_0 = arith.constant 0 : i32
    %c0_i32_1 = arith.constant 0 : i32
    return %c0_i32, %c0_i32_0 : i32, i32
  }
  func.func @transform_10(%arg0: i32, %arg1: i32) -> (i32, i32) {
    %c0_i32 = arith.constant 0 : i32
    %c0_i32_0 = arith.constant 0 : i32
    %c0_i32_1 = arith.constant 0 : i32
    return %c0_i32, %c0_i32_0 : i32, i32
  }
  func.func @transform_11(%arg0: i32, %arg1: i32) -> (i32, i32, i32) {
    %c0_i32 = arith.constant 0 : i32
    %c0_i32_0 = arith.constant 0 : i32
    return %arg1, %arg0, %c0_i32 : i32, i32, i32
  }
}

</mosaic_0001>

<llo_original>
// kernel: tpu_custom_call.1
$region0: #{tpu_custom_call.1}
  #allocation0 [shape = 'u32[]', space=smem, size = 0x4, offset = 0x4, fixed_abs, tag = 'smem constant byte address 0x4 - core index']
  #allocation1 [shape = 'u32[144,128]{1,0:T(1,128)}', space=vmem, size = 0x12000, scoped, tag = 'internal scratch']
  #allocation2 [shape = 'f32[8,128]{1,0:T(8,128)}', space=vmem, size = 0x1000, scoped, tag = 'scratch operand']
  %s0 = inlined_call_operand.hbm [shape: f32[8,16,128], index: 0, kind: input, shape index: {}]
  %s1 = inlined_call_operand.hbm [shape: f32[16,128], index: 1, kind: input, shape index: {}]
  %s2 = inlined_call_operand.hbm [shape: f32[128,256], index: 2, kind: input, shape index: {}]
  %s3 = inlined_call_operand.vmem [shape: f32[1,256], index: 3, kind: input, shape index: {}]
  %s4 = inlined_call_operand.hbm [shape: f32[128,128], index: 4, kind: input, shape index: {}]
  %s5 = inlined_call_operand.hbm [shape: f32[128,128], index: 5, kind: input, shape index: {}]
  %s6 = inlined_call_operand.hbm [shape: f32[128,128], index: 6, kind: input, shape index: {}]
  %s7 = inlined_call_operand.vmem [shape: f32[1,128], index: 7, kind: input, shape index: {}]
  %s8 = inlined_call_operand.hbm [shape: f32[128,128], index: 8, kind: input, shape index: {}]
  %s9 = inlined_call_operand.vmem [shape: f32[1,128], index: 9, kind: input, shape index: {}]
  %s10 = inlined_call_operand.vmem [shape: f32[1,128], index: 10, kind: input, shape index: {}]
  %s11 = inlined_call_operand.hbm [shape: f32[8,16,128], index: 11, kind: output, shape index: {}]
  %s12 = sld [smem:[#allocation0]]
  $region109: #{tpu_custom_call.1} parent=0
    _
  %s14 = ssub.s32 1, %s12
  %s15 = scalar_select 0, %s14, %s12
  $region1: #{tpu_custom_call.1} parent=0
    #allocation3 [shape = 'u8[32768]{0}', space=vmem, size = 0x8000, scoped, tag = 'input window, operand 0']
    #allocation4 [shape = 's32[2]{0}', space=sflag, size = 0x8, scoped, tag = 'scoped memory for tpu_custom_call.1']
    #allocation5 [shape = 's32[2]{0}', space=sflag, size = 0x8, scoped, tag = 'scoped memory for tpu_custom_call.1']
    #allocation6 [shape = 'u8[8192]{0}', space=vmem, size = 0x2000, scoped, tag = 'input window, operand 1']
    #allocation7 [shape = 's32[2]{0}', space=sflag, size = 0x8, scoped, tag = 'scoped memory for tpu_custom_call.1']
    #allocation8 [shape = 'u8[131072]{0}', space=vmem, size = 0x20000, scoped, tag = 'input window, operand 2, single buffered']
    #allocation9 [shape = 'u8[65536]{0}', space=vmem, size = 0x10000, scoped, tag = 'input window, operand 4, single buffered']
    #allocation10 [shape = 's32[1]{0}', space=sflag, size = 0x4, scoped, tag = 'scoped memory for tpu_custom_call.1']
    #allocation11 [shape = 'u8[65536]{0}', space=vmem, size = 0x10000, scoped, tag = 'input window, operand 5, single buffered']
    #allocation12 [shape = 'u8[65536]{0}', space=vmem, size = 0x10000, scoped, tag = 'input window, operand 6, single buffered']
    #allocation13 [shape = 's32[1]{0}', space=sflag, size = 0x4, scoped, tag = 'scoped memory for tpu_custom_call.1']
    #allocation14 [shape = 'u8[65536]{0}', space=vmem, size = 0x10000, scoped, tag = 'input window, operand 8, single buffered']
    #allocation15 [shape = 'u8[32768]{0}', space=vmem, size = 0x8000, scoped, tag = 'output window, operand 0']
    %16 = vsyncpa [#allocation4], 0
    %s17 = scalar_lea.sflag [#allocation4], 1
    %18 = vsyncpa %s17, 0
    %19 = vsyncpa [#allocation7], 0
    %s20 = scalar_lea.sflag [#allocation7], 1
    %21 = vsyncpa %s20, 0
    %22 = vsyncpa [#allocation10], 0
    %23 = vsyncpa [#allocation13], 0
    %24 = vsyncpa [#allocation5], 0
    %s25 = scalar_lea.sflag [#allocation5], 1
    %26 = vsyncpa %s25, 0
    loop: start=0, step=1, limit=6
    $region2: #{tpu_custom_call.1} parent=1 // loop_pre_header
      _
    $region3: #{tpu_custom_call.1} parent=1 // loop_header
      %s28 = sphi 0, %s32
      %p29 = scmp.ge.s32.totalorder %s28, 6
      %s35 = sphi 0, %s47
      %s36 = sphi 0, %s43
      %s37 = sphi 0, %s35
      %s38 = sphi 0, %s36
      %s39 = sphi 0, %s37
      %s40 = sphi 0, %s38
      %s52 = sphi 0, %s54
      %s55 = sphi 0, %s52
      %s56 = sphi 0, %s55
      %s72 = sphi 0, %s56
      %s78 = sphi 0, %s80
      %s81 = sphi 0, %s78
      %s82 = sphi 0, %s81
      %s98 = sphi 0, %s82
      %s102 = sphi 0, %s102
      %s104 = sphi 0, %s102
      %s105 = sphi 0, %s104
      %s119 = sphi 0, %s105
      %s123 = sphi 0, %s123
      %s125 = sphi 0, %s123
      %s126 = sphi 0, %s125
      %s140 = sphi 0, %s126
      %s144 = sphi 0, %s144
      %s146 = sphi 0, %s144
      %s147 = sphi 0, %s146
      %s161 = sphi 0, %s147
      %s165 = sphi 0, %s165
      %s167 = sphi 0, %s165
      %s168 = sphi 0, %s167
      %s182 = sphi 0, %s168
      %s186 = sphi 0, %s186
      %s188 = sphi 0, %s186
      %s189 = sphi 0, %s188
      %s203 = sphi 0, %s189
      %s207 = sphi 0, %s207
      %s209 = sphi 0, %s207
      %s210 = sphi 0, %s209
      %s224 = sphi 0, %s210
      %s228 = sphi 0, %s228
      %s230 = sphi 0, %s228
      %s231 = sphi 0, %s230
      %s245 = sphi 0, %s231
      %s249 = sphi 0, %s249
      %s251 = sphi 0, %s249
      %s252 = sphi 0, %s251
      %s266 = sphi 0, %s252
      %s270 = sphi 0, %s270
      %s272 = sphi 0, %s270
      %s273 = sphi 0, %s272
      %s287 = sphi 0, %s273
      %s295 = sphi 0, %s297
      %s298 = sphi 0, %s295
      %s299 = sphi 0, %s298
      %s315 = sphi 0, %s299
    $region4: #{tpu_custom_call.1} parent=1 // loop_header_branch
      %31 = sbr.rel (%p29) target = $region8
    $region5: #{tpu_custom_call.1} parent=1 // loop_body
      %s33 = ssub.s32 %s28, 1
      %s34 = ssub.s32 %s28, 2
      %s41 = sadd.s32 1, %s36
      %p42 = scmp.ge.s32.totalorder %s41, 2
      %s43 = scalar_select %p42, 0, %s41
      %s44 = sadd.s32 1, %s35
      %s45 = scalar_select %p42, %s44, %s35
      %p46 = scmp.ge.s32.totalorder %s45, 2
      %s47 = scalar_select %p46, 0, %s45
      %s48 = ssub.s32 %s36, %s43
      %s49 = ssub.s32 %s35, %s47
      %s50 = sor.u32 %s48, %s49
      %p51 = scmp.eq.s32.totalorder %s50, 0
      %s53 = sadd.s32 %s52, 1
      %s54 = scalar_select %p51, %s52, %s53
      %p57 = pneg %p51
      %p58 = scmp.eq.s32.totalorder %s28, 3
      %p59 = por %p57, %p58
      %p60 = scmp.ne.s32.totalorder %s52, %s55
      %p61 = scmp.eq.s32.totalorder %s28, 0
      %p62 = por %p60, %p61
      %p63 = scmp.ne.s32.totalorder %s52, %s55
      %p64 = scmp.eq.s32.totalorder %s33, 3
      %p65 = por %p63, %p64
      %p66 = scmp.ne.s32.totalorder %s55, %s56
      %p67 = scmp.eq.s32.totalorder %s33, 0
      %p68 = por %p66, %p67
      %p69 = scmp.ne.s32.totalorder %s55, %s56
      %p70 = scmp.eq.s32.totalorder %s34, 3
      %p71 = por %p69, %p70
      %p73 = scmp.ne.s32.totalorder %s56, %s72
      %p74 = scmp.eq.s32.totalorder %s34, 0
      %p75 = por %p73, %p74
      %s76 = ssub.s32 %s35, %s47
      %p77 = scmp.eq.s32.totalorder %s76, 0
      %s79 = sadd.s32 %s78, 1
      %s80 = scalar_select %p77, %s78, %s79
      %p83 = pneg %p77
      %p84 = scmp.eq.s32.totalorder %s28, 3
      %p85 = por %p83, %p84
      %p86 = scmp.ne.s32.totalorder %s78, %s81
      %p87 = scmp.eq.s32.totalorder %s28, 0
      %p88 = por %p86, %p87
      %p89 = scmp.ne.s32.totalorder %s78, %s81
      %p90 = scmp.eq.s32.totalorder %s33, 3
      %p91 = por %p89, %p90
      %p92 = scmp.ne.s32.totalorder %s81, %s82
      %p93 = scmp.eq.s32.totalorder %s33, 0
      %p94 = por %p92, %p93
      %p95 = scmp.ne.s32.totalorder %s81, %s82
      %p96 = scmp.eq.s32.totalorder %s34, 3
      %p97 = por %p95, %p96
      %p99 = scmp.ne.s32.totalorder %s82, %s98
      %p100 = scmp.eq.s32.totalorder %s34, 0
      %p101 = por %p99, %p100
      %s103 = sadd.s32 %s102, 1
      %p106 = scmp.eq.s32.totalorder %s28, 3
      %p107 = scmp.ne.s32.totalorder %s102, %s104
      %p108 = scmp.eq.s32.totalorder %s28, 0
      %p109 = por %p107, %p108
      %p110 = scmp.ne.s32.totalorder %s102, %s104
      %p111 = scmp.eq.s32.totalorder %s33, 3
      %p112 = por %p110, %p111
      %p113 = scmp.ne.s32.totalorder %s104, %s105
      %p114 = scmp.eq.s32.totalorder %s33, 0
      %p115 = por %p113, %p114
      %p116 = scmp.ne.s32.totalorder %s104, %s105
      %p117 = scmp.eq.s32.totalorder %s34, 3
      %p118 = por %p116, %p117
      %p120 = scmp.ne.s32.totalorder %s105, %s119
      %p121 = scmp.eq.s32.totalorder %s34, 0
      %p122 = por %p120, %p121
      %s124 = sadd.s32 %s123, 1
      %p127 = scmp.eq.s32.totalorder %s28, 3
      %p128 = scmp.ne.s32.totalorder %s123, %s125
      %p129 = scmp.eq.s32.totalorder %s28, 0
      %p130 = por %p128, %p129
      %p131 = scmp.ne.s32.totalorder %s123, %s125
      %p132 = scmp.eq.s32.totalorder %s33, 3
      %p133 = por %p131, %p132
      %p134 = scmp.ne.s32.totalorder %s125, %s126
      %p135 = scmp.eq.s32.totalorder %s33, 0
      %p136 = por %p134, %p135
      %p137 = scmp.ne.s32.totalorder %s125, %s126
      %p138 = scmp.eq.s32.totalorder %s34, 3
      %p139 = por %p137, %p138
      %p141 = scmp.ne.s32.totalorder %s126, %s140
      %p142 = scmp.eq.s32.totalorder %s34, 0
      %p143 = por %p141, %p142
      %s145 = sadd.s32 %s144, 1
      %p148 = scmp.eq.s32.totalorder %s28, 3
      %p149 = scmp.ne.s32.totalorder %s144, %s146
      %p150 = scmp.eq.s32.totalorder %s28, 0
      %p151 = por %p149, %p150
      %p152 = scmp.ne.s32.totalorder %s144, %s146
      %p153 = scmp.eq.s32.totalorder %s33, 3
      %p154 = por %p152, %p153
      %p155 = scmp.ne.s32.totalorder %s146, %s147
      %p156 = scmp.eq.s32.totalorder %s33, 0
      %p157 = por %p155, %p156
      %p158 = scmp.ne.s32.totalorder %s146, %s147
      %p159 = scmp.eq.s32.totalorder %s34, 3
      %p160 = por %p158, %p159
      %p162 = scmp.ne.s32.totalorder %s147, %s161
      %p163 = scmp.eq.s32.totalorder %s34, 0
      %p164 = por %p162, %p163
      %s166 = sadd.s32 %s165, 1
      %p169 = scmp.eq.s32.totalorder %s28, 3
      %p170 = scmp.ne.s32.totalorder %s165, %s167
      %p171 = scmp.eq.s32.totalorder %s28, 0
      %p172 = por %p170, %p171
      %p173 = scmp.ne.s32.totalorder %s165, %s167
      %p174 = scmp.eq.s32.totalorder %s33, 3
      %p175 = por %p173, %p174
      %p176 = scmp.ne.s32.totalorder %s167, %s168
      %p177 = scmp.eq.s32.totalorder %s33, 0
      %p178 = por %p176, %p177
      %p179 = scmp.ne.s32.totalorder %s167, %s168
      %p180 = scmp.eq.s32.totalorder %s34, 3
      %p181 = por %p179, %p180
      %p183 = scmp.ne.s32.totalorder %s168, %s182
      %p184 = scmp.eq.s32.totalorder %s34, 0
      %p185 = por %p183, %p184
      %s187 = sadd.s32 %s186, 1
      %p190 = scmp.eq.s32.totalorder %s28, 3
      %p191 = scmp.ne.s32.totalorder %s186, %s188
      %p192 = scmp.eq.s32.totalorder %s28, 0
      %p193 = por %p191, %p192
      %p194 = scmp.ne.s32.totalorder %s186, %s188
      %p195 = scmp.eq.s32.totalorder %s33, 3
      %p196 = por %p194, %p195
      %p197 = scmp.ne.s32.totalorder %s188, %s189
      %p198 = scmp.eq.s32.totalorder %s33, 0
      %p199 = por %p197, %p198
      %p200 = scmp.ne.s32.totalorder %s188, %s189
      %p201 = scmp.eq.s32.totalorder %s34, 3
      %p202 = por %p200, %p201
      %p204 = scmp.ne.s32.totalorder %s189, %s203
      %p205 = scmp.eq.s32.totalorder %s34, 0
      %p206 = por %p204, %p205
      %s208 = sadd.s32 %s207, 1
      %p211 = scmp.eq.s32.totalorder %s28, 3
      %p212 = scmp.ne.s32.totalorder %s207, %s209
      %p213 = scmp.eq.s32.totalorder %s28, 0
      %p214 = por %p212, %p213
      %p215 = scmp.ne.s32.totalorder %s207, %s209
      %p216 = scmp.eq.s32.totalorder %s33, 3
      %p217 = por %p215, %p216
      %p218 = scmp.ne.s32.totalorder %s209, %s210
      %p219 = scmp.eq.s32.totalorder %s33, 0
      %p220 = por %p218, %p219
      %p221 = scmp.ne.s32.totalorder %s209, %s210
      %p222 = scmp.eq.s32.totalorder %s34, 3
      %p223 = por %p221, %p222
      %p225 = scmp.ne.s32.totalorder %s210, %s224
      %p226 = scmp.eq.s32.totalorder %s34, 0
      %p227 = por %p225, %p226
      %s229 = sadd.s32 %s228, 1
      %p232 = scmp.eq.s32.totalorder %s28, 3
      %p233 = scmp.ne.s32.totalorder %s228, %s230
      %p234 = scmp.eq.s32.totalorder %s28, 0
      %p235 = por %p233, %p234
      %p236 = scmp.ne.s32.totalorder %s228, %s230
      %p237 = scmp.eq.s32.totalorder %s33, 3
      %p238 = por %p236, %p237
      %p239 = scmp.ne.s32.totalorder %s230, %s231
      %p240 = scmp.eq.s32.totalorder %s33, 0
      %p241 = por %p239, %p240
      %p242 = scmp.ne.s32.totalorder %s230, %s231
      %p243 = scmp.eq.s32.totalorder %s34, 3
      %p244 = por %p242, %p243
      %p246 = scmp.ne.s32.totalorder %s231, %s245
      %p247 = scmp.eq.s32.totalorder %s34, 0
      %p248 = por %p246, %p247
      %s250 = sadd.s32 %s249, 1
      %p253 = scmp.eq.s32.totalorder %s28, 3
      %p254 = scmp.ne.s32.totalorder %s249, %s251
      %p255 = scmp.eq.s32.totalorder %s28, 0
      %p256 = por %p254, %p255
      %p257 = scmp.ne.s32.totalorder %s249, %s251
      %p258 = scmp.eq.s32.totalorder %s33, 3
      %p259 = por %p257, %p258
      %p260 = scmp.ne.s32.totalorder %s251, %s252
      %p261 = scmp.eq.s32.totalorder %s33, 0
      %p262 = por %p260, %p261
      %p263 = scmp.ne.s32.totalorder %s251, %s252
      %p264 = scmp.eq.s32.totalorder %s34, 3
      %p265 = por %p263, %p264
      %p267 = scmp.ne.s32.totalorder %s252, %s266
      %p268 = scmp.eq.s32.totalorder %s34, 0
      %p269 = por %p267, %p268
      %s271 = sadd.s32 %s270, 1
      %p274 = scmp.eq.s32.totalorder %s28, 3
      %p275 = scmp.ne.s32.totalorder %s270, %s272
      %p276 = scmp.eq.s32.totalorder %s28, 0
      %p277 = por %p275, %p276
      %p278 = scmp.ne.s32.totalorder %s270, %s272
      %p279 = scmp.eq.s32.totalorder %s33, 3
      %p280 = por %p278, %p279
      %p281 = scmp.ne.s32.totalorder %s272, %s273
      %p282 = scmp.eq.s32.totalorder %s33, 0
      %p283 = por %p281, %p282
      %p284 = scmp.ne.s32.totalorder %s272, %s273
      %p285 = scmp.eq.s32.totalorder %s34, 3
      %p286 = por %p284, %p285
      %p288 = scmp.ne.s32.totalorder %s273, %s287
      %p289 = scmp.eq.s32.totalorder %s34, 0
      %p290 = por %p288, %p289
      %s291 = ssub.s32 %s36, %s43
      %s292 = ssub.s32 %s35, %s47
      %s293 = sor.u32 %s291, %s292
      %p294 = scmp.eq.s32.totalorder %s293, 0
      %s296 = sadd.s32 %s295, 1
      %s297 = scalar_select %p294, %s295, %s296
      %p300 = pneg %p294
      %p301 = scmp.eq.s32.totalorder %s28, 3
      %p302 = por %p300, %p301
      %p303 = scmp.ne.s32.totalorder %s295, %s298
      %p304 = scmp.eq.s32.totalorder %s28, 0
      %p305 = por %p303, %p304
      %p306 = scmp.ne.s32.totalorder %s295, %s298
      %p307 = scmp.eq.s32.totalorder %s33, 3
      %p308 = por %p306, %p307
      %p309 = scmp.ne.s32.totalorder %s298, %s299
      %p310 = scmp.eq.s32.totalorder %s33, 0
      %p311 = por %p309, %p310
      %p312 = scmp.ne.s32.totalorder %s298, %s299
      %p313 = scmp.eq.s32.totalorder %s34, 3
      %p314 = por %p312, %p313
      %p316 = scmp.ne.s32.totalorder %s299, %s315
      %p317 = scmp.eq.s32.totalorder %s34, 0
      %p318 = por %p316, %p317
      %p319 = scmp.le.s32.totalorder 1, %s28
      %p320 = scmp.lt.s32.totalorder %s28, 5
      %p321 = pnand %p319, %p320
      %p322 = pneg %p321
      // Predicated region
      $region9: #{tpu_custom_call.1} parent=5 // pred_check
        _
      $region10: #{tpu_custom_call.1} parent=5 // pred_check_branch
        %324 = sbr.rel (%p321) target = $region12
      $region11: #{tpu_custom_call.1} parent=5 // pred_region
        %s325 = ssub.s32 %s28, 1
        // Predicated region
        $region13: #{tpu_custom_call.1} parent=11 // pred_check
          %p326 = pneg %p115
        $region14: #{tpu_custom_call.1} parent=11 // pred_check_branch
          %328 = sbr.rel (%p326) target = $region16
        $region15: #{tpu_custom_call.1} parent=11 // pred_region
          %s330 = ssub.s32 4096, 4096
          %331 = vsyncadd [#allocation7], %s330
          %s332 = sshll.u32 [#allocation8], 4
          %s333 = int_to_ptr.vmem [resolvable:$true] %s332
          %338 = dma.hbm_to_vmem [thread:$0]  %s2, 4096, %s333, [#allocation7], 256, 256, 16
        $region16: #{tpu_custom_call.1} parent=11 // pred_fallthru
          _
        // Predicated region
        $region17: #{tpu_custom_call.1} parent=11 // pred_check
          %p339 = pneg %p136
        $region18: #{tpu_custom_call.1} parent=11 // pred_check_branch
          %341 = sbr.rel (%p339) target = $region20
        $region19: #{tpu_custom_call.1} parent=11 // pred_region
          _
        $region20: #{tpu_custom_call.1} parent=11 // pred_fallthru
          _
        // Predicated region
        $region21: #{tpu_custom_call.1} parent=11 // pred_check
          %p342 = pneg %p157
        $region22: #{tpu_custom_call.1} parent=11 // pred_check_branch
          %344 = sbr.rel (%p342) target = $region24
        $region23: #{tpu_custom_call.1} parent=11 // pred_region
          %s346 = ssub.s32 2048, 2048
          %347 = vsyncadd [#allocation10], %s346
          %s348 = sshll.u32 [#allocation9], 4
          %s349 = int_to_ptr.vmem [resolvable:$true] %s348
          %354 = dma.hbm_to_vmem [thread:$0]  %s4, 2048, %s349, [#allocation10], 128, 128, 8
        $region24: #{tpu_custom_call.1} parent=11 // pred_fallthru
          _
        // Predicated region
        $region25: #{tpu_custom_call.1} parent=11 // pred_check
          %p355 = pneg %p178
        $region26: #{tpu_custom_call.1} parent=11 // pred_check_branch
          %357 = sbr.rel (%p355) target = $region28
        $region27: #{tpu_custom_call.1} parent=11 // pred_region
          %s359 = ssub.s32 2048, 2048
          %360 = vsyncadd [#allocation10], %s359
          %s361 = sshll.u32 [#allocation11], 4
          %s362 = int_to_ptr.vmem [resolvable:$true] %s361
          %367 = dma.hbm_to_vmem [thread:$0]  %s5, 2048, %s362, [#allocation10], 128, 128, 8
        $region28: #{tpu_custom_call.1} parent=11 // pred_fallthru
          _
        // Predicated region
        $region29: #{tpu_custom_call.1} parent=11 // pred_check
          %p368 = pneg %p199
        $region30: #{tpu_custom_call.1} parent=11 // pred_check_branch
          %370 = sbr.rel (%p368) target = $region32
        $region31: #{tpu_custom_call.1} parent=11 // pred_region
          %s372 = ssub.s32 2048, 2048
          %373 = vsyncadd [#allocation13], %s372
          %s374 = sshll.u32 [#allocation12], 4
          %s375 = int_to_ptr.vmem [resolvable:$true] %s374
          %380 = dma.hbm_to_vmem [thread:$0]  %s6, 2048, %s375, [#allocation13], 128, 128, 8
        $region32: #{tpu_custom_call.1} parent=11 // pred_fallthru
          _
        // Predicated region
        $region33: #{tpu_custom_call.1} parent=11 // pred_check
          %p381 = pneg %p220
        $region34: #{tpu_custom_call.1} parent=11 // pred_check_branch
          %383 = sbr.rel (%p381) target = $region36
        $region35: #{tpu_custom_call.1} parent=11 // pred_region
          _
        $region36: #{tpu_custom_call.1} parent=11 // pred_fallthru
          _
        // Predicated region
        $region37: #{tpu_custom_call.1} parent=11 // pred_check
          %p384 = pneg %p241
        $region38: #{tpu_custom_call.1} parent=11 // pred_check_branch
          %386 = sbr.rel (%p384) target = $region40
        $region39: #{tpu_custom_call.1} parent=11 // pred_region
          %s388 = ssub.s32 2048, 2048
          %389 = vsyncadd [#allocation13], %s388
          %s390 = sshll.u32 [#allocation14], 4
          %s391 = int_to_ptr.vmem [resolvable:$true] %s390
          %396 = dma.hbm_to_vmem [thread:$0]  %s8, 2048, %s391, [#allocation13], 128, 128, 8
        $region40: #{tpu_custom_call.1} parent=11 // pred_fallthru
          _
        // Predicated region
        $region41: #{tpu_custom_call.1} parent=11 // pred_check
          %p397 = pneg %p262
        $region42: #{tpu_custom_call.1} parent=11 // pred_check_branch
          %399 = sbr.rel (%p397) target = $region44
        $region43: #{tpu_custom_call.1} parent=11 // pred_region
          _
        $region44: #{tpu_custom_call.1} parent=11 // pred_fallthru
          _
        // Predicated region
        $region45: #{tpu_custom_call.1} parent=11 // pred_check
          %p400 = pneg %p283
        $region46: #{tpu_custom_call.1} parent=11 // pred_check_branch
          %402 = sbr.rel (%p400) target = $region48
        $region47: #{tpu_custom_call.1} parent=11 // pred_region
          _
        $region48: #{tpu_custom_call.1} parent=11 // pred_fallthru
          _
      $region12: #{tpu_custom_call.1} parent=5 // pred_fallthru
        _
      %p403 = scmp.lt.s32.totalorder %s28, 4
      // Predicated region
      $region49: #{tpu_custom_call.1} parent=5 // pred_check
        %p404 = pneg %p403
      $region50: #{tpu_custom_call.1} parent=5 // pred_check_branch
        %406 = sbr.rel (%p404) target = $region52
      $region51: #{tpu_custom_call.1} parent=5 // pred_region
        // Predicated region
        $region53: #{tpu_custom_call.1} parent=51 // pred_check
          %p407 = pneg %p62
        $region54: #{tpu_custom_call.1} parent=51 // pred_check_branch
          %409 = sbr.rel (%p407) target = $region56
        $region55: #{tpu_custom_call.1} parent=51 // pred_region
          %s410 = sand.u32 %s52, 1
          %s411 = scalar_lea.sflag [#allocation4], %s410
          %s412 = sand.u32 %s52, 1
          %s413 = smul.addr %s412, 32
          %s414 = scalar_lea.vmem [#allocation3], %s413
          %s415 = smul.u32 4, %s36
          %s417 = ssub.s32 512, 512
          %418 = vsyncadd %s411, %s417
          %s419 = smul.addr %s415, 2
          %s420 = sadd.s32 %s35, %s419
          %s421 = smul.addr %s420, 128
          %s422 = scalar_lea.hbm %s0, %s421
          %s423 = sshll.u32 %s414, 4
          %s424 = int_to_ptr.vmem [resolvable:$true] %s423
          %429 = dma.hbm_to_vmem [thread:$0]  %s422, 512, %s424, %s411, 256, 128, 8
        $region56: #{tpu_custom_call.1} parent=51 // pred_fallthru
          _
        // Predicated region
        $region57: #{tpu_custom_call.1} parent=51 // pred_check
          %p430 = pneg %p88
        $region58: #{tpu_custom_call.1} parent=51 // pred_check_branch
          %432 = sbr.rel (%p430) target = $region60
        $region59: #{tpu_custom_call.1} parent=51 // pred_region
          %s433 = sand.u32 %s28, 1
          %s434 = scalar_lea.sflag [#allocation7], %s433
          %s435 = sand.u32 %s78, 1
          %s436 = smul.addr %s435, 8
          %s437 = scalar_lea.vmem [#allocation6], %s436
          %s439 = ssub.s32 128, 128
          %440 = vsyncadd %s434, %s439
          %s441 = smul.addr %s35, 128
          %s442 = scalar_lea.hbm %s1, %s441
          %s444 = sshll.u32 %s437, 4
          %s445 = int_to_ptr.vmem [resolvable:$true] %s444
          %447 = dma.hbm_to_vmem [thread:$0]  %s442, 128, %s445, %s434
        $region60: #{tpu_custom_call.1} parent=51 // pred_fallthru
          _
      $region52: #{tpu_custom_call.1} parent=5 // pred_fallthru
        _
      %p448 = scmp.le.s32.totalorder 1, %s28
      %p449 = scmp.lt.s32.totalorder %s28, 5
      %p450 = pnand %p448, %p449
      %p451 = pneg %p450
      // Predicated region
      $region61: #{tpu_custom_call.1} parent=5 // pred_check
        _
      $region62: #{tpu_custom_call.1} parent=5 // pred_check_branch
        %453 = sbr.rel (%p450) target = $region64
      $region63: #{tpu_custom_call.1} parent=5 // pred_region
        %s454 = ssub.s32 %s28, 1
        %s455 = sand.u32 %s55, 1
        %s456 = scalar_lea.sflag [#allocation4], %s455
        %s457 = sand.u32 %s55, 1
        %s458 = smul.addr %s457, 32
        %s459 = scalar_lea.vmem [#allocation3], %s458
        // Predicated region
        $region65: #{tpu_custom_call.1} parent=63 // pred_check
          %p460 = pneg %p68
        $region66: #{tpu_custom_call.1} parent=63 // pred_check_branch
          %462 = sbr.rel (%p460) target = $region68
        $region67: #{tpu_custom_call.1} parent=63 // pred_region
          %463 = dma.done %s456, 512
        $region68: #{tpu_custom_call.1} parent=63 // pred_fallthru
          _
        %s464 = sand.u32 %s33, 1
        %s465 = scalar_lea.sflag [#allocation7], %s464
        %s466 = sand.u32 %s81, 1
        %s467 = smul.addr %s466, 8
        %s468 = scalar_lea.vmem [#allocation6], %s467
        // Predicated region
        $region69: #{tpu_custom_call.1} parent=63 // pred_check
          %p469 = pneg %p94
        $region70: #{tpu_custom_call.1} parent=63 // pred_check_branch
          %471 = sbr.rel (%p469) target = $region72
        $region71: #{tpu_custom_call.1} parent=63 // pred_region
          %472 = dma.done %s465, 128
        $region72: #{tpu_custom_call.1} parent=63 // pred_fallthru
          _
        // Predicated region
        $region73: #{tpu_custom_call.1} parent=63 // pred_check
          %p473 = pneg %p115
        $region74: #{tpu_custom_call.1} parent=63 // pred_check_branch
          %475 = sbr.rel (%p473) target = $region76
        $region75: #{tpu_custom_call.1} parent=63 // pred_region
          %476 = dma.done [#allocation7], 4096
        $region76: #{tpu_custom_call.1} parent=63 // pred_fallthru
          _
        // Predicated region
        $region77: #{tpu_custom_call.1} parent=63 // pred_check
          %p477 = pneg %p157
        $region78: #{tpu_custom_call.1} parent=63 // pred_check_branch
          %479 = sbr.rel (%p477) target = $region80
        $region79: #{tpu_custom_call.1} parent=63 // pred_region
          %480 = dma.done [#allocation10], 2048
        $region80: #{tpu_custom_call.1} parent=63 // pred_fallthru
          _
        // Predicated region
        $region81: #{tpu_custom_call.1} parent=63 // pred_check
          %p481 = pneg %p178
        $region82: #{tpu_custom_call.1} parent=63 // pred_check_branch
          %483 = sbr.rel (%p481) target = $region84
        $region83: #{tpu_custom_call.1} parent=63 // pred_region
          %484 = dma.done [#allocation10], 2048
        $region84: #{tpu_custom_call.1} parent=63 // pred_fallthru
          _
        // Predicated region
        $region85: #{tpu_custom_call.1} parent=63 // pred_check
          %p485 = pneg %p199
        $region86: #{tpu_custom_call.1} parent=63 // pred_check_branch
          %487 = sbr.rel (%p485) target = $region88
        $region87: #{tpu_custom_call.1} parent=63 // pred_region
          %488 = dma.done [#allocation13], 2048
        $region88: #{tpu_custom_call.1} parent=63 // pred_fallthru
          _
        // Predicated region
        $region89: #{tpu_custom_call.1} parent=63 // pred_check
          %p489 = pneg %p241
        $region90: #{tpu_custom_call.1} parent=63 // pred_check_branch
          %491 = sbr.rel (%p489) target = $region92
        $region91: #{tpu_custom_call.1} parent=63 // pred_region
          %492 = dma.done [#allocation13], 2048
        $region92: #{tpu_custom_call.1} parent=63 // pred_fallthru
          _
        %s493 = sand.u32 %s55, 1
        %s494 = scalar_lea.sflag [#allocation4], %s493
        %s495 = sand.u32 %s55, 1
        %s496 = smul.addr %s495, 32
        %s497 = scalar_lea.vmem [#allocation3], %s496
        %p498 = pneg %p68
        %p499 = pneg %p65
        %s500 = sand.u32 %s33, 1
        %s501 = scalar_lea.sflag [#allocation7], %s500
        %s502 = sand.u32 %s81, 1
        %s503 = smul.addr %s502, 8
        %s504 = scalar_lea.vmem [#allocation6], %s503
        %p505 = pneg %p94
        %p506 = pneg %p91
        %p507 = pneg %p115
        %p508 = pneg %p112
        %p509 = pneg %p136
        %p510 = pneg %p133
        %p511 = pneg %p157
        %p512 = pneg %p154
        %p513 = pneg %p178
        %p514 = pneg %p175
        %p515 = pneg %p199
        %p516 = pneg %p196
        %p517 = pneg %p220
        %p518 = pneg %p217
        %p519 = pneg %p241
        %p520 = pneg %p238
        %p521 = pneg %p262
        %p522 = pneg %p259
        %p523 = pneg %p283
        %p524 = pneg %p280
        %p525 = pneg %p311
        %p526 = pneg %p308
        %s527 = sand.u32 %s298, 1
        %s528 = scalar_lea.sflag [#allocation5], %s527
        %s529 = sand.u32 %s298, 1
        %s530 = smul.addr %s529, 32
        %s531 = scalar_lea.vmem [#allocation15], %s530
        %s532 = smul.u32 4, %s38
        %s533 = smul.u32 4, %s38
        %p534 = scmp.eq.s32.totalorder %s38, 0
        // Predicated region
        $region93: #{tpu_custom_call.1} parent=63 // pred_check
          %p535 = pneg %p534
        $region94: #{tpu_custom_call.1} parent=63 // pred_check_branch
          %537 = sbr.rel (%p535) target = $region96
        $region95: #{tpu_custom_call.1} parent=63 // pred_region
          %v538 = vld [vmem:[%s468] sm:$0xff]
          %539 = vst [vmem:[#allocation2] sm:$0xff] %v538
        $region96: #{tpu_custom_call.1} parent=63 // pred_fallthru
          _
        %v540 = vld [vmem:[#allocation8] sm:$0xff]
        %v541 = vld [vmem:[#allocation8 + $0x8] sm:$0xff]
        %v542 = vld [vmem:[#allocation8 + $0x10] sm:$0xff]
        %v543 = vld [vmem:[#allocation8 + $0x18] sm:$0xff]
        %v544 = vld [vmem:[#allocation8 + $0x20] sm:$0xff]
        %v545 = vld [vmem:[#allocation8 + $0x28] sm:$0xff]
        %v546 = vld [vmem:[#allocation8 + $0x30] sm:$0xff]
        %v547 = vld [vmem:[#allocation8 + $0x38] sm:$0xff]
        %v548 = vld [vmem:[#allocation8 + $0x40] sm:$0xff]
        %v549 = vld [vmem:[#allocation8 + $0x48] sm:$0xff]
        %v550 = vld [vmem:[#allocation8 + $0x50] sm:$0xff]
        %v551 = vld [vmem:[#allocation8 + $0x58] sm:$0xff]
        %v552 = vld [vmem:[#allocation8 + $0x60] sm:$0xff]
        %v553 = vld [vmem:[#allocation8 + $0x68] sm:$0xff]
        %v554 = vld [vmem:[#allocation8 + $0x70] sm:$0xff]
        %v555 = vld [vmem:[#allocation8 + $0x78] sm:$0xff]
        %v556 = vld [vmem:[#allocation8 + $0x80] sm:$0xff]
        %v557 = vld [vmem:[#allocation8 + $0x88] sm:$0xff]
        %v558 = vld [vmem:[#allocation8 + $0x90] sm:$0xff]
        %v559 = vld [vmem:[#allocation8 + $0x98] sm:$0xff]
        %v560 = vld [vmem:[#allocation8 + $0xa0] sm:$0xff]
        %v561 = vld [vmem:[#allocation8 + $0xa8] sm:$0xff]
        %v562 = vld [vmem:[#allocation8 + $0xb0] sm:$0xff]
        %v563 = vld [vmem:[#allocation8 + $0xb8] sm:$0xff]
        %v564 = vld [vmem:[#allocation8 + $0xc0] sm:$0xff]
        %v565 = vld [vmem:[#allocation8 + $0xc8] sm:$0xff]
        %v566 = vld [vmem:[#allocation8 + $0xd0] sm:$0xff]
        %v567 = vld [vmem:[#allocation8 + $0xd8] sm:$0xff]
        %v568 = vld [vmem:[#allocation8 + $0xe0] sm:$0xff]
        %v569 = vld [vmem:[#allocation8 + $0xe8] sm:$0xff]
        %v570 = vld [vmem:[#allocation8 + $0xf0] sm:$0xff]
        %v571 = vld [vmem:[#allocation8 + $0xf8] sm:$0xff]
        %v572 = vld [vmem:[%s3] sm:$0x3]
        %v573 = vld [vmem:[#allocation9] sm:$0xff]
        %v574 = vld [vmem:[#allocation9 + $0x8] sm:$0xff]
        %v575 = vld [vmem:[#allocation9 + $0x10] sm:$0xff]
        %v576 = vld [vmem:[#allocation9 + $0x18] sm:$0xff]
        %v577 = vld [vmem:[#allocation9 + $0x20] sm:$0xff]
        %v578 = vld [vmem:[#allocation9 + $0x28] sm:$0xff]
        %v579 = vld [vmem:[#allocation9 + $0x30] sm:$0xff]
        %v580 = vld [vmem:[#allocation9 + $0x38] sm:$0xff]
        %v581 = vld [vmem:[#allocation9 + $0x40] sm:$0xff]
        %v582 = vld [vmem:[#allocation9 + $0x48] sm:$0xff]
        %v583 = vld [vmem:[#allocation9 + $0x50] sm:$0xff]
        %v584 = vld [vmem:[#allocation9 + $0x58] sm:$0xff]
        %v585 = vld [vmem:[#allocation9 + $0x60] sm:$0xff]
        %v586 = vld [vmem:[#allocation9 + $0x68] sm:$0xff]
        %v587 = vld [vmem:[#allocation9 + $0x70] sm:$0xff]
        %v588 = vld [vmem:[#allocation9 + $0x78] sm:$0xff]
        %v589 = vld [vmem:[#allocation11] sm:$0xff]
        %v590 = vld [vmem:[#allocation11 + $0x8] sm:$0xff]
        %v591 = vld [vmem:[#allocation11 + $0x10] sm:$0xff]
        %v592 = vld [vmem:[#allocation11 + $0x18] sm:$0xff]
        %v593 = vld [vmem:[#allocation11 + $0x20] sm:$0xff]
        %v594 = vld [vmem:[#allocation11 + $0x28] sm:$0xff]
        %v595 = vld [vmem:[#allocation11 + $0x30] sm:$0xff]
        %v596 = vld [vmem:[#allocation11 + $0x38] sm:$0xff]
        %v597 = vld [vmem:[#allocation11 + $0x40] sm:$0xff]
        %v598 = vld [vmem:[#allocation11 + $0x48] sm:$0xff]
        %v599 = vld [vmem:[#allocation11 + $0x50] sm:$0xff]
        %v600 = vld [vmem:[#allocation11 + $0x58] sm:$0xff]
        %v601 = vld [vmem:[#allocation11 + $0x60] sm:$0xff]
        %v602 = vld [vmem:[#allocation11 + $0x68] sm:$0xff]
        %v603 = vld [vmem:[#allocation11 + $0x70] sm:$0xff]
        %v604 = vld [vmem:[#allocation11 + $0x78] sm:$0xff]
        %v605 = vld [vmem:[#allocation12] sm:$0xff]
        %v606 = vld [vmem:[#allocation12 + $0x8] sm:$0xff]
        %v607 = vld [vmem:[#allocation12 + $0x10] sm:$0xff]
        %v608 = vld [vmem:[#allocation12 + $0x18] sm:$0xff]
        %v609 = vld [vmem:[#allocation12 + $0x20] sm:$0xff]
        %v610 = vld [vmem:[#allocation12 + $0x28] sm:$0xff]
        %v611 = vld [vmem:[#allocation12 + $0x30] sm:$0xff]
        %v612 = vld [vmem:[#allocation12 + $0x38] sm:$0xff]
        %v613 = vld [vmem:[#allocation12 + $0x40] sm:$0xff]
        %v614 = vld [vmem:[#allocation12 + $0x48] sm:$0xff]
        %v615 = vld [vmem:[#allocation12 + $0x50] sm:$0xff]
        %v616 = vld [vmem:[#allocation12 + $0x58] sm:$0xff]
        %v617 = vld [vmem:[#allocation12 + $0x60] sm:$0xff]
        %v618 = vld [vmem:[#allocation12 + $0x68] sm:$0xff]
        %v619 = vld [vmem:[#allocation12 + $0x70] sm:$0xff]
        %v620 = vld [vmem:[#allocation12 + $0x78] sm:$0xff]
        %v621 = vld [vmem:[%s7] sm:$0x1]
        %v622 = vld [vmem:[#allocation14] sm:$0xff]
        %v623 = vld [vmem:[#allocation14 + $0x8] sm:$0xff]
        %v624 = vld [vmem:[#allocation14 + $0x10] sm:$0xff]
        %v625 = vld [vmem:[#allocation14 + $0x18] sm:$0xff]
        %v626 = vld [vmem:[#allocation14 + $0x20] sm:$0xff]
        %v627 = vld [vmem:[#allocation14 + $0x28] sm:$0xff]
        %v628 = vld [vmem:[#allocation14 + $0x30] sm:$0xff]
        %v629 = vld [vmem:[#allocation14 + $0x38] sm:$0xff]
        %v630 = vld [vmem:[#allocation14 + $0x40] sm:$0xff]
        %v631 = vld [vmem:[#allocation14 + $0x48] sm:$0xff]
        %v632 = vld [vmem:[#allocation14 + $0x50] sm:$0xff]
        %v633 = vld [vmem:[#allocation14 + $0x58] sm:$0xff]
        %v634 = vld [vmem:[#allocation14 + $0x60] sm:$0xff]
        %v635 = vld [vmem:[#allocation14 + $0x68] sm:$0xff]
        %v636 = vld [vmem:[#allocation14 + $0x70] sm:$0xff]
        %v637 = vld [vmem:[#allocation14 + $0x78] sm:$0xff]
        %v638 = vld [vmem:[%s9] sm:$0x1]
        %v639 = vld [vmem:[%s10] sm:$0x1]
        %v640 = vld [vmem:[#allocation2] sm:$0xff]
        %v641 = vld [vmem:[%s459] sm:$0xff]
        %v643 = vlaneseq
        %v644 = vshrl.u32 %v643, 7
        %v645 = vsub.s32 0, %v644
        %v646 = vrot.slane %v572, %v645
        %v647 = vlaneseq
        %v648 = vshrl.u32 %v647, 7
        %v649 = vsub.s32 1, %v648
        %v650 = vrot.slane %v572, %v649
        %653 = vmatprep.subr.mxu0 %v571
        %654 = vmatpush1.msra.mxu0 %v570
        %655 = vmatprep.subr.mxu0 %v569
        %656 = vmatpush1.msra.mxu0 %v568
        %657 = vmatprep.subr.mxu0 %v567
        %658 = vmatpush1.msra.mxu0 %v566
        %659 = vmatprep.subr.mxu0 %v565
        %660 = vmatpush1.msra.mxu0 %v564
        %661 = vmatprep.subr.mxu0 %v563
        %662 = vmatpush1.msra.mxu0 %v562
        %663 = vmatprep.subr.mxu0 %v561
        %664 = vmatpush1.msra.mxu0 %v560
        %665 = vmatprep.subr.mxu0 %v559
        %666 = vmatpush1.msra.mxu0 %v558
        %667 = vmatprep.subr.mxu0 %v557
        %668 = vmatpush1.msra.mxu0 %v556
        %669 = vmatprep.subr.mxu0 %v555
        %670 = vmatpush1.msra.mxu0 %v554
        %671 = vmatprep.subr.mxu0 %v553
        %672 = vmatpush1.msra.mxu0 %v552
        %673 = vmatprep.subr.mxu0 %v551
        %674 = vmatpush1.msra.mxu0 %v550
        %675 = vmatprep.subr.mxu0 %v549
        %676 = vmatpush1.msra.mxu0 %v548
        %677 = vmatprep.subr.mxu0 %v547
        %678 = vmatpush1.msra.mxu0 %v546
        %679 = vmatprep.subr.mxu0 %v545
        %680 = vmatpush1.msra.mxu0 %v544
        %681 = vmatprep.subr.mxu0 %v543
        %682 = vmatpush1.msra.mxu0 %v542
        %683 = vmatprep.subr.mxu0 %v541
        %684 = vmatpush1.msra.mxu0 %v540
        %685 = vmatprep.subr.mxu0 0.0
        %686 = vmatpush2.msra.mxu0 0.0
        %687 = vmatprep.subr.mxu0 0.0
        %688 = vmatpush2.msra.mxu0 0.0
        %689 = vmatprep.subr.mxu0 0.0
        %690 = vmatpush2.msra.mxu0 0.0
        %691 = vmatprep.subr.mxu0 0.0
        %692 = vmatpush2.msra.mxu0 0.0
        %693 = vmatprep.subr.mxu0 0.0
        %694 = vmatpush2.msra.mxu0 0.0
        %695 = vmatprep.subr.mxu0 0.0
        %696 = vmatpush2.msra.mxu0 0.0
        %697 = vmatprep.subr.mxu0 0.0
        %698 = vmatpush2.msra.mxu0 0.0
        %699 = vmatprep.subr.mxu0 0.0
        %700 = vmatpush2.msra.mxu0 0.0
        %701 = vmatprep.subr.mxu0 0.0
        %702 = vmatpush2.msra.mxu0 0.0
        %703 = vmatprep.subr.mxu0 0.0
        %704 = vmatpush2.msra.mxu0 0.0
        %705 = vmatprep.subr.mxu0 0.0
        %706 = vmatpush2.msra.mxu0 0.0
        %707 = vmatprep.subr.mxu0 0.0
        %708 = vmatpush2.msra.mxu0 0.0
        %709 = vmatprep.subr.mxu0 0.0
        %710 = vmatpush2.msra.mxu0 0.0
        %711 = vmatprep.subr.mxu0 0.0
        %712 = vmatpush2.msra.mxu0 0.0
        %713 = vmatprep.subr.mxu0 0.0
        %714 = vmatpush2.msra.mxu0 0.0
        %715 = vmatprep.subr.mxu0 0.0
        %716 = vmatpush2.msra.mxu0 0.0
        %717 = vmatprep.mubr.f32.mxu0 0.0
        %718 = vmatmul.mubr.f32.gmra.mxu0 %v640
        %v719 = vpop.f32.mrf.mxu0
        %v720 = vadd.f32 %v646, %v719
        %v721 = vpop.f32.mrf.mxu0
        %v722 = vadd.f32 %v650, %v721
        %723 = vdwg.mxu0
        %v724 = vadd.f32 %v640, %v641
        %v725 = vmul.f32 %v640, %v641
        %v726 = vmul.f32 %v720, %v640
        %v727 = vmul.f32 %v720, %v641
        %v728 = vmul.f32 %v720, %v724
        %v729 = vmul.f32 %v720, %v725
        %730 = vmatprep.subr.mxu0 0.0
        %731 = vmatpush1.msra.mxu0 %v588
        %732 = vmatprep.subr.mxu0 0.0
        %733 = vmatpush1.msra.mxu0 %v587
        %734 = vmatprep.subr.mxu0 0.0
        %735 = vmatpush1.msra.mxu0 %v586
        %736 = vmatprep.subr.mxu0 0.0
        %737 = vmatpush1.msra.mxu0 %v585
        %738 = vmatprep.subr.mxu0 0.0
        %739 = vmatpush1.msra.mxu0 %v584
        %740 = vmatprep.subr.mxu0 0.0
        %741 = vmatpush1.msra.mxu0 %v583
        %742 = vmatprep.subr.mxu0 0.0
        %743 = vmatpush1.msra.mxu0 %v582
        %744 = vmatprep.subr.mxu0 0.0
        %745 = vmatpush1.msra.mxu0 %v581
        %746 = vmatprep.subr.mxu0 0.0
        %747 = vmatpush1.msra.mxu0 %v580
        %748 = vmatprep.subr.mxu0 0.0
        %749 = vmatpush1.msra.mxu0 %v579
        %750 = vmatprep.subr.mxu0 0.0
        %751 = vmatpush1.msra.mxu0 %v578
        %752 = vmatprep.subr.mxu0 0.0
        %753 = vmatpush1.msra.mxu0 %v577
        %754 = vmatprep.subr.mxu0 0.0
        %755 = vmatpush1.msra.mxu0 %v576
        %756 = vmatprep.subr.mxu0 0.0
        %757 = vmatpush1.msra.mxu0 %v575
        %758 = vmatprep.subr.mxu0 0.0
        %759 = vmatpush1.msra.mxu0 %v574
        %760 = vmatprep.subr.mxu0 0.0
        %761 = vmatpush1.msra.mxu0 %v573
        %762 = vmatprep.subr.mxu0 0.0
        %763 = vmatpush2.msra.mxu0 0.0
        %764 = vmatprep.subr.mxu0 0.0
        %765 = vmatpush2.msra.mxu0 0.0
        %766 = vmatprep.subr.mxu0 0.0
        %767 = vmatpush2.msra.mxu0 0.0
        %768 = vmatprep.subr.mxu0 0.0
        %769 = vmatpush2.msra.mxu0 0.0
        %770 = vmatprep.subr.mxu0 0.0
        %771 = vmatpush2.msra.mxu0 0.0
        %772 = vmatprep.subr.mxu0 0.0
        %773 = vmatpush2.msra.mxu0 0.0
        %774 = vmatprep.subr.mxu0 0.0
        %775 = vmatpush2.msra.mxu0 0.0
        %776 = vmatprep.subr.mxu0 0.0
        %777 = vmatpush2.msra.mxu0 0.0
        %778 = vmatprep.subr.mxu0 0.0
        %779 = vmatpush2.msra.mxu0 0.0
        %780 = vmatprep.subr.mxu0 0.0
        %781 = vmatpush2.msra.mxu0 0.0
        %782 = vmatprep.subr.mxu0 0.0
        %783 = vmatpush2.msra.mxu0 0.0
        %784 = vmatprep.subr.mxu0 0.0
        %785 = vmatpush2.msra.mxu0 0.0
        %786 = vmatprep.subr.mxu0 0.0
        %787 = vmatpush2.msra.mxu0 0.0
        %788 = vmatprep.subr.mxu0 0.0
        %789 = vmatpush2.msra.mxu0 0.0
        %790 = vmatprep.subr.mxu0 0.0
        %791 = vmatpush2.msra.mxu0 0.0
        %792 = vmatprep.subr.mxu0 0.0
        %793 = vmatpush2.msra.mxu0 0.0
        %794 = vmatprep.mubr.f32.mxu0 0.0
        %795 = vmatmul.mubr.f32.gmra.mxu0 %v726
        %v796 = vpop.f32.mrf.mxu0
        %v797 = vadd.f32 0.0, %v796
        %v798 = vpop.f32.mrf.mxu0
        %799 = vmatprep.mubr.f32.mxu0 0.0
        %800 = vmatmul.mubr.f32.gmra.mxu0 %v727
        %v801 = vpop.f32.mrf.mxu0
        %v802 = vadd.f32 0.0, %v801
        %v803 = vpop.f32.mrf.mxu0
        %804 = vmatprep.mubr.f32.mxu0 0.0
        %805 = vmatmul.mubr.f32.gmra.mxu0 %v728
        %v806 = vpop.f32.mrf.mxu0
        %v807 = vadd.f32 0.0, %v806
        %v808 = vpop.f32.mrf.mxu0
        %809 = vmatprep.mubr.f32.mxu0 0.0
        %810 = vmatmul.mubr.f32.gmra.mxu0 %v729
        %v811 = vpop.f32.mrf.mxu0
        %v812 = vadd.f32 0.0, %v811
        %v813 = vpop.f32.mrf.mxu0
        %814 = vdwg.mxu0
        %v815 = vmax.f32 %v797, %v802
        %v816 = vmax.f32 %v807, %v812
        %v817 = vmax.f32 %v815, %v816
        %v818 = vsub.f32 %v797, %v817
        %v819 = vsub.f32 %v802, %v817
        %v820 = vsub.f32 %v807, %v817
        %v821 = vsub.f32 %v812, %v817
        %v822 = vmul.f32 %v818, 1.442695
        %v823 = vpow.pop %v822
        %v824 = vmul.f32 %v819, 1.442695
        %v825 = vpow.pop %v824
        %v826 = vmul.f32 %v820, 1.442695
        %v827 = vpow.pop %v826
        %v828 = vmul.f32 %v821, 1.442695
        %v829 = vpow.pop %v828
        %v830 = vadd.f32 %v823, %v825
        %v831 = vadd.f32 %v830, %v827
        %v832 = vadd.f32 %v831, %v829
        %v833 = vrcp.pop %v832
        %v834 = vmul.f32 1.0, %v833
        %v835 = vmul.f32 %v823, %v834
        %v836 = vmul.f32 %v825, %v834
        %v837 = vmul.f32 %v827, %v834
        %v838 = vmul.f32 %v829, %v834
        %839 = vmatprep.subr.mxu0 0.0
        %840 = vmatpush1.msra.mxu0 %v604
        %841 = vmatprep.subr.mxu0 0.0
        %842 = vmatpush1.msra.mxu0 %v603
        %843 = vmatprep.subr.mxu0 0.0
        %844 = vmatpush1.msra.mxu0 %v602
        %845 = vmatprep.subr.mxu0 0.0
        %846 = vmatpush1.msra.mxu0 %v601
        %847 = vmatprep.subr.mxu0 0.0
        %848 = vmatpush1.msra.mxu0 %v600
        %849 = vmatprep.subr.mxu0 0.0
        %850 = vmatpush1.msra.mxu0 %v599
        %851 = vmatprep.subr.mxu0 0.0
        %852 = vmatpush1.msra.mxu0 %v598
        %853 = vmatprep.subr.mxu0 0.0
        %854 = vmatpush1.msra.mxu0 %v597
        %855 = vmatprep.subr.mxu0 0.0
        %856 = vmatpush1.msra.mxu0 %v596
        %857 = vmatprep.subr.mxu0 0.0
        %858 = vmatpush1.msra.mxu0 %v595
        %859 = vmatprep.subr.mxu0 0.0
        %860 = vmatpush1.msra.mxu0 %v594
        %861 = vmatprep.subr.mxu0 0.0
        %862 = vmatpush1.msra.mxu0 %v593
        %863 = vmatprep.subr.mxu0 0.0
        %864 = vmatpush1.msra.mxu0 %v592
        %865 = vmatprep.subr.mxu0 0.0
        %866 = vmatpush1.msra.mxu0 %v591
        %867 = vmatprep.subr.mxu0 0.0
        %868 = vmatpush1.msra.mxu0 %v590
        %869 = vmatprep.subr.mxu0 0.0
        %870 = vmatpush1.msra.mxu0 %v589
        %871 = vmatprep.subr.mxu0 0.0
        %872 = vmatpush2.msra.mxu0 0.0
        %873 = vmatprep.subr.mxu0 0.0
        %874 = vmatpush2.msra.mxu0 0.0
        %875 = vmatprep.subr.mxu0 0.0
        %876 = vmatpush2.msra.mxu0 0.0
        %877 = vmatprep.subr.mxu0 0.0
        %878 = vmatpush2.msra.mxu0 0.0
        %879 = vmatprep.subr.mxu0 0.0
        %880 = vmatpush2.msra.mxu0 0.0
        %881 = vmatprep.subr.mxu0 0.0
        %882 = vmatpush2.msra.mxu0 0.0
        %883 = vmatprep.subr.mxu0 0.0
        %884 = vmatpush2.msra.mxu0 0.0
        %885 = vmatprep.subr.mxu0 0.0
        %886 = vmatpush2.msra.mxu0 0.0
        %887 = vmatprep.subr.mxu0 0.0
        %888 = vmatpush2.msra.mxu0 0.0
        %889 = vmatprep.subr.mxu0 0.0
        %890 = vmatpush2.msra.mxu0 0.0
        %891 = vmatprep.subr.mxu0 0.0
        %892 = vmatpush2.msra.mxu0 0.0
        %893 = vmatprep.subr.mxu0 0.0
        %894 = vmatpush2.msra.mxu0 0.0
        %895 = vmatprep.subr.mxu0 0.0
        %896 = vmatpush2.msra.mxu0 0.0
        %897 = vmatprep.subr.mxu0 0.0
        %898 = vmatpush2.msra.mxu0 0.0
        %899 = vmatprep.subr.mxu0 0.0
        %900 = vmatpush2.msra.mxu0 0.0
        %901 = vmatprep.subr.mxu0 0.0
        %902 = vmatpush2.msra.mxu0 0.0
        %903 = vmatprep.mubr.f32.mxu0 0.0
        %904 = vmatmul.mubr.f32.gmra.mxu0 %v835
        %v905 = vpop.f32.mrf.mxu0
        %v906 = vadd.f32 0.0, %v905
        %v907 = vpop.f32.mrf.mxu0
        %908 = vmatprep.mubr.f32.mxu0 0.0
        %909 = vmatmul.mubr.f32.gmra.mxu0 %v836
        %v910 = vpop.f32.mrf.mxu0
        %v911 = vadd.f32 0.0, %v910
        %v912 = vpop.f32.mrf.mxu0
        %913 = vmatprep.mubr.f32.mxu0 0.0
        %914 = vmatmul.mubr.f32.gmra.mxu0 %v837
        %v915 = vpop.f32.mrf.mxu0
        %v916 = vadd.f32 0.0, %v915
        %v917 = vpop.f32.mrf.mxu0
        %918 = vmatprep.mubr.f32.mxu0 0.0
        %919 = vmatmul.mubr.f32.gmra.mxu0 %v838
        %v920 = vpop.f32.mrf.mxu0
        %v921 = vadd.f32 0.0, %v920
        %v922 = vpop.f32.mrf.mxu0
        %923 = vdwg.mxu0
        %v924 = vmul.f32 %v906, %v640
        %v925 = vmul.f32 %v911, %v641
        %v926 = vmul.f32 %v916, %v724
        %v927 = vmul.f32 %v921, %v725
        %v928 = vadd.f32 %v924, %v925
        %v929 = vadd.f32 %v928, %v926
        %v930 = vadd.f32 %v929, %v927
        %v932 = vlaneseq
        %v933 = vshrl.u32 %v932, 7
        %v934 = vsub.s32 0, %v933
        %v935 = vrot.slane %v621, %v934
        %937 = vmatprep.subr.mxu0 0.0
        %938 = vmatpush1.msra.mxu0 %v620
        %939 = vmatprep.subr.mxu0 0.0
        %940 = vmatpush1.msra.mxu0 %v619
        %941 = vmatprep.subr.mxu0 0.0
        %942 = vmatpush1.msra.mxu0 %v618
        %943 = vmatprep.subr.mxu0 0.0
        %944 = vmatpush1.msra.mxu0 %v617
        %945 = vmatprep.subr.mxu0 0.0
        %946 = vmatpush1.msra.mxu0 %v616
        %947 = vmatprep.subr.mxu0 0.0
        %948 = vmatpush1.msra.mxu0 %v615
        %949 = vmatprep.subr.mxu0 0.0
        %950 = vmatpush1.msra.mxu0 %v614
        %951 = vmatprep.subr.mxu0 0.0
        %952 = vmatpush1.msra.mxu0 %v613
        %953 = vmatprep.subr.mxu0 0.0
        %954 = vmatpush1.msra.mxu0 %v612
        %955 = vmatprep.subr.mxu0 0.0
        %956 = vmatpush1.msra.mxu0 %v611
        %957 = vmatprep.subr.mxu0 0.0
        %958 = vmatpush1.msra.mxu0 %v610
        %959 = vmatprep.subr.mxu0 0.0
        %960 = vmatpush1.msra.mxu0 %v609
        %961 = vmatprep.subr.mxu0 0.0
        %962 = vmatpush1.msra.mxu0 %v608
        %963 = vmatprep.subr.mxu0 0.0
        %964 = vmatpush1.msra.mxu0 %v607
        %965 = vmatprep.subr.mxu0 0.0
        %966 = vmatpush1.msra.mxu0 %v606
        %967 = vmatprep.subr.mxu0 0.0
        %968 = vmatpush1.msra.mxu0 %v605
        %969 = vmatprep.subr.mxu0 0.0
        %970 = vmatpush2.msra.mxu0 0.0
        %971 = vmatprep.subr.mxu0 0.0
        %972 = vmatpush2.msra.mxu0 0.0
        %973 = vmatprep.subr.mxu0 0.0
        %974 = vmatpush2.msra.mxu0 0.0
        %975 = vmatprep.subr.mxu0 0.0
        %976 = vmatpush2.msra.mxu0 0.0
        %977 = vmatprep.subr.mxu0 0.0
        %978 = vmatpush2.msra.mxu0 0.0
        %979 = vmatprep.subr.mxu0 0.0
        %980 = vmatpush2.msra.mxu0 0.0
        %981 = vmatprep.subr.mxu0 0.0
        %982 = vmatpush2.msra.mxu0 0.0
        %983 = vmatprep.subr.mxu0 0.0
        %984 = vmatpush2.msra.mxu0 0.0
        %985 = vmatprep.subr.mxu0 0.0
        %986 = vmatpush2.msra.mxu0 0.0
        %987 = vmatprep.subr.mxu0 0.0
        %988 = vmatpush2.msra.mxu0 0.0
        %989 = vmatprep.subr.mxu0 0.0
        %990 = vmatpush2.msra.mxu0 0.0
        %991 = vmatprep.subr.mxu0 0.0
        %992 = vmatpush2.msra.mxu0 0.0
        %993 = vmatprep.subr.mxu0 0.0
        %994 = vmatpush2.msra.mxu0 0.0
        %995 = vmatprep.subr.mxu0 0.0
        %996 = vmatpush2.msra.mxu0 0.0
        %997 = vmatprep.subr.mxu0 0.0
        %998 = vmatpush2.msra.mxu0 0.0
        %999 = vmatprep.subr.mxu0 0.0
        %1000 = vmatpush2.msra.mxu0 0.0
        %1001 = vmatprep.mubr.f32.mxu0 0.0
        %1002 = vmatmul.mubr.f32.gmra.mxu0 %v930
        %v1003 = vpop.f32.mrf.mxu0
        %v1004 = vadd.f32 %v935, %v1003
        %v1005 = vpop.f32.mrf.mxu0
        %1006 = vdwg.mxu0
        %v1007 = vmul.f32 %v1004, 0.5
        %v1008 = vmul.f32 %v1004, 0.044715
        %v1009 = vmul.f32 %v1008, %v1004
        %v1010 = vmul.f32 %v1009, %v1004
        %v1011 = vadd.f32 %v1004, %v1010
        %v1012 = vmul.f32 %v1011, 0.7978846
        %v1013 = vtanh.pop %v1012
        %v1014 = vadd.f32 %v1013, 1.0
        %v1015 = vmul.f32 %v1007, %v1014
        %1016 = vmatprep.subr.mxu0 0.0
        %1017 = vmatpush1.msra.mxu0 %v637
        %1018 = vmatprep.subr.mxu0 0.0
        %1019 = vmatpush1.msra.mxu0 %v636
        %1020 = vmatprep.subr.mxu0 0.0
        %1021 = vmatpush1.msra.mxu0 %v635
        %1022 = vmatprep.subr.mxu0 0.0
        %1023 = vmatpush1.msra.mxu0 %v634
        %1024 = vmatprep.subr.mxu0 0.0
        %1025 = vmatpush1.msra.mxu0 %v633
        %1026 = vmatprep.subr.mxu0 0.0
        %1027 = vmatpush1.msra.mxu0 %v632
        %1028 = vmatprep.subr.mxu0 0.0
        %1029 = vmatpush1.msra.mxu0 %v631
        %1030 = vmatprep.subr.mxu0 0.0
        %1031 = vmatpush1.msra.mxu0 %v630
        %1032 = vmatprep.subr.mxu0 0.0
        %1033 = vmatpush1.msra.mxu0 %v629
        %1034 = vmatprep.subr.mxu0 0.0
        %1035 = vmatpush1.msra.mxu0 %v628
        %1036 = vmatprep.subr.mxu0 0.0
        %1037 = vmatpush1.msra.mxu0 %v627
        %1038 = vmatprep.subr.mxu0 0.0
        %1039 = vmatpush1.msra.mxu0 %v626
        %1040 = vmatprep.subr.mxu0 0.0
        %1041 = vmatpush1.msra.mxu0 %v625
        %1042 = vmatprep.subr.mxu0 0.0
        %1043 = vmatpush1.msra.mxu0 %v624
        %1044 = vmatprep.subr.mxu0 0.0
        %1045 = vmatpush1.msra.mxu0 %v623
        %1046 = vmatprep.subr.mxu0 0.0
        %1047 = vmatpush1.msra.mxu0 %v622
        %1048 = vmatprep.subr.mxu0 0.0
        %1049 = vmatpush2.msra.mxu0 0.0
        %1050 = vmatprep.subr.mxu0 0.0
        %1051 = vmatpush2.msra.mxu0 0.0
        %1052 = vmatprep.subr.mxu0 0.0
        %1053 = vmatpush2.msra.mxu0 0.0
        %1054 = vmatprep.subr.mxu0 0.0
        %1055 = vmatpush2.msra.mxu0 0.0
        %1056 = vmatprep.subr.mxu0 0.0
        %1057 = vmatpush2.msra.mxu0 0.0
        %1058 = vmatprep.subr.mxu0 0.0
        %1059 = vmatpush2.msra.mxu0 0.0
        %1060 = vmatprep.subr.mxu0 0.0
        %1061 = vmatpush2.msra.mxu0 0.0
        %1062 = vmatprep.subr.mxu0 0.0
        %1063 = vmatpush2.msra.mxu0 0.0
        %1064 = vmatprep.subr.mxu0 0.0
        %1065 = vmatpush2.msra.mxu0 0.0
        %1066 = vmatprep.subr.mxu0 0.0
        %1067 = vmatpush2.msra.mxu0 0.0
        %1068 = vmatprep.subr.mxu0 0.0
        %1069 = vmatpush2.msra.mxu0 0.0
        %1070 = vmatprep.subr.mxu0 0.0
        %1071 = vmatpush2.msra.mxu0 0.0
        %1072 = vmatprep.subr.mxu0 0.0
        %1073 = vmatpush2.msra.mxu0 0.0
        %1074 = vmatprep.subr.mxu0 0.0
        %1075 = vmatpush2.msra.mxu0 0.0
        %1076 = vmatprep.subr.mxu0 0.0
        %1077 = vmatpush2.msra.mxu0 0.0
        %1078 = vmatprep.subr.mxu0 0.0
        %1079 = vmatpush2.msra.mxu0 0.0
        %1080 = vmatprep.mubr.f32.mxu0 0.0
        %1081 = vmatmul.mubr.f32.gmra.mxu0 %v1015
        %v1082 = vpop.f32.mrf.mxu0
        %v1083 = vadd.f32 0.0, %v1082
        %v1084 = vpop.f32.mrf.mxu0
        %1085 = vdwg.mxu0
        %v1086 = vadd.f32 %v722, %v1083
        %v1087 = vxor.u32 %v1086, 2147483648
        %v1088 = vmul.f32 %v1087, 1.442695
        %v1089 = vpow.pop %v1088
        %v1090 = vadd.f32 %v1089, 1.0
        %v1091 = vrcp.pop %v1090
        %v1092 = vmul.f32 1.0, %v1091
        %v1093 = vadd.f32 %v1015, %v640
        %1094 = vadd.xlane.f32.xlu0 %v1093
        %v1095 = vpop.xlane.xlu0 %1094
        %v1096 = vrcp.pop 128.0
        %v1097 = vmul.f32 %v1095, %v1096
        %v1098 = vsub.f32 %v1093, %v1097
        %v1099 = vmul.f32 %v1098, %v1098
        %1100 = vadd.xlane.f32.xlu0 %v1099
        %v1101 = vpop.xlane.xlu0 %1100
        %v1102 = vmul.f32 %v1101, %v1096
        %v1103 = vadd.f32 %v1102, 1e-05
        %v1104 = vrsqrt.pop %v1103
        %v1105 = vmul.f32 %v1098, %v1104
        %v1107 = vlaneseq
        %v1108 = vshrl.u32 %v1107, 7
        %v1109 = vsub.s32 0, %v1108
        %v1110 = vrot.slane %v638, %v1109
        %v1112 = vmul.f32 %v1105, %v1110
        %v1114 = vlaneseq
        %v1115 = vshrl.u32 %v1114, 7
        %v1116 = vsub.s32 0, %v1115
        %v1117 = vrot.slane %v639, %v1116
        %v1119 = vadd.f32 %v1112, %v1117
        %v1120 = vmul.f32 %v1092, %v1119
        %v1121 = vsub.f32 1.0, %v1092
        %v1122 = vmul.f32 %v1121, %v640
        %v1123 = vadd.f32 %v1120, %v1122
        %1124 = vst [vmem:[%s531] sm:$0xff] %v1123
        %s1125 = scalar_lea.vmem %s459, 8 [#allocation3]
        %v1126 = vld [vmem:[%s1125] sm:$0xff]
        %1127 = vmatprep.subr.mxu0 %v571
        %1128 = vmatpush1.msra.mxu0 %v570
        %1129 = vmatprep.subr.mxu0 %v569
        %1130 = vmatpush1.msra.mxu0 %v568
        %1131 = vmatprep.subr.mxu0 %v567
        %1132 = vmatpush1.msra.mxu0 %v566
        %1133 = vmatprep.subr.mxu0 %v565
        %1134 = vmatpush1.msra.mxu0 %v564
        %1135 = vmatprep.subr.mxu0 %v563
        %1136 = vmatpush1.msra.mxu0 %v562
        %1137 = vmatprep.subr.mxu0 %v561
        %1138 = vmatpush1.msra.mxu0 %v560
        %1139 = vmatprep.subr.mxu0 %v559
        %1140 = vmatpush1.msra.mxu0 %v558
        %1141 = vmatprep.subr.mxu0 %v557
        %1142 = vmatpush1.msra.mxu0 %v556
        %1143 = vmatprep.subr.mxu0 %v555
        %1144 = vmatpush1.msra.mxu0 %v554
        %1145 = vmatprep.subr.mxu0 %v553
        %1146 = vmatpush1.msra.mxu0 %v552
        %1147 = vmatprep.subr.mxu0 %v551
        %1148 = vmatpush1.msra.mxu0 %v550
        %1149 = vmatprep.subr.mxu0 %v549
        %1150 = vmatpush1.msra.mxu0 %v548
        %1151 = vmatprep.subr.mxu0 %v547
        %1152 = vmatpush1.msra.mxu0 %v546
        %1153 = vmatprep.subr.mxu0 %v545
        %1154 = vmatpush1.msra.mxu0 %v544
        %1155 = vmatprep.subr.mxu0 %v543
        %1156 = vmatpush1.msra.mxu0 %v542
        %1157 = vmatprep.subr.mxu0 %v541
        %1158 = vmatpush1.msra.mxu0 %v540
        %1159 = vmatprep.subr.mxu0 0.0
        %1160 = vmatpush2.msra.mxu0 0.0
        %1161 = vmatprep.subr.mxu0 0.0
        %1162 = vmatpush2.msra.mxu0 0.0
        %1163 = vmatprep.subr.mxu0 0.0
        %1164 = vmatpush2.msra.mxu0 0.0
        %1165 = vmatprep.subr.mxu0 0.0
        %1166 = vmatpush2.msra.mxu0 0.0
        %1167 = vmatprep.subr.mxu0 0.0
        %1168 = vmatpush2.msra.mxu0 0.0
        %1169 = vmatprep.subr.mxu0 0.0
        %1170 = vmatpush2.msra.mxu0 0.0
        %1171 = vmatprep.subr.mxu0 0.0
        %1172 = vmatpush2.msra.mxu0 0.0
        %1173 = vmatprep.subr.mxu0 0.0
        %1174 = vmatpush2.msra.mxu0 0.0
        %1175 = vmatprep.subr.mxu0 0.0
        %1176 = vmatpush2.msra.mxu0 0.0
        %1177 = vmatprep.subr.mxu0 0.0
        %1178 = vmatpush2.msra.mxu0 0.0
        %1179 = vmatprep.subr.mxu0 0.0
        %1180 = vmatpush2.msra.mxu0 0.0
        %1181 = vmatprep.subr.mxu0 0.0
        %1182 = vmatpush2.msra.mxu0 0.0
        %1183 = vmatprep.subr.mxu0 0.0
        %1184 = vmatpush2.msra.mxu0 0.0
        %1185 = vmatprep.subr.mxu0 0.0
        %1186 = vmatpush2.msra.mxu0 0.0
        %1187 = vmatprep.subr.mxu0 0.0
        %1188 = vmatpush2.msra.mxu0 0.0
        %1189 = vmatprep.subr.mxu0 0.0
        %1190 = vmatpush2.msra.mxu0 0.0
        %1191 = vmatprep.mubr.f32.mxu0 0.0
        %1192 = vmatmul.mubr.f32.gmra.mxu0 %v1123
        %v1193 = vpop.f32.mrf.mxu0
        %v1194 = vadd.f32 %v646, %v1193
        %v1195 = vpop.f32.mrf.mxu0
        %v1196 = vadd.f32 %v650, %v1195
        %1197 = vdwg.mxu0
        %v1198 = vadd.f32 %v1123, %v1126
        %v1199 = vmul.f32 %v1123, %v1126
        %v1200 = vmul.f32 %v1194, %v1123
        %v1201 = vmul.f32 %v1194, %v1126
        %v1202 = vmul.f32 %v1194, %v1198
        %v1203 = vmul.f32 %v1194, %v1199
        %1204 = vmatprep.subr.mxu0 0.0
        %1205 = vmatpush1.msra.mxu0 %v588
        %1206 = vmatprep.subr.mxu0 0.0
        %1207 = vmatpush1.msra.mxu0 %v587
        %1208 = vmatprep.subr.mxu0 0.0
        %1209 = vmatpush1.msra.mxu0 %v586
        %1210 = vmatprep.subr.mxu0 0.0
        %1211 = vmatpush1.msra.mxu0 %v585
        %1212 = vmatprep.subr.mxu0 0.0
        %1213 = vmatpush1.msra.mxu0 %v584
        %1214 = vmatprep.subr.mxu0 0.0
        %1215 = vmatpush1.msra.mxu0 %v583
        %1216 = vmatprep.subr.mxu0 0.0
        %1217 = vmatpush1.msra.mxu0 %v582
        %1218 = vmatprep.subr.mxu0 0.0
        %1219 = vmatpush1.msra.mxu0 %v581
        %1220 = vmatprep.subr.mxu0 0.0
        %1221 = vmatpush1.msra.mxu0 %v580
        %1222 = vmatprep.subr.mxu0 0.0
        %1223 = vmatpush1.msra.mxu0 %v579
        %1224 = vmatprep.subr.mxu0 0.0
        %1225 = vmatpush1.msra.mxu0 %v578
        %1226 = vmatprep.subr.mxu0 0.0
        %1227 = vmatpush1.msra.mxu0 %v577
        %1228 = vmatprep.subr.mxu0 0.0
        %1229 = vmatpush1.msra.mxu0 %v576
        %1230 = vmatprep.subr.mxu0 0.0
        %1231 = vmatpush1.msra.mxu0 %v575
        %1232 = vmatprep.subr.mxu0 0.0
        %1233 = vmatpush1.msra.mxu0 %v574
        %1234 = vmatprep.subr.mxu0 0.0
        %1235 = vmatpush1.msra.mxu0 %v573
        %1236 = vmatprep.subr.mxu0 0.0
        %1237 = vmatpush2.msra.mxu0 0.0
        %1238 = vmatprep.subr.mxu0 0.0
        %1239 = vmatpush2.msra.mxu0 0.0
        %1240 = vmatprep.subr.mxu0 0.0
        %1241 = vmatpush2.msra.mxu0 0.0
        %1242 = vmatprep.subr.mxu0 0.0
        %1243 = vmatpush2.msra.mxu0 0.0
        %1244 = vmatprep.subr.mxu0 0.0
        %1245 = vmatpush2.msra.mxu0 0.0
        %1246 = vmatprep.subr.mxu0 0.0
        %1247 = vmatpush2.msra.mxu0 0.0
        %1248 = vmatprep.subr.mxu0 0.0
        %1249 = vmatpush2.msra.mxu0 0.0
        %1250 = vmatprep.subr.mxu0 0.0
        %1251 = vmatpush2.msra.mxu0 0.0
        %1252 = vmatprep.subr.mxu0 0.0
        %1253 = vmatpush2.msra.mxu0 0.0
        %1254 = vmatprep.subr.mxu0 0.0
        %1255 = vmatpush2.msra.mxu0 0.0
        %1256 = vmatprep.subr.mxu0 0.0
        %1257 = vmatpush2.msra.mxu0 0.0
        %1258 = vmatprep.subr.mxu0 0.0
        %1259 = vmatpush2.msra.mxu0 0.0
        %1260 = vmatprep.subr.mxu0 0.0
        %1261 = vmatpush2.msra.mxu0 0.0
        %1262 = vmatprep.subr.mxu0 0.0
        %1263 = vmatpush2.msra.mxu0 0.0
        %1264 = vmatprep.subr.mxu0 0.0
        %1265 = vmatpush2.msra.mxu0 0.0
        %1266 = vmatprep.subr.mxu0 0.0
        %1267 = vmatpush2.msra.mxu0 0.0
        %1268 = vmatprep.mubr.f32.mxu0 0.0
        %1269 = vmatmul.mubr.f32.gmra.mxu0 %v1200
        %v1270 = vpop.f32.mrf.mxu0
        %v1271 = vadd.f32 0.0, %v1270
        %v1272 = vpop.f32.mrf.mxu0
        %1273 = vmatprep.mubr.f32.mxu0 0.0
        %1274 = vmatmul.mubr.f32.gmra.mxu0 %v1201
        %v1275 = vpop.f32.mrf.mxu0
        %v1276 = vadd.f32 0.0, %v1275
        %v1277 = vpop.f32.mrf.mxu0
        %1278 = vmatprep.mubr.f32.mxu0 0.0
        %1279 = vmatmul.mubr.f32.gmra.mxu0 %v1202
        %v1280 = vpop.f32.mrf.mxu0
        %v1281 = vadd.f32 0.0, %v1280
        %v1282 = vpop.f32.mrf.mxu0
        %1283 = vmatprep.mubr.f32.mxu0 0.0
        %1284 = vmatmul.mubr.f32.gmra.mxu0 %v1203
        %v1285 = vpop.f32.mrf.mxu0
        %v1286 = vadd.f32 0.0, %v1285
        %v1287 = vpop.f32.mrf.mxu0
        %1288 = vdwg.mxu0
        %v1289 = vmax.f32 %v1271, %v1276
        %v1290 = vmax.f32 %v1281, %v1286
        %v1291 = vmax.f32 %v1289, %v1290
        %v1292 = vsub.f32 %v1271, %v1291
        %v1293 = vsub.f32 %v1276, %v1291
        %v1294 = vsub.f32 %v1281, %v1291
        %v1295 = vsub.f32 %v1286, %v1291
        %v1296 = vmul.f32 %v1292, 1.442695
        %v1297 = vpow.pop %v1296
        %v1298 = vmul.f32 %v1293, 1.442695
        %v1299 = vpow.pop %v1298
        %v1300 = vmul.f32 %v1294, 1.442695
        %v1301 = vpow.pop %v1300
        %v1302 = vmul.f32 %v1295, 1.442695
        %v1303 = vpow.pop %v1302
        %v1304 = vadd.f32 %v1297, %v1299
        %v1305 = vadd.f32 %v1304, %v1301
        %v1306 = vadd.f32 %v1305, %v1303
        %v1307 = vrcp.pop %v1306
        %v1308 = vmul.f32 1.0, %v1307
        %v1309 = vmul.f32 %v1297, %v1308
        %v1310 = vmul.f32 %v1299, %v1308
        %v1311 = vmul.f32 %v1301, %v1308
        %v1312 = vmul.f32 %v1303, %v1308
        %1313 = vmatprep.subr.mxu0 0.0
        %1314 = vmatpush1.msra.mxu0 %v604
        %1315 = vmatprep.subr.mxu0 0.0
        %1316 = vmatpush1.msra.mxu0 %v603
        %1317 = vmatprep.subr.mxu0 0.0
        %1318 = vmatpush1.msra.mxu0 %v602
        %1319 = vmatprep.subr.mxu0 0.0
        %1320 = vmatpush1.msra.mxu0 %v601
        %1321 = vmatprep.subr.mxu0 0.0
        %1322 = vmatpush1.msra.mxu0 %v600
        %1323 = vmatprep.subr.mxu0 0.0
        %1324 = vmatpush1.msra.mxu0 %v599
        %1325 = vmatprep.subr.mxu0 0.0
        %1326 = vmatpush1.msra.mxu0 %v598
        %1327 = vmatprep.subr.mxu0 0.0
        %1328 = vmatpush1.msra.mxu0 %v597
        %1329 = vmatprep.subr.mxu0 0.0
        %1330 = vmatpush1.msra.mxu0 %v596
        %1331 = vmatprep.subr.mxu0 0.0
        %1332 = vmatpush1.msra.mxu0 %v595
        %1333 = vmatprep.subr.mxu0 0.0
        %1334 = vmatpush1.msra.mxu0 %v594
        %1335 = vmatprep.subr.mxu0 0.0
        %1336 = vmatpush1.msra.mxu0 %v593
        %1337 = vmatprep.subr.mxu0 0.0
        %1338 = vmatpush1.msra.mxu0 %v592
        %1339 = vmatprep.subr.mxu0 0.0
        %1340 = vmatpush1.msra.mxu0 %v591
        %1341 = vmatprep.subr.mxu0 0.0
        %1342 = vmatpush1.msra.mxu0 %v590
        %1343 = vmatprep.subr.mxu0 0.0
        %1344 = vmatpush1.msra.mxu0 %v589
        %1345 = vmatprep.subr.mxu0 0.0
        %1346 = vmatpush2.msra.mxu0 0.0
        %1347 = vmatprep.subr.mxu0 0.0
        %1348 = vmatpush2.msra.mxu0 0.0
        %1349 = vmatprep.subr.mxu0 0.0
        %1350 = vmatpush2.msra.mxu0 0.0
        %1351 = vmatprep.subr.mxu0 0.0
        %1352 = vmatpush2.msra.mxu0 0.0
        %1353 = vmatprep.subr.mxu0 0.0
        %1354 = vmatpush2.msra.mxu0 0.0
        %1355 = vmatprep.subr.mxu0 0.0
        %1356 = vmatpush2.msra.mxu0 0.0
        %1357 = vmatprep.subr.mxu0 0.0
        %1358 = vmatpush2.msra.mxu0 0.0
        %1359 = vmatprep.subr.mxu0 0.0
        %1360 = vmatpush2.msra.mxu0 0.0
        %1361 = vmatprep.subr.mxu0 0.0
        %1362 = vmatpush2.msra.mxu0 0.0
        %1363 = vmatprep.subr.mxu0 0.0
        %1364 = vmatpush2.msra.mxu0 0.0
        %1365 = vmatprep.subr.mxu0 0.0
        %1366 = vmatpush2.msra.mxu0 0.0
        %1367 = vmatprep.subr.mxu0 0.0
        %1368 = vmatpush2.msra.mxu0 0.0
        %1369 = vmatprep.subr.mxu0 0.0
        %1370 = vmatpush2.msra.mxu0 0.0
        %1371 = vmatprep.subr.mxu0 0.0
        %1372 = vmatpush2.msra.mxu0 0.0
        %1373 = vmatprep.subr.mxu0 0.0
        %1374 = vmatpush2.msra.mxu0 0.0
        %1375 = vmatprep.subr.mxu0 0.0
        %1376 = vmatpush2.msra.mxu0 0.0
        %1377 = vmatprep.mubr.f32.mxu0 0.0
        %1378 = vmatmul.mubr.f32.gmra.mxu0 %v1309
        %v1379 = vpop.f32.mrf.mxu0
        %v1380 = vadd.f32 0.0, %v1379
        %v1381 = vpop.f32.mrf.mxu0
        %1382 = vmatprep.mubr.f32.mxu0 0.0
        %1383 = vmatmul.mubr.f32.gmra.mxu0 %v1310
        %v1384 = vpop.f32.mrf.mxu0
        %v1385 = vadd.f32 0.0, %v1384
        %v1386 = vpop.f32.mrf.mxu0
        %1387 = vmatprep.mubr.f32.mxu0 0.0
        %1388 = vmatmul.mubr.f32.gmra.mxu0 %v1311
        %v1389 = vpop.f32.mrf.mxu0
        %v1390 = vadd.f32 0.0, %v1389
        %v1391 = vpop.f32.mrf.mxu0
        %1392 = vmatprep.mubr.f32.mxu0 0.0
        %1393 = vmatmul.mubr.f32.gmra.mxu0 %v1312
        %v1394 = vpop.f32.mrf.mxu0
        %v1395 = vadd.f32 0.0, %v1394
        %v1396 = vpop.f32.mrf.mxu0
        %1397 = vdwg.mxu0
        %v1398 = vmul.f32 %v1380, %v1123
        %v1399 = vmul.f32 %v1385, %v1126
        %v1400 = vmul.f32 %v1390, %v1198
        %v1401 = vmul.f32 %v1395, %v1199
        %v1402 = vadd.f32 %v1398, %v1399
        %v1403 = vadd.f32 %v1402, %v1400
        %v1404 = vadd.f32 %v1403, %v1401
        %1405 = vmatprep.subr.mxu0 0.0
        %1406 = vmatpush1.msra.mxu0 %v620
        %1407 = vmatprep.subr.mxu0 0.0
        %1408 = vmatpush1.msra.mxu0 %v619
        %1409 = vmatprep.subr.mxu0 0.0
        %1410 = vmatpush1.msra.mxu0 %v618
        %1411 = vmatprep.subr.mxu0 0.0
        %1412 = vmatpush1.msra.mxu0 %v617
        %1413 = vmatprep.subr.mxu0 0.0
        %1414 = vmatpush1.msra.mxu0 %v616
        %1415 = vmatprep.subr.mxu0 0.0
        %1416 = vmatpush1.msra.mxu0 %v615
        %1417 = vmatprep.subr.mxu0 0.0
        %1418 = vmatpush1.msra.mxu0 %v614
        %1419 = vmatprep.subr.mxu0 0.0
        %1420 = vmatpush1.msra.mxu0 %v613
        %1421 = vmatprep.subr.mxu0 0.0
        %1422 = vmatpush1.msra.mxu0 %v612
        %1423 = vmatprep.subr.mxu0 0.0
        %1424 = vmatpush1.msra.mxu0 %v611
        %1425 = vmatprep.subr.mxu0 0.0
        %1426 = vmatpush1.msra.mxu0 %v610
        %1427 = vmatprep.subr.mxu0 0.0
        %1428 = vmatpush1.msra.mxu0 %v609
        %1429 = vmatprep.subr.mxu0 0.0
        %1430 = vmatpush1.msra.mxu0 %v608
        %1431 = vmatprep.subr.mxu0 0.0
        %1432 = vmatpush1.msra.mxu0 %v607
        %1433 = vmatprep.subr.mxu0 0.0
        %1434 = vmatpush1.msra.mxu0 %v606
        %1435 = vmatprep.subr.mxu0 0.0
        %1436 = vmatpush1.msra.mxu0 %v605
        %1437 = vmatprep.subr.mxu0 0.0
        %1438 = vmatpush2.msra.mxu0 0.0
        %1439 = vmatprep.subr.mxu0 0.0
        %1440 = vmatpush2.msra.mxu0 0.0
        %1441 = vmatprep.subr.mxu0 0.0
        %1442 = vmatpush2.msra.mxu0 0.0
        %1443 = vmatprep.subr.mxu0 0.0
        %1444 = vmatpush2.msra.mxu0 0.0
        %1445 = vmatprep.subr.mxu0 0.0
        %1446 = vmatpush2.msra.mxu0 0.0
        %1447 = vmatprep.subr.mxu0 0.0
        %1448 = vmatpush2.msra.mxu0 0.0
        %1449 = vmatprep.subr.mxu0 0.0
        %1450 = vmatpush2.msra.mxu0 0.0
        %1451 = vmatprep.subr.mxu0 0.0
        %1452 = vmatpush2.msra.mxu0 0.0
        %1453 = vmatprep.subr.mxu0 0.0
        %1454 = vmatpush2.msra.mxu0 0.0
        %1455 = vmatprep.subr.mxu0 0.0
        %1456 = vmatpush2.msra.mxu0 0.0
        %1457 = vmatprep.subr.mxu0 0.0
        %1458 = vmatpush2.msra.mxu0 0.0
        %1459 = vmatprep.subr.mxu0 0.0
        %1460 = vmatpush2.msra.mxu0 0.0
        %1461 = vmatprep.subr.mxu0 0.0
        %1462 = vmatpush2.msra.mxu0 0.0
        %1463 = vmatprep.subr.mxu0 0.0
        %1464 = vmatpush2.msra.mxu0 0.0
        %1465 = vmatprep.subr.mxu0 0.0
        %1466 = vmatpush2.msra.mxu0 0.0
        %1467 = vmatprep.subr.mxu0 0.0
        %1468 = vmatpush2.msra.mxu0 0.0
        %1469 = vmatprep.mubr.f32.mxu0 0.0
        %1470 = vmatmul.mubr.f32.gmra.mxu0 %v1404
        %v1471 = vpop.f32.mrf.mxu0
        %v1472 = vadd.f32 %v935, %v1471
        %v1473 = vpop.f32.mrf.mxu0
        %1474 = vdwg.mxu0
        %v1475 = vmul.f32 %v1472, 0.5
        %v1476 = vmul.f32 %v1472, 0.044715
        %v1477 = vmul.f32 %v1476, %v1472
        %v1478 = vmul.f32 %v1477, %v1472
        %v1479 = vadd.f32 %v1472, %v1478
        %v1480 = vmul.f32 %v1479, 0.7978846
        %v1481 = vtanh.pop %v1480
        %v1482 = vadd.f32 %v1481, 1.0
        %v1483 = vmul.f32 %v1475, %v1482
        %1484 = vmatprep.subr.mxu0 0.0
        %1485 = vmatpush1.msra.mxu0 %v637
        %1486 = vmatprep.subr.mxu0 0.0
        %1487 = vmatpush1.msra.mxu0 %v636
        %1488 = vmatprep.subr.mxu0 0.0
        %1489 = vmatpush1.msra.mxu0 %v635
        %1490 = vmatprep.subr.mxu0 0.0
        %1491 = vmatpush1.msra.mxu0 %v634
        %1492 = vmatprep.subr.mxu0 0.0
        %1493 = vmatpush1.msra.mxu0 %v633
        %1494 = vmatprep.subr.mxu0 0.0
        %1495 = vmatpush1.msra.mxu0 %v632
        %1496 = vmatprep.subr.mxu0 0.0
        %1497 = vmatpush1.msra.mxu0 %v631
        %1498 = vmatprep.subr.mxu0 0.0
        %1499 = vmatpush1.msra.mxu0 %v630
        %1500 = vmatprep.subr.mxu0 0.0
        %1501 = vmatpush1.msra.mxu0 %v629
        %1502 = vmatprep.subr.mxu0 0.0
        %1503 = vmatpush1.msra.mxu0 %v628
        %1504 = vmatprep.subr.mxu0 0.0
        %1505 = vmatpush1.msra.mxu0 %v627
        %1506 = vmatprep.subr.mxu0 0.0
        %1507 = vmatpush1.msra.mxu0 %v626
        %1508 = vmatprep.subr.mxu0 0.0
        %1509 = vmatpush1.msra.mxu0 %v625
        %1510 = vmatprep.subr.mxu0 0.0
        %1511 = vmatpush1.msra.mxu0 %v624
        %1512 = vmatprep.subr.mxu0 0.0
        %1513 = vmatpush1.msra.mxu0 %v623
        %1514 = vmatprep.subr.mxu0 0.0
        %1515 = vmatpush1.msra.mxu0 %v622
        %1516 = vmatprep.subr.mxu0 0.0
        %1517 = vmatpush2.msra.mxu0 0.0
        %1518 = vmatprep.subr.mxu0 0.0
        %1519 = vmatpush2.msra.mxu0 0.0
        %1520 = vmatprep.subr.mxu0 0.0
        %1521 = vmatpush2.msra.mxu0 0.0
        %1522 = vmatprep.subr.mxu0 0.0
        %1523 = vmatpush2.msra.mxu0 0.0
        %1524 = vmatprep.subr.mxu0 0.0
        %1525 = vmatpush2.msra.mxu0 0.0
        %1526 = vmatprep.subr.mxu0 0.0
        %1527 = vmatpush2.msra.mxu0 0.0
        %1528 = vmatprep.subr.mxu0 0.0
        %1529 = vmatpush2.msra.mxu0 0.0
        %1530 = vmatprep.subr.mxu0 0.0
        %1531 = vmatpush2.msra.mxu0 0.0
        %1532 = vmatprep.subr.mxu0 0.0
        %1533 = vmatpush2.msra.mxu0 0.0
        %1534 = vmatprep.subr.mxu0 0.0
        %1535 = vmatpush2.msra.mxu0 0.0
        %1536 = vmatprep.subr.mxu0 0.0
        %1537 = vmatpush2.msra.mxu0 0.0
        %1538 = vmatprep.subr.mxu0 0.0
        %1539 = vmatpush2.msra.mxu0 0.0
        %1540 = vmatprep.subr.mxu0 0.0
        %1541 = vmatpush2.msra.mxu0 0.0
        %1542 = vmatprep.subr.mxu0 0.0
        %1543 = vmatpush2.msra.mxu0 0.0
        %1544 = vmatprep.subr.mxu0 0.0
        %1545 = vmatpush2.msra.mxu0 0.0
        %1546 = vmatprep.subr.mxu0 0.0
        %1547 = vmatpush2.msra.mxu0 0.0
        %1548 = vmatprep.mubr.f32.mxu0 0.0
        %1549 = vmatmul.mubr.f32.gmra.mxu0 %v1483
        %v1550 = vpop.f32.mrf.mxu0
        %v1551 = vadd.f32 0.0, %v1550
        %v1552 = vpop.f32.mrf.mxu0
        %1553 = vdwg.mxu0
        %v1554 = vadd.f32 %v1196, %v1551
        %v1555 = vxor.u32 %v1554, 2147483648
        %v1556 = vmul.f32 %v1555, 1.442695
        %v1557 = vpow.pop %v1556
        %v1558 = vadd.f32 %v1557, 1.0
        %v1559 = vrcp.pop %v1558
        %v1560 = vmul.f32 1.0, %v1559
        %v1561 = vadd.f32 %v1483, %v1123
        %1562 = vadd.xlane.f32.xlu0 %v1561
        %v1563 = vpop.xlane.xlu0 %1562
        %v1564 = vmul.f32 %v1563, %v1096
        %v1565 = vsub.f32 %v1561, %v1564
        %v1566 = vmul.f32 %v1565, %v1565
        %1567 = vadd.xlane.f32.xlu0 %v1566
        %v1568 = vpop.xlane.xlu0 %1567
        %v1569 = vmul.f32 %v1568, %v1096
        %v1570 = vadd.f32 %v1569, 1e-05
        %v1571 = vrsqrt.pop %v1570
        %v1572 = vmul.f32 %v1565, %v1571
        %v1573 = vmul.f32 %v1572, %v1110
        %v1574 = vadd.f32 %v1573, %v1117
        %v1575 = vmul.f32 %v1560, %v1574
        %v1576 = vsub.f32 1.0, %v1560
        %v1577 = vmul.f32 %v1576, %v1123
        %v1578 = vadd.f32 %v1575, %v1577
        %s1579 = scalar_lea.vmem %s531, 8 [#allocation15]
        %1580 = vst [vmem:[%s1579] sm:$0xff] %v1578
        %s1581 = scalar_lea.vmem %s459, 16 [#allocation3]
        %v1582 = vld [vmem:[%s1581] sm:$0xff]
        %1583 = vmatprep.subr.mxu0 %v571
        %1584 = vmatpush1.msra.mxu0 %v570
        %1585 = vmatprep.subr.mxu0 %v569
        %1586 = vmatpush1.msra.mxu0 %v568
        %1587 = vmatprep.subr.mxu0 %v567
        %1588 = vmatpush1.msra.mxu0 %v566
        %1589 = vmatprep.subr.mxu0 %v565
        %1590 = vmatpush1.msra.mxu0 %v564
        %1591 = vmatprep.subr.mxu0 %v563
        %1592 = vmatpush1.msra.mxu0 %v562
        %1593 = vmatprep.subr.mxu0 %v561
        %1594 = vmatpush1.msra.mxu0 %v560
        %1595 = vmatprep.subr.mxu0 %v559
        %1596 = vmatpush1.msra.mxu0 %v558
        %1597 = vmatprep.subr.mxu0 %v557
        %1598 = vmatpush1.msra.mxu0 %v556
        %1599 = vmatprep.subr.mxu0 %v555
        %1600 = vmatpush1.msra.mxu0 %v554
        %1601 = vmatprep.subr.mxu0 %v553
        %1602 = vmatpush1.msra.mxu0 %v552
        %1603 = vmatprep.subr.mxu0 %v551
        %1604 = vmatpush1.msra.mxu0 %v550
        %1605 = vmatprep.subr.mxu0 %v549
        %1606 = vmatpush1.msra.mxu0 %v548
        %1607 = vmatprep.subr.mxu0 %v547
        %1608 = vmatpush1.msra.mxu0 %v546
        %1609 = vmatprep.subr.mxu0 %v545
        %1610 = vmatpush1.msra.mxu0 %v544
        %1611 = vmatprep.subr.mxu0 %v543
        %1612 = vmatpush1.msra.mxu0 %v542
        %1613 = vmatprep.subr.mxu0 %v541
        %1614 = vmatpush1.msra.mxu0 %v540
        %1615 = vmatprep.subr.mxu0 0.0
        %1616 = vmatpush2.msra.mxu0 0.0
        %1617 = vmatprep.subr.mxu0 0.0
        %1618 = vmatpush2.msra.mxu0 0.0
        %1619 = vmatprep.subr.mxu0 0.0
        %1620 = vmatpush2.msra.mxu0 0.0
        %1621 = vmatprep.subr.mxu0 0.0
        %1622 = vmatpush2.msra.mxu0 0.0
        %1623 = vmatprep.subr.mxu0 0.0
        %1624 = vmatpush2.msra.mxu0 0.0
        %1625 = vmatprep.subr.mxu0 0.0
        %1626 = vmatpush2.msra.mxu0 0.0
        %1627 = vmatprep.subr.mxu0 0.0
        %1628 = vmatpush2.msra.mxu0 0.0
        %1629 = vmatprep.subr.mxu0 0.0
        %1630 = vmatpush2.msra.mxu0 0.0
        %1631 = vmatprep.subr.mxu0 0.0
        %1632 = vmatpush2.msra.mxu0 0.0
        %1633 = vmatprep.subr.mxu0 0.0
        %1634 = vmatpush2.msra.mxu0 0.0
        %1635 = vmatprep.subr.mxu0 0.0
        %1636 = vmatpush2.msra.mxu0 0.0
        %1637 = vmatprep.subr.mxu0 0.0
        %1638 = vmatpush2.msra.mxu0 0.0
        %1639 = vmatprep.subr.mxu0 0.0
        %1640 = vmatpush2.msra.mxu0 0.0
        %1641 = vmatprep.subr.mxu0 0.0
        %1642 = vmatpush2.msra.mxu0 0.0
        %1643 = vmatprep.subr.mxu0 0.0
        %1644 = vmatpush2.msra.mxu0 0.0
        %1645 = vmatprep.subr.mxu0 0.0
        %1646 = vmatpush2.msra.mxu0 0.0
        %1647 = vmatprep.mubr.f32.mxu0 0.0
        %1648 = vmatmul.mubr.f32.gmra.mxu0 %v1578
        %v1649 = vpop.f32.mrf.mxu0
        %v1650 = vadd.f32 %v646, %v1649
        %v1651 = vpop.f32.mrf.mxu0
        %v1652 = vadd.f32 %v650, %v1651
        %1653 = vdwg.mxu0
        %v1654 = vadd.f32 %v1578, %v1582
        %v1655 = vmul.f32 %v1578, %v1582
        %v1656 = vmul.f32 %v1650, %v1578
        %v1657 = vmul.f32 %v1650, %v1582
        %v1658 = vmul.f32 %v1650, %v1654
        %v1659 = vmul.f32 %v1650, %v1655
        %1660 = vmatprep.subr.mxu0 0.0
        %1661 = vmatpush1.msra.mxu0 %v588
        %1662 = vmatprep.subr.mxu0 0.0
        %1663 = vmatpush1.msra.mxu0 %v587
        %1664 = vmatprep.subr.mxu0 0.0
        %1665 = vmatpush1.msra.mxu0 %v586
        %1666 = vmatprep.subr.mxu0 0.0
        %1667 = vmatpush1.msra.mxu0 %v585
        %1668 = vmatprep.subr.mxu0 0.0
        %1669 = vmatpush1.msra.mxu0 %v584
        %1670 = vmatprep.subr.mxu0 0.0
        %1671 = vmatpush1.msra.mxu0 %v583
        %1672 = vmatprep.subr.mxu0 0.0
        %1673 = vmatpush1.msra.mxu0 %v582
        %1674 = vmatprep.subr.mxu0 0.0
        %1675 = vmatpush1.msra.mxu0 %v581
        %1676 = vmatprep.subr.mxu0 0.0
        %1677 = vmatpush1.msra.mxu0 %v580
        %1678 = vmatprep.subr.mxu0 0.0
        %1679 = vmatpush1.msra.mxu0 %v579
        %1680 = vmatprep.subr.mxu0 0.0
        %1681 = vmatpush1.msra.mxu0 %v578
        %1682 = vmatprep.subr.mxu0 0.0
        %1683 = vmatpush1.msra.mxu0 %v577
        %1684 = vmatprep.subr.mxu0 0.0
        %1685 = vmatpush1.msra.mxu0 %v576
        %1686 = vmatprep.subr.mxu0 0.0
        %1687 = vmatpush1.msra.mxu0 %v575
        %1688 = vmatprep.subr.mxu0 0.0
        %1689 = vmatpush1.msra.mxu0 %v574
        %1690 = vmatprep.subr.mxu0 0.0
        %1691 = vmatpush1.msra.mxu0 %v573
        %1692 = vmatprep.subr.mxu0 0.0
        %1693 = vmatpush2.msra.mxu0 0.0
        %1694 = vmatprep.subr.mxu0 0.0
        %1695 = vmatpush2.msra.mxu0 0.0
        %1696 = vmatprep.subr.mxu0 0.0
        %1697 = vmatpush2.msra.mxu0 0.0
        %1698 = vmatprep.subr.mxu0 0.0
        %1699 = vmatpush2.msra.mxu0 0.0
        %1700 = vmatprep.subr.mxu0 0.0
        %1701 = vmatpush2.msra.mxu0 0.0
        %1702 = vmatprep.subr.mxu0 0.0
        %1703 = vmatpush2.msra.mxu0 0.0
        %1704 = vmatprep.subr.mxu0 0.0
        %1705 = vmatpush2.msra.mxu0 0.0
        %1706 = vmatprep.subr.mxu0 0.0
        %1707 = vmatpush2.msra.mxu0 0.0
        %1708 = vmatprep.subr.mxu0 0.0
        %1709 = vmatpush2.msra.mxu0 0.0
        %1710 = vmatprep.subr.mxu0 0.0
        %1711 = vmatpush2.msra.mxu0 0.0
        %1712 = vmatprep.subr.mxu0 0.0
        %1713 = vmatpush2.msra.mxu0 0.0
        %1714 = vmatprep.subr.mxu0 0.0
        %1715 = vmatpush2.msra.mxu0 0.0
        %1716 = vmatprep.subr.mxu0 0.0
        %1717 = vmatpush2.msra.mxu0 0.0
        %1718 = vmatprep.subr.mxu0 0.0
        %1719 = vmatpush2.msra.mxu0 0.0
        %1720 = vmatprep.subr.mxu0 0.0
        %1721 = vmatpush2.msra.mxu0 0.0
        %1722 = vmatprep.subr.mxu0 0.0
        %1723 = vmatpush2.msra.mxu0 0.0
        %1724 = vmatprep.mubr.f32.mxu0 0.0
        %1725 = vmatmul.mubr.f32.gmra.mxu0 %v1656
        %v1726 = vpop.f32.mrf.mxu0
        %v1727 = vadd.f32 0.0, %v1726
        %v1728 = vpop.f32.mrf.mxu0
        %1729 = vmatprep.mubr.f32.mxu0 0.0
        %1730 = vmatmul.mubr.f32.gmra.mxu0 %v1657
        %v1731 = vpop.f32.mrf.mxu0
        %v1732 = vadd.f32 0.0, %v1731
        %v1733 = vpop.f32.mrf.mxu0
        %1734 = vmatprep.mubr.f32.mxu0 0.0
        %1735 = vmatmul.mubr.f32.gmra.mxu0 %v1658
        %v1736 = vpop.f32.mrf.mxu0
        %v1737 = vadd.f32 0.0, %v1736
        %v1738 = vpop.f32.mrf.mxu0
        %1739 = vmatprep.mubr.f32.mxu0 0.0
        %1740 = vmatmul.mubr.f32.gmra.mxu0 %v1659
        %v1741 = vpop.f32.mrf.mxu0
        %v1742 = vadd.f32 0.0, %v1741
        %v1743 = vpop.f32.mrf.mxu0
        %1744 = vdwg.mxu0
        %v1745 = vmax.f32 %v1727, %v1732
        %v1746 = vmax.f32 %v1737, %v1742
        %v1747 = vmax.f32 %v1745, %v1746
        %v1748 = vsub.f32 %v1727, %v1747
        %v1749 = vsub.f32 %v1732, %v1747
        %v1750 = vsub.f32 %v1737, %v1747
        %v1751 = vsub.f32 %v1742, %v1747
        %v1752 = vmul.f32 %v1748, 1.442695
        %v1753 = vpow.pop %v1752
        %v1754 = vmul.f32 %v1749, 1.442695
        %v1755 = vpow.pop %v1754
        %v1756 = vmul.f32 %v1750, 1.442695
        %v1757 = vpow.pop %v1756
        %v1758 = vmul.f32 %v1751, 1.442695
        %v1759 = vpow.pop %v1758
        %v1760 = vadd.f32 %v1753, %v1755
        %v1761 = vadd.f32 %v1760, %v1757
        %v1762 = vadd.f32 %v1761, %v1759
        %v1763 = vrcp.pop %v1762
        %v1764 = vmul.f32 1.0, %v1763
        %v1765 = vmul.f32 %v1753, %v1764
        %v1766 = vmul.f32 %v1755, %v1764
        %v1767 = vmul.f32 %v1757, %v1764
        %v1768 = vmul.f32 %v1759, %v1764
        %1769 = vmatprep.subr.mxu0 0.0
        %1770 = vmatpush1.msra.mxu0 %v604
        %1771 = vmatprep.subr.mxu0 0.0
        %1772 = vmatpush1.msra.mxu0 %v603
        %1773 = vmatprep.subr.mxu0 0.0
        %1774 = vmatpush1.msra.mxu0 %v602
        %1775 = vmatprep.subr.mxu0 0.0
        %1776 = vmatpush1.msra.mxu0 %v601
        %1777 = vmatprep.subr.mxu0 0.0
        %1778 = vmatpush1.msra.mxu0 %v600
        %1779 = vmatprep.subr.mxu0 0.0
        %1780 = vmatpush1.msra.mxu0 %v599
        %1781 = vmatprep.subr.mxu0 0.0
        %1782 = vmatpush1.msra.mxu0 %v598
        %1783 = vmatprep.subr.mxu0 0.0
        %1784 = vmatpush1.msra.mxu0 %v597
        %1785 = vmatprep.subr.mxu0 0.0
        %1786 = vmatpush1.msra.mxu0 %v596
        %1787 = vmatprep.subr.mxu0 0.0
        %1788 = vmatpush1.msra.mxu0 %v595
        %1789 = vmatprep.subr.mxu0 0.0
        %1790 = vmatpush1.msra.mxu0 %v594
        %1791 = vmatprep.subr.mxu0 0.0
        %1792 = vmatpush1.msra.mxu0 %v593
        %1793 = vmatprep.subr.mxu0 0.0
        %1794 = vmatpush1.msra.mxu0 %v592
        %1795 = vmatprep.subr.mxu0 0.0
        %1796 = vmatpush1.msra.mxu0 %v591
        %1797 = vmatprep.subr.mxu0 0.0
        %1798 = vmatpush1.msra.mxu0 %v590
        %1799 = vmatprep.subr.mxu0 0.0
        %1800 = vmatpush1.msra.mxu0 %v589
        %1801 = vmatprep.subr.mxu0 0.0
        %1802 = vmatpush2.msra.mxu0 0.0
        %1803 = vmatprep.subr.mxu0 0.0
        %1804 = vmatpush2.msra.mxu0 0.0
        %1805 = vmatprep.subr.mxu0 0.0
        %1806 = vmatpush2.msra.mxu0 0.0
        %1807 = vmatprep.subr.mxu0 0.0
        %1808 = vmatpush2.msra.mxu0 0.0
        %1809 = vmatprep.subr.mxu0 0.0
        %1810 = vmatpush2.msra.mxu0 0.0
        %1811 = vmatprep.subr.mxu0 0.0
        %1812 = vmatpush2.msra.mxu0 0.0
        %1813 = vmatprep.subr.mxu0 0.0
        %1814 = vmatpush2.msra.mxu0 0.0
        %1815 = vmatprep.subr.mxu0 0.0
        %1816 = vmatpush2.msra.mxu0 0.0
        %1817 = vmatprep.subr.mxu0 0.0
        %1818 = vmatpush2.msra.mxu0 0.0
        %1819 = vmatprep.subr.mxu0 0.0
        %1820 = vmatpush2.msra.mxu0 0.0
        %1821 = vmatprep.subr.mxu0 0.0
        %1822 = vmatpush2.msra.mxu0 0.0
        %1823 = vmatprep.subr.mxu0 0.0
        %1824 = vmatpush2.msra.mxu0 0.0
        %1825 = vmatprep.subr.mxu0 0.0
        %1826 = vmatpush2.msra.mxu0 0.0
        %1827 = vmatprep.subr.mxu0 0.0
        %1828 = vmatpush2.msra.mxu0 0.0
        %1829 = vmatprep.subr.mxu0 0.0
        %1830 = vmatpush2.msra.mxu0 0.0
        %1831 = vmatprep.subr.mxu0 0.0
        %1832 = vmatpush2.msra.mxu0 0.0
        %1833 = vmatprep.mubr.f32.mxu0 0.0
        %1834 = vmatmul.mubr.f32.gmra.mxu0 %v1765
        %v1835 = vpop.f32.mrf.mxu0
        %v1836 = vadd.f32 0.0, %v1835
        %v1837 = vpop.f32.mrf.mxu0
        %1838 = vmatprep.mubr.f32.mxu0 0.0
        %1839 = vmatmul.mubr.f32.gmra.mxu0 %v1766
        %v1840 = vpop.f32.mrf.mxu0
        %v1841 = vadd.f32 0.0, %v1840
        %v1842 = vpop.f32.mrf.mxu0
        %1843 = vmatprep.mubr.f32.mxu0 0.0
        %1844 = vmatmul.mubr.f32.gmra.mxu0 %v1767
        %v1845 = vpop.f32.mrf.mxu0
        %v1846 = vadd.f32 0.0, %v1845
        %v1847 = vpop.f32.mrf.mxu0
        %1848 = vmatprep.mubr.f32.mxu0 0.0
        %1849 = vmatmul.mubr.f32.gmra.mxu0 %v1768
        %v1850 = vpop.f32.mrf.mxu0
        %v1851 = vadd.f32 0.0, %v1850
        %v1852 = vpop.f32.mrf.mxu0
        %1853 = vdwg.mxu0
        %v1854 = vmul.f32 %v1836, %v1578
        %v1855 = vmul.f32 %v1841, %v1582
        %v1856 = vmul.f32 %v1846, %v1654
        %v1857 = vmul.f32 %v1851, %v1655
        %v1858 = vadd.f32 %v1854, %v1855
        %v1859 = vadd.f32 %v1858, %v1856
        %v1860 = vadd.f32 %v1859, %v1857
        %1861 = vmatprep.subr.mxu0 0.0
        %1862 = vmatpush1.msra.mxu0 %v620
        %1863 = vmatprep.subr.mxu0 0.0
        %1864 = vmatpush1.msra.mxu0 %v619
        %1865 = vmatprep.subr.mxu0 0.0
        %1866 = vmatpush1.msra.mxu0 %v618
        %1867 = vmatprep.subr.mxu0 0.0
        %1868 = vmatpush1.msra.mxu0 %v617
        %1869 = vmatprep.subr.mxu0 0.0
        %1870 = vmatpush1.msra.mxu0 %v616
        %1871 = vmatprep.subr.mxu0 0.0
        %1872 = vmatpush1.msra.mxu0 %v615
        %1873 = vmatprep.subr.mxu0 0.0
        %1874 = vmatpush1.msra.mxu0 %v614
        %1875 = vmatprep.subr.mxu0 0.0
        %1876 = vmatpush1.msra.mxu0 %v613
        %1877 = vmatprep.subr.mxu0 0.0
        %1878 = vmatpush1.msra.mxu0 %v612
        %1879 = vmatprep.subr.mxu0 0.0
        %1880 = vmatpush1.msra.mxu0 %v611
        %1881 = vmatprep.subr.mxu0 0.0
        %1882 = vmatpush1.msra.mxu0 %v610
        %1883 = vmatprep.subr.mxu0 0.0
        %1884 = vmatpush1.msra.mxu0 %v609
        %1885 = vmatprep.subr.mxu0 0.0
        %1886 = vmatpush1.msra.mxu0 %v608
        %1887 = vmatprep.subr.mxu0 0.0
        %1888 = vmatpush1.msra.mxu0 %v607
        %1889 = vmatprep.subr.mxu0 0.0
        %1890 = vmatpush1.msra.mxu0 %v606
        %1891 = vmatprep.subr.mxu0 0.0
        %1892 = vmatpush1.msra.mxu0 %v605
        %1893 = vmatprep.subr.mxu0 0.0
        %1894 = vmatpush2.msra.mxu0 0.0
        %1895 = vmatprep.subr.mxu0 0.0
        %1896 = vmatpush2.msra.mxu0 0.0
        %1897 = vmatprep.subr.mxu0 0.0
        %1898 = vmatpush2.msra.mxu0 0.0
        %1899 = vmatprep.subr.mxu0 0.0
        %1900 = vmatpush2.msra.mxu0 0.0
        %1901 = vmatprep.subr.mxu0 0.0
        %1902 = vmatpush2.msra.mxu0 0.0
        %1903 = vmatprep.subr.mxu0 0.0
        %1904 = vmatpush2.msra.mxu0 0.0
        %1905 = vmatprep.subr.mxu0 0.0
        %1906 = vmatpush2.msra.mxu0 0.0
        %1907 = vmatprep.subr.mxu0 0.0
        %1908 = vmatpush2.msra.mxu0 0.0
        %1909 = vmatprep.subr.mxu0 0.0
        %1910 = vmatpush2.msra.mxu0 0.0
        %1911 = vmatprep.subr.mxu0 0.0
        %1912 = vmatpush2.msra.mxu0 0.0
        %1913 = vmatprep.subr.mxu0 0.0
        %1914 = vmatpush2.msra.mxu0 0.0
        %1915 = vmatprep.subr.mxu0 0.0
        %1916 = vmatpush2.msra.mxu0 0.0
        %1917 = vmatprep.subr.mxu0 0.0
        %1918 = vmatpush2.msra.mxu0 0.0
        %1919 = vmatprep.subr.mxu0 0.0
        %1920 = vmatpush2.msra.mxu0 0.0
        %1921 = vmatprep.subr.mxu0 0.0
        %1922 = vmatpush2.msra.mxu0 0.0
        %1923 = vmatprep.subr.mxu0 0.0
        %1924 = vmatpush2.msra.mxu0 0.0
        %1925 = vmatprep.mubr.f32.mxu0 0.0
        %1926 = vmatmul.mubr.f32.gmra.mxu0 %v1860
        %v1927 = vpop.f32.mrf.mxu0
        %v1928 = vadd.f32 %v935, %v1927
        %v1929 = vpop.f32.mrf.mxu0
        %1930 = vdwg.mxu0
        %v1931 = vmul.f32 %v1928, 0.5
        %v1932 = vmul.f32 %v1928, 0.044715
        %v1933 = vmul.f32 %v1932, %v1928
        %v1934 = vmul.f32 %v1933, %v1928
        %v1935 = vadd.f32 %v1928, %v1934
        %v1936 = vmul.f32 %v1935, 0.7978846
        %v1937 = vtanh.pop %v1936
        %v1938 = vadd.f32 %v1937, 1.0
        %v1939 = vmul.f32 %v1931, %v1938
        %1940 = vmatprep.subr.mxu0 0.0
        %1941 = vmatpush1.msra.mxu0 %v637
        %1942 = vmatprep.subr.mxu0 0.0
        %1943 = vmatpush1.msra.mxu0 %v636
        %1944 = vmatprep.subr.mxu0 0.0
        %1945 = vmatpush1.msra.mxu0 %v635
        %1946 = vmatprep.subr.mxu0 0.0
        %1947 = vmatpush1.msra.mxu0 %v634
        %1948 = vmatprep.subr.mxu0 0.0
        %1949 = vmatpush1.msra.mxu0 %v633
        %1950 = vmatprep.subr.mxu0 0.0
        %1951 = vmatpush1.msra.mxu0 %v632
        %1952 = vmatprep.subr.mxu0 0.0
        %1953 = vmatpush1.msra.mxu0 %v631
        %1954 = vmatprep.subr.mxu0 0.0
        %1955 = vmatpush1.msra.mxu0 %v630
        %1956 = vmatprep.subr.mxu0 0.0
        %1957 = vmatpush1.msra.mxu0 %v629
        %1958 = vmatprep.subr.mxu0 0.0
        %1959 = vmatpush1.msra.mxu0 %v628
        %1960 = vmatprep.subr.mxu0 0.0
        %1961 = vmatpush1.msra.mxu0 %v627
        %1962 = vmatprep.subr.mxu0 0.0
        %1963 = vmatpush1.msra.mxu0 %v626
        %1964 = vmatprep.subr.mxu0 0.0
        %1965 = vmatpush1.msra.mxu0 %v625
        %1966 = vmatprep.subr.mxu0 0.0
        %1967 = vmatpush1.msra.mxu0 %v624
        %1968 = vmatprep.subr.mxu0 0.0
        %1969 = vmatpush1.msra.mxu0 %v623
        %1970 = vmatprep.subr.mxu0 0.0
        %1971 = vmatpush1.msra.mxu0 %v622
        %1972 = vmatprep.subr.mxu0 0.0
        %1973 = vmatpush2.msra.mxu0 0.0
        %1974 = vmatprep.subr.mxu0 0.0
        %1975 = vmatpush2.msra.mxu0 0.0
        %1976 = vmatprep.subr.mxu0 0.0
        %1977 = vmatpush2.msra.mxu0 0.0
        %1978 = vmatprep.subr.mxu0 0.0
        %1979 = vmatpush2.msra.mxu0 0.0
        %1980 = vmatprep.subr.mxu0 0.0
        %1981 = vmatpush2.msra.mxu0 0.0
        %1982 = vmatprep.subr.mxu0 0.0
        %1983 = vmatpush2.msra.mxu0 0.0
        %1984 = vmatprep.subr.mxu0 0.0
        %1985 = vmatpush2.msra.mxu0 0.0
        %1986 = vmatprep.subr.mxu0 0.0
        %1987 = vmatpush2.msra.mxu0 0.0
        %1988 = vmatprep.subr.mxu0 0.0
        %1989 = vmatpush2.msra.mxu0 0.0
        %1990 = vmatprep.subr.mxu0 0.0
        %1991 = vmatpush2.msra.mxu0 0.0
        %1992 = vmatprep.subr.mxu0 0.0
        %1993 = vmatpush2.msra.mxu0 0.0
        %1994 = vmatprep.subr.mxu0 0.0
        %1995 = vmatpush2.msra.mxu0 0.0
        %1996 = vmatprep.subr.mxu0 0.0
        %1997 = vmatpush2.msra.mxu0 0.0
        %1998 = vmatprep.subr.mxu0 0.0
        %1999 = vmatpush2.msra.mxu0 0.0
        %2000 = vmatprep.subr.mxu0 0.0
        %2001 = vmatpush2.msra.mxu0 0.0
        %2002 = vmatprep.subr.mxu0 0.0
        %2003 = vmatpush2.msra.mxu0 0.0
        %2004 = vmatprep.mubr.f32.mxu0 0.0
        %2005 = vmatmul.mubr.f32.gmra.mxu0 %v1939
        %v2006 = vpop.f32.mrf.mxu0
        %v2007 = vadd.f32 0.0, %v2006
        %v2008 = vpop.f32.mrf.mxu0
        %2009 = vdwg.mxu0
        %v2010 = vadd.f32 %v1652, %v2007
        %v2011 = vxor.u32 %v2010, 2147483648
        %v2012 = vmul.f32 %v2011, 1.442695
        %v2013 = vpow.pop %v2012
        %v2014 = vadd.f32 %v2013, 1.0
        %v2015 = vrcp.pop %v2014
        %v2016 = vmul.f32 1.0, %v2015
        %v2017 = vadd.f32 %v1939, %v1578
        %2018 = vadd.xlane.f32.xlu0 %v2017
        %v2019 = vpop.xlane.xlu0 %2018
        %v2020 = vmul.f32 %v2019, %v1096
        %v2021 = vsub.f32 %v2017, %v2020
        %v2022 = vmul.f32 %v2021, %v2021
        %2023 = vadd.xlane.f32.xlu0 %v2022
        %v2024 = vpop.xlane.xlu0 %2023
        %v2025 = vmul.f32 %v2024, %v1096
        %v2026 = vadd.f32 %v2025, 1e-05
        %v2027 = vrsqrt.pop %v2026
        %v2028 = vmul.f32 %v2021, %v2027
        %v2029 = vmul.f32 %v2028, %v1110
        %v2030 = vadd.f32 %v2029, %v1117
        %v2031 = vmul.f32 %v2016, %v2030
        %v2032 = vsub.f32 1.0, %v2016
        %v2033 = vmul.f32 %v2032, %v1578
        %v2034 = vadd.f32 %v2031, %v2033
        %s2035 = scalar_lea.vmem %s531, 16 [#allocation15]
        %2036 = vst [vmem:[%s2035] sm:$0xff] %v2034
        %s2037 = scalar_lea.vmem %s459, 24 [#allocation3]
        %v2038 = vld [vmem:[%s2037] sm:$0xff]
        %2039 = vmatprep.subr.mxu0 %v571
        %2040 = vmatpush1.msra.mxu0 %v570
        %2041 = vmatprep.subr.mxu0 %v569
        %2042 = vmatpush1.msra.mxu0 %v568
        %2043 = vmatprep.subr.mxu0 %v567
        %2044 = vmatpush1.msra.mxu0 %v566
        %2045 = vmatprep.subr.mxu0 %v565
        %2046 = vmatpush1.msra.mxu0 %v564
        %2047 = vmatprep.subr.mxu0 %v563
        %2048 = vmatpush1.msra.mxu0 %v562
        %2049 = vmatprep.subr.mxu0 %v561
        %2050 = vmatpush1.msra.mxu0 %v560
        %2051 = vmatprep.subr.mxu0 %v559
        %2052 = vmatpush1.msra.mxu0 %v558
        %2053 = vmatprep.subr.mxu0 %v557
        %2054 = vmatpush1.msra.mxu0 %v556
        %2055 = vmatprep.subr.mxu0 %v555
        %2056 = vmatpush1.msra.mxu0 %v554
        %2057 = vmatprep.subr.mxu0 %v553
        %2058 = vmatpush1.msra.mxu0 %v552
        %2059 = vmatprep.subr.mxu0 %v551
        %2060 = vmatpush1.msra.mxu0 %v550
        %2061 = vmatprep.subr.mxu0 %v549
        %2062 = vmatpush1.msra.mxu0 %v548
        %2063 = vmatprep.subr.mxu0 %v547
        %2064 = vmatpush1.msra.mxu0 %v546
        %2065 = vmatprep.subr.mxu0 %v545
        %2066 = vmatpush1.msra.mxu0 %v544
        %2067 = vmatprep.subr.mxu0 %v543
        %2068 = vmatpush1.msra.mxu0 %v542
        %2069 = vmatprep.subr.mxu0 %v541
        %2070 = vmatpush1.msra.mxu0 %v540
        %2071 = vmatprep.subr.mxu0 0.0
        %2072 = vmatpush2.msra.mxu0 0.0
        %2073 = vmatprep.subr.mxu0 0.0
        %2074 = vmatpush2.msra.mxu0 0.0
        %2075 = vmatprep.subr.mxu0 0.0
        %2076 = vmatpush2.msra.mxu0 0.0
        %2077 = vmatprep.subr.mxu0 0.0
        %2078 = vmatpush2.msra.mxu0 0.0
        %2079 = vmatprep.subr.mxu0 0.0
        %2080 = vmatpush2.msra.mxu0 0.0
        %2081 = vmatprep.subr.mxu0 0.0
        %2082 = vmatpush2.msra.mxu0 0.0
        %2083 = vmatprep.subr.mxu0 0.0
        %2084 = vmatpush2.msra.mxu0 0.0
        %2085 = vmatprep.subr.mxu0 0.0
        %2086 = vmatpush2.msra.mxu0 0.0
        %2087 = vmatprep.subr.mxu0 0.0
        %2088 = vmatpush2.msra.mxu0 0.0
        %2089 = vmatprep.subr.mxu0 0.0
        %2090 = vmatpush2.msra.mxu0 0.0
        %2091 = vmatprep.subr.mxu0 0.0
        %2092 = vmatpush2.msra.mxu0 0.0
        %2093 = vmatprep.subr.mxu0 0.0
        %2094 = vmatpush2.msra.mxu0 0.0
        %2095 = vmatprep.subr.mxu0 0.0
        %2096 = vmatpush2.msra.mxu0 0.0
        %2097 = vmatprep.subr.mxu0 0.0
        %2098 = vmatpush2.msra.mxu0 0.0
        %2099 = vmatprep.subr.mxu0 0.0
        %2100 = vmatpush2.msra.mxu0 0.0
        %2101 = vmatprep.subr.mxu0 0.0
        %2102 = vmatpush2.msra.mxu0 0.0
        %2103 = vmatprep.mubr.f32.mxu0 0.0
        %2104 = vmatmul.mubr.f32.gmra.mxu0 %v2034
        %v2105 = vpop.f32.mrf.mxu0
        %v2106 = vadd.f32 %v646, %v2105
        %v2107 = vpop.f32.mrf.mxu0
        %v2108 = vadd.f32 %v650, %v2107
        %2109 = vdwg.mxu0
        %v2110 = vadd.f32 %v2034, %v2038
        %v2111 = vmul.f32 %v2034, %v2038
        %v2112 = vmul.f32 %v2106, %v2034
        %v2113 = vmul.f32 %v2106, %v2038
        %v2114 = vmul.f32 %v2106, %v2110
        %v2115 = vmul.f32 %v2106, %v2111
        %2116 = vmatprep.subr.mxu0 0.0
        %2117 = vmatpush1.msra.mxu0 %v588
        %2118 = vmatprep.subr.mxu0 0.0
        %2119 = vmatpush1.msra.mxu0 %v587
        %2120 = vmatprep.subr.mxu0 0.0
        %2121 = vmatpush1.msra.mxu0 %v586
        %2122 = vmatprep.subr.mxu0 0.0
        %2123 = vmatpush1.msra.mxu0 %v585
        %2124 = vmatprep.subr.mxu0 0.0
        %2125 = vmatpush1.msra.mxu0 %v584
        %2126 = vmatprep.subr.mxu0 0.0
        %2127 = vmatpush1.msra.mxu0 %v583
        %2128 = vmatprep.subr.mxu0 0.0
        %2129 = vmatpush1.msra.mxu0 %v582
        %2130 = vmatprep.subr.mxu0 0.0
        %2131 = vmatpush1.msra.mxu0 %v581
        %2132 = vmatprep.subr.mxu0 0.0
        %2133 = vmatpush1.msra.mxu0 %v580
        %2134 = vmatprep.subr.mxu0 0.0
        %2135 = vmatpush1.msra.mxu0 %v579
        %2136 = vmatprep.subr.mxu0 0.0
        %2137 = vmatpush1.msra.mxu0 %v578
        %2138 = vmatprep.subr.mxu0 0.0
        %2139 = vmatpush1.msra.mxu0 %v577
        %2140 = vmatprep.subr.mxu0 0.0
        %2141 = vmatpush1.msra.mxu0 %v576
        %2142 = vmatprep.subr.mxu0 0.0
        %2143 = vmatpush1.msra.mxu0 %v575
        %2144 = vmatprep.subr.mxu0 0.0
        %2145 = vmatpush1.msra.mxu0 %v574
        %2146 = vmatprep.subr.mxu0 0.0
        %2147 = vmatpush1.msra.mxu0 %v573
        %2148 = vmatprep.subr.mxu0 0.0
        %2149 = vmatpush2.msra.mxu0 0.0
        %2150 = vmatprep.subr.mxu0 0.0
        %2151 = vmatpush2.msra.mxu0 0.0
        %2152 = vmatprep.subr.mxu0 0.0
        %2153 = vmatpush2.msra.mxu0 0.0
        %2154 = vmatprep.subr.mxu0 0.0
        %2155 = vmatpush2.msra.mxu0 0.0
        %2156 = vmatprep.subr.mxu0 0.0
        %2157 = vmatpush2.msra.mxu0 0.0
        %2158 = vmatprep.subr.mxu0 0.0
        %2159 = vmatpush2.msra.mxu0 0.0
        %2160 = vmatprep.subr.mxu0 0.0
        %2161 = vmatpush2.msra.mxu0 0.0
        %2162 = vmatprep.subr.mxu0 0.0
        %2163 = vmatpush2.msra.mxu0 0.0
        %2164 = vmatprep.subr.mxu0 0.0
        %2165 = vmatpush2.msra.mxu0 0.0
        %2166 = vmatprep.subr.mxu0 0.0
        %2167 = vmatpush2.msra.mxu0 0.0
        %2168 = vmatprep.subr.mxu0 0.0
        %2169 = vmatpush2.msra.mxu0 0.0
        %2170 = vmatprep.subr.mxu0 0.0
        %2171 = vmatpush2.msra.mxu0 0.0
        %2172 = vmatprep.subr.mxu0 0.0
        %2173 = vmatpush2.msra.mxu0 0.0
        %2174 = vmatprep.subr.mxu0 0.0
        %2175 = vmatpush2.msra.mxu0 0.0
        %2176 = vmatprep.subr.mxu0 0.0
        %2177 = vmatpush2.msra.mxu0 0.0
        %2178 = vmatprep.subr.mxu0 0.0
        %2179 = vmatpush2.msra.mxu0 0.0
        %2180 = vmatprep.mubr.f32.mxu0 0.0
        %2181 = vmatmul.mubr.f32.gmra.mxu0 %v2112
        %v2182 = vpop.f32.mrf.mxu0
        %v2183 = vadd.f32 0.0, %v2182
        %v2184 = vpop.f32.mrf.mxu0
        %2185 = vmatprep.mubr.f32.mxu0 0.0
        %2186 = vmatmul.mubr.f32.gmra.mxu0 %v2113
        %v2187 = vpop.f32.mrf.mxu0
        %v2188 = vadd.f32 0.0, %v2187
        %v2189 = vpop.f32.mrf.mxu0
        %2190 = vmatprep.mubr.f32.mxu0 0.0
        %2191 = vmatmul.mubr.f32.gmra.mxu0 %v2114
        %v2192 = vpop.f32.mrf.mxu0
        %v2193 = vadd.f32 0.0, %v2192
        %v2194 = vpop.f32.mrf.mxu0
        %2195 = vmatprep.mubr.f32.mxu0 0.0
        %2196 = vmatmul.mubr.f32.gmra.mxu0 %v2115
        %v2197 = vpop.f32.mrf.mxu0
        %v2198 = vadd.f32 0.0, %v2197
        %v2199 = vpop.f32.mrf.mxu0
        %2200 = vdwg.mxu0
        %v2201 = vmax.f32 %v2183, %v2188
        %v2202 = vmax.f32 %v2193, %v2198
        %v2203 = vmax.f32 %v2201, %v2202
        %v2204 = vsub.f32 %v2183, %v2203
        %v2205 = vsub.f32 %v2188, %v2203
        %v2206 = vsub.f32 %v2193, %v2203
        %v2207 = vsub.f32 %v2198, %v2203
        %v2208 = vmul.f32 %v2204, 1.442695
        %v2209 = vpow.pop %v2208
        %v2210 = vmul.f32 %v2205, 1.442695
        %v2211 = vpow.pop %v2210
        %v2212 = vmul.f32 %v2206, 1.442695
        %v2213 = vpow.pop %v2212
        %v2214 = vmul.f32 %v2207, 1.442695
        %v2215 = vpow.pop %v2214
        %v2216 = vadd.f32 %v2209, %v2211
        %v2217 = vadd.f32 %v2216, %v2213
        %v2218 = vadd.f32 %v2217, %v2215
        %v2219 = vrcp.pop %v2218
        %v2220 = vmul.f32 1.0, %v2219
        %v2221 = vmul.f32 %v2209, %v2220
        %v2222 = vmul.f32 %v2211, %v2220
        %v2223 = vmul.f32 %v2213, %v2220
        %v2224 = vmul.f32 %v2215, %v2220
        %2225 = vmatprep.subr.mxu0 0.0
        %2226 = vmatpush1.msra.mxu0 %v604
        %2227 = vmatprep.subr.mxu0 0.0
        %2228 = vmatpush1.msra.mxu0 %v603
        %2229 = vmatprep.subr.mxu0 0.0
        %2230 = vmatpush1.msra.mxu0 %v602
        %2231 = vmatprep.subr.mxu0 0.0
        %2232 = vmatpush1.msra.mxu0 %v601
        %2233 = vmatprep.subr.mxu0 0.0
        %2234 = vmatpush1.msra.mxu0 %v600
        %2235 = vmatprep.subr.mxu0 0.0
        %2236 = vmatpush1.msra.mxu0 %v599
        %2237 = vmatprep.subr.mxu0 0.0
        %2238 = vmatpush1.msra.mxu0 %v598
        %2239 = vmatprep.subr.mxu0 0.0
        %2240 = vmatpush1.msra.mxu0 %v597
        %2241 = vmatprep.subr.mxu0 0.0
        %2242 = vmatpush1.msra.mxu0 %v596
        %2243 = vmatprep.subr.mxu0 0.0
        %2244 = vmatpush1.msra.mxu0 %v595
        %2245 = vmatprep.subr.mxu0 0.0
        %2246 = vmatpush1.msra.mxu0 %v594
        %2247 = vmatprep.subr.mxu0 0.0
        %2248 = vmatpush1.msra.mxu0 %v593
        %2249 = vmatprep.subr.mxu0 0.0
        %2250 = vmatpush1.msra.mxu0 %v592
        %2251 = vmatprep.subr.mxu0 0.0
        %2252 = vmatpush1.msra.mxu0 %v591
        %2253 = vmatprep.subr.mxu0 0.0
        %2254 = vmatpush1.msra.mxu0 %v590
        %2255 = vmatprep.subr.mxu0 0.0
        %2256 = vmatpush1.msra.mxu0 %v589
        %2257 = vmatprep.subr.mxu0 0.0
        %2258 = vmatpush2.msra.mxu0 0.0
        %2259 = vmatprep.subr.mxu0 0.0
        %2260 = vmatpush2.msra.mxu0 0.0
        %2261 = vmatprep.subr.mxu0 0.0
        %2262 = vmatpush2.msra.mxu0 0.0
        %2263 = vmatprep.subr.mxu0 0.0
        %2264 = vmatpush2.msra.mxu0 0.0
        %2265 = vmatprep.subr.mxu0 0.0
        %2266 = vmatpush2.msra.mxu0 0.0
        %2267 = vmatprep.subr.mxu0 0.0
        %2268 = vmatpush2.msra.mxu0 0.0
        %2269 = vmatprep.subr.mxu0 0.0
        %2270 = vmatpush2.msra.mxu0 0.0
        %2271 = vmatprep.subr.mxu0 0.0
        %2272 = vmatpush2.msra.mxu0 0.0
        %2273 = vmatprep.subr.mxu0 0.0
        %2274 = vmatpush2.msra.mxu0 0.0
        %2275 = vmatprep.subr.mxu0 0.0
        %2276 = vmatpush2.msra.mxu0 0.0
        %2277 = vmatprep.subr.mxu0 0.0
        %2278 = vmatpush2.msra.mxu0 0.0
        %2279 = vmatprep.subr.mxu0 0.0
        %2280 = vmatpush2.msra.mxu0 0.0
        %2281 = vmatprep.subr.mxu0 0.0
        %2282 = vmatpush2.msra.mxu0 0.0
        %2283 = vmatprep.subr.mxu0 0.0
        %2284 = vmatpush2.msra.mxu0 0.0
        %2285 = vmatprep.subr.mxu0 0.0
        %2286 = vmatpush2.msra.mxu0 0.0
        %2287 = vmatprep.subr.mxu0 0.0
        %2288 = vmatpush2.msra.mxu0 0.0
        %2289 = vmatprep.mubr.f32.mxu0 0.0
        %2290 = vmatmul.mubr.f32.gmra.mxu0 %v2221
        %v2291 = vpop.f32.mrf.mxu0
        %v2292 = vadd.f32 0.0, %v2291
        %v2293 = vpop.f32.mrf.mxu0
        %2294 = vmatprep.mubr.f32.mxu0 0.0
        %2295 = vmatmul.mubr.f32.gmra.mxu0 %v2222
        %v2296 = vpop.f32.mrf.mxu0
        %v2297 = vadd.f32 0.0, %v2296
        %v2298 = vpop.f32.mrf.mxu0
        %2299 = vmatprep.mubr.f32.mxu0 0.0
        %2300 = vmatmul.mubr.f32.gmra.mxu0 %v2223
        %v2301 = vpop.f32.mrf.mxu0
        %v2302 = vadd.f32 0.0, %v2301
        %v2303 = vpop.f32.mrf.mxu0
        %2304 = vmatprep.mubr.f32.mxu0 0.0
        %2305 = vmatmul.mubr.f32.gmra.mxu0 %v2224
        %v2306 = vpop.f32.mrf.mxu0
        %v2307 = vadd.f32 0.0, %v2306
        %v2308 = vpop.f32.mrf.mxu0
        %2309 = vdwg.mxu0
        %v2310 = vmul.f32 %v2292, %v2034
        %v2311 = vmul.f32 %v2297, %v2038
        %v2312 = vmul.f32 %v2302, %v2110
        %v2313 = vmul.f32 %v2307, %v2111
        %v2314 = vadd.f32 %v2310, %v2311
        %v2315 = vadd.f32 %v2314, %v2312
        %v2316 = vadd.f32 %v2315, %v2313
        %2317 = vmatprep.subr.mxu0 0.0
        %2318 = vmatpush1.msra.mxu0 %v620
        %2319 = vmatprep.subr.mxu0 0.0
        %2320 = vmatpush1.msra.mxu0 %v619
        %2321 = vmatprep.subr.mxu0 0.0
        %2322 = vmatpush1.msra.mxu0 %v618
        %2323 = vmatprep.subr.mxu0 0.0
        %2324 = vmatpush1.msra.mxu0 %v617
        %2325 = vmatprep.subr.mxu0 0.0
        %2326 = vmatpush1.msra.mxu0 %v616
        %2327 = vmatprep.subr.mxu0 0.0
        %2328 = vmatpush1.msra.mxu0 %v615
        %2329 = vmatprep.subr.mxu0 0.0
        %2330 = vmatpush1.msra.mxu0 %v614
        %2331 = vmatprep.subr.mxu0 0.0
        %2332 = vmatpush1.msra.mxu0 %v613
        %2333 = vmatprep.subr.mxu0 0.0
        %2334 = vmatpush1.msra.mxu0 %v612
        %2335 = vmatprep.subr.mxu0 0.0
        %2336 = vmatpush1.msra.mxu0 %v611
        %2337 = vmatprep.subr.mxu0 0.0
        %2338 = vmatpush1.msra.mxu0 %v610
        %2339 = vmatprep.subr.mxu0 0.0
        %2340 = vmatpush1.msra.mxu0 %v609
        %2341 = vmatprep.subr.mxu0 0.0
        %2342 = vmatpush1.msra.mxu0 %v608
        %2343 = vmatprep.subr.mxu0 0.0
        %2344 = vmatpush1.msra.mxu0 %v607
        %2345 = vmatprep.subr.mxu0 0.0
        %2346 = vmatpush1.msra.mxu0 %v606
        %2347 = vmatprep.subr.mxu0 0.0
        %2348 = vmatpush1.msra.mxu0 %v605
        %2349 = vmatprep.subr.mxu0 0.0
        %2350 = vmatpush2.msra.mxu0 0.0
        %2351 = vmatprep.subr.mxu0 0.0
        %2352 = vmatpush2.msra.mxu0 0.0
        %2353 = vmatprep.subr.mxu0 0.0
        %2354 = vmatpush2.msra.mxu0 0.0
        %2355 = vmatprep.subr.mxu0 0.0
        %2356 = vmatpush2.msra.mxu0 0.0
        %2357 = vmatprep.subr.mxu0 0.0
        %2358 = vmatpush2.msra.mxu0 0.0
        %2359 = vmatprep.subr.mxu0 0.0
        %2360 = vmatpush2.msra.mxu0 0.0
        %2361 = vmatprep.subr.mxu0 0.0
        %2362 = vmatpush2.msra.mxu0 0.0
        %2363 = vmatprep.subr.mxu0 0.0
        %2364 = vmatpush2.msra.mxu0 0.0
        %2365 = vmatprep.subr.mxu0 0.0
        %2366 = vmatpush2.msra.mxu0 0.0
        %2367 = vmatprep.subr.mxu0 0.0
        %2368 = vmatpush2.msra.mxu0 0.0
        %2369 = vmatprep.subr.mxu0 0.0
        %2370 = vmatpush2.msra.mxu0 0.0
        %2371 = vmatprep.subr.mxu0 0.0
        %2372 = vmatpush2.msra.mxu0 0.0
        %2373 = vmatprep.subr.mxu0 0.0
        %2374 = vmatpush2.msra.mxu0 0.0
        %2375 = vmatprep.subr.mxu0 0.0
        %2376 = vmatpush2.msra.mxu0 0.0
        %2377 = vmatprep.subr.mxu0 0.0
        %2378 = vmatpush2.msra.mxu0 0.0
        %2379 = vmatprep.subr.mxu0 0.0
        %2380 = vmatpush2.msra.mxu0 0.0
        %2381 = vmatprep.mubr.f32.mxu0 0.0
        %2382 = vmatmul.mubr.f32.gmra.mxu0 %v2316
        %v2383 = vpop.f32.mrf.mxu0
        %v2384 = vadd.f32 %v935, %v2383
        %v2385 = vpop.f32.mrf.mxu0
        %2386 = vdwg.mxu0
        %v2387 = vmul.f32 %v2384, 0.5
        %v2388 = vmul.f32 %v2384, 0.044715
        %v2389 = vmul.f32 %v2388, %v2384
        %v2390 = vmul.f32 %v2389, %v2384
        %v2391 = vadd.f32 %v2384, %v2390
        %v2392 = vmul.f32 %v2391, 0.7978846
        %v2393 = vtanh.pop %v2392
        %v2394 = vadd.f32 %v2393, 1.0
        %v2395 = vmul.f32 %v2387, %v2394
        %2396 = vmatprep.subr.mxu0 0.0
        %2397 = vmatpush1.msra.mxu0 %v637
        %2398 = vmatprep.subr.mxu0 0.0
        %2399 = vmatpush1.msra.mxu0 %v636
        %2400 = vmatprep.subr.mxu0 0.0
        %2401 = vmatpush1.msra.mxu0 %v635
        %2402 = vmatprep.subr.mxu0 0.0
        %2403 = vmatpush1.msra.mxu0 %v634
        %2404 = vmatprep.subr.mxu0 0.0
        %2405 = vmatpush1.msra.mxu0 %v633
        %2406 = vmatprep.subr.mxu0 0.0
        %2407 = vmatpush1.msra.mxu0 %v632
        %2408 = vmatprep.subr.mxu0 0.0
        %2409 = vmatpush1.msra.mxu0 %v631
        %2410 = vmatprep.subr.mxu0 0.0
        %2411 = vmatpush1.msra.mxu0 %v630
        %2412 = vmatprep.subr.mxu0 0.0
        %2413 = vmatpush1.msra.mxu0 %v629
        %2414 = vmatprep.subr.mxu0 0.0
        %2415 = vmatpush1.msra.mxu0 %v628
        %2416 = vmatprep.subr.mxu0 0.0
        %2417 = vmatpush1.msra.mxu0 %v627
        %2418 = vmatprep.subr.mxu0 0.0
        %2419 = vmatpush1.msra.mxu0 %v626
        %2420 = vmatprep.subr.mxu0 0.0
        %2421 = vmatpush1.msra.mxu0 %v625
        %2422 = vmatprep.subr.mxu0 0.0
        %2423 = vmatpush1.msra.mxu0 %v624
        %2424 = vmatprep.subr.mxu0 0.0
        %2425 = vmatpush1.msra.mxu0 %v623
        %2426 = vmatprep.subr.mxu0 0.0
        %2427 = vmatpush1.msra.mxu0 %v622
        %2428 = vmatprep.subr.mxu0 0.0
        %2429 = vmatpush2.msra.mxu0 0.0
        %2430 = vmatprep.subr.mxu0 0.0
        %2431 = vmatpush2.msra.mxu0 0.0
        %2432 = vmatprep.subr.mxu0 0.0
        %2433 = vmatpush2.msra.mxu0 0.0
        %2434 = vmatprep.subr.mxu0 0.0
        %2435 = vmatpush2.msra.mxu0 0.0
        %2436 = vmatprep.subr.mxu0 0.0
        %2437 = vmatpush2.msra.mxu0 0.0
        %2438 = vmatprep.subr.mxu0 0.0
        %2439 = vmatpush2.msra.mxu0 0.0
        %2440 = vmatprep.subr.mxu0 0.0
        %2441 = vmatpush2.msra.mxu0 0.0
        %2442 = vmatprep.subr.mxu0 0.0
        %2443 = vmatpush2.msra.mxu0 0.0
        %2444 = vmatprep.subr.mxu0 0.0
        %2445 = vmatpush2.msra.mxu0 0.0
        %2446 = vmatprep.subr.mxu0 0.0
        %2447 = vmatpush2.msra.mxu0 0.0
        %2448 = vmatprep.subr.mxu0 0.0
        %2449 = vmatpush2.msra.mxu0 0.0
        %2450 = vmatprep.subr.mxu0 0.0
        %2451 = vmatpush2.msra.mxu0 0.0
        %2452 = vmatprep.subr.mxu0 0.0
        %2453 = vmatpush2.msra.mxu0 0.0
        %2454 = vmatprep.subr.mxu0 0.0
        %2455 = vmatpush2.msra.mxu0 0.0
        %2456 = vmatprep.subr.mxu0 0.0
        %2457 = vmatpush2.msra.mxu0 0.0
        %2458 = vmatprep.subr.mxu0 0.0
        %2459 = vmatpush2.msra.mxu0 0.0
        %2460 = vmatprep.mubr.f32.mxu0 0.0
        %2461 = vmatmul.mubr.f32.gmra.mxu0 %v2395
        %v2462 = vpop.f32.mrf.mxu0
        %v2463 = vadd.f32 0.0, %v2462
        %v2464 = vpop.f32.mrf.mxu0
        %2465 = vdwg.mxu0
        %v2466 = vadd.f32 %v2108, %v2463
        %v2467 = vxor.u32 %v2466, 2147483648
        %v2468 = vmul.f32 %v2467, 1.442695
        %v2469 = vpow.pop %v2468
        %v2470 = vadd.f32 %v2469, 1.0
        %v2471 = vrcp.pop %v2470
        %v2472 = vmul.f32 1.0, %v2471
        %v2473 = vadd.f32 %v2395, %v2034
        %2474 = vadd.xlane.f32.xlu0 %v2473
        %v2475 = vpop.xlane.xlu0 %2474
        %v2476 = vmul.f32 %v2475, %v1096
        %v2477 = vsub.f32 %v2473, %v2476
        %v2478 = vmul.f32 %v2477, %v2477
        %2479 = vadd.xlane.f32.xlu0 %v2478
        %v2480 = vpop.xlane.xlu0 %2479
        %v2481 = vmul.f32 %v2480, %v1096
        %v2482 = vadd.f32 %v2481, 1e-05
        %v2483 = vrsqrt.pop %v2482
        %v2484 = vmul.f32 %v2477, %v2483
        %v2485 = vmul.f32 %v2484, %v1110
        %v2486 = vadd.f32 %v2485, %v1117
        %v2487 = vmul.f32 %v2472, %v2486
        %v2488 = vsub.f32 1.0, %v2472
        %v2489 = vmul.f32 %v2488, %v2034
        %v2490 = vadd.f32 %v2487, %v2489
        %s2491 = scalar_lea.vmem %s531, 24 [#allocation15]
        %2492 = vst [vmem:[%s2491] sm:$0xff] %v2490
        %2493 = vst [vmem:[#allocation2] sm:$0xff] %v2490
        %s2494 = sand.u32 %s298, 1
        %s2495 = scalar_lea.sflag [#allocation5], %s2494
        %s2496 = sand.u32 %s298, 1
        %s2497 = smul.addr %s2496, 32
        %s2498 = scalar_lea.vmem [#allocation15], %s2497
        // Predicated region
        $region97: #{tpu_custom_call.1} parent=63 // pred_check
          %p2499 = pneg %p308
        $region98: #{tpu_custom_call.1} parent=63 // pred_check_branch
          %2501 = sbr.rel (%p2499) target = $region100
        $region99: #{tpu_custom_call.1} parent=63 // pred_region
          %s2502 = smul.u32 4, %s38
          %s2504 = ssub.s32 512, 512
          %2505 = vsyncadd %s2495, %s2504
          %s2506 = smul.addr %s2502, 2
          %s2507 = sadd.s32 %s37, %s2506
          %s2508 = smul.addr %s2507, 128
          %s2509 = scalar_lea.hbm %s11, %s2508
          %s2510 = sshll.u32 %s2498, 4
          %s2511 = int_to_ptr.vmem [resolvable:$true] %s2510
          %2516 = dma.vmem_to_hbm [thread:$0]  %s2511, 512, %s2509, %s2495, 128, 256, 8
        $region100: #{tpu_custom_call.1} parent=63 // pred_fallthru
          _
      $region64: #{tpu_custom_call.1} parent=5 // pred_fallthru
        _
      %p2517 = scmp.le.s32.totalorder 2, %s28
      // Predicated region
      $region101: #{tpu_custom_call.1} parent=5 // pred_check
        %p2518 = pneg %p2517
      $region102: #{tpu_custom_call.1} parent=5 // pred_check_branch
        %2520 = sbr.rel (%p2518) target = $region104
      $region103: #{tpu_custom_call.1} parent=5 // pred_region
        %s2521 = ssub.s32 %s28, 2
        // Predicated region
        $region105: #{tpu_custom_call.1} parent=103 // pred_check
          %p2522 = pneg %p314
        $region106: #{tpu_custom_call.1} parent=103 // pred_check_branch
          %2524 = sbr.rel (%p2522) target = $region108
        $region107: #{tpu_custom_call.1} parent=103 // pred_region
          %s2525 = sand.u32 %s299, 1
          %s2526 = scalar_lea.sflag [#allocation5], %s2525
          %s2527 = sand.u32 %s299, 1
          %s2528 = smul.addr %s2527, 32
          %s2529 = scalar_lea.vmem [#allocation15], %s2528
          %2530 = dma.done %s2526, 512
        $region108: #{tpu_custom_call.1} parent=103 // pred_fallthru
          _
      $region104: #{tpu_custom_call.1} parent=5 // pred_fallthru
        _
    $region6: #{tpu_custom_call.1} parent=1 // loop_footer
      %s32 = sadd.s32 1, %s28
    $region7: #{tpu_custom_call.1} parent=1 // loop_footer_branch
      %27 = sbr.rel target = $region3
    $region8: #{tpu_custom_call.1} parent=1 // loop_exit
      _
    %2531 = vsyncpa [#allocation4], 1
    %s2532 = scalar_lea.sflag [#allocation4], 1
    %2533 = vsyncpa %s2532, 1
    %2534 = vsyncpa [#allocation7], 1
    %s2535 = scalar_lea.sflag [#allocation7], 1
    %2536 = vsyncpa %s2535, 1
    %2537 = vsyncpa [#allocation10], 1
    %2538 = vsyncpa [#allocation13], 1
    %2539 = vsyncpa [#allocation5], 1
    %s2540 = scalar_lea.sflag [#allocation5], 1
    %2541 = vsyncpa %s2540, 1

</llo_original>
